<compile_context>
chip_gen: v6e
topology: v6e:2x2x1
jax: 0.10.0
libtpu: 0.0.40
codegen_flags: <defaults>
</compile_context>

<pallas_src>
import jax
import jax.numpy as jnp
from jax.experimental import pallas as pl
from jax.experimental.pallas import tpu as pltpu


# ------------------------------ fused kernel ---------------------------------
def _make_fused_kernel(T, B_pad, H, num_layers):
    """Kernel refs: x2, (wih_t, whh_t, b) * num_layers, w_head_t, b_head,
                    out, proj_a, proj_b."""

    def kernel(*refs):
        x_ref = refs[0]
        wrefs = refs[1:1 + 3 * num_layers]
        wout_ref = refs[1 + 3 * num_layers]
        bout_ref = refs[2 + 3 * num_layers]
        o_ref = refs[3 + 3 * num_layers]
        proj_a = refs[4 + 3 * num_layers]      # (T*B_pad, 4H) input projection (ping)
        proj_b = refs[5 + 3 * num_layers]      # (T*B_pad, 4H) input projection (pong)

        H4 = 4 * H
        # Gate columns are ordered (i, f, o, g).  The i/f/o weight columns carry a
        # folded 0.5 pre-scale, so a single tanh pass + one hoisted per-lane affine
        # gives sigmoid on lanes [0,3H) and tanh on [3H,4H):
        #   sigmoid(z) = 0.5*tanh(z/2) + 0.5
        lane = jax.lax.broadcasted_iota(jnp.int32, (B_pad, H4), 1)
        is_sig = lane < 3 * H
        act_scale = jnp.where(is_sig, 0.5, 1.0).astype(jnp.float32)   # hoisted
        act_off = jnp.where(is_sig, 0.5, 0.0).astype(jnp.float32)     # hoisted

        proj_bufs = (proj_a, proj_b)

        # Layer 0: hoisted, time-parallel input projection for all T steps at once:
        # (T*B, D) @ (D, 4H) + b.  Only h @ W_hh remains on the serial path.
        wih0_ref, _, b0_ref = wrefs[0:3]
        proj_a[...] = (
            jnp.dot(x_ref[...].astype(jnp.bfloat16), wih0_ref[...],
                    preferred_element_type=jnp.float32)
            + b0_ref[...])

        h_last = None
        for layer in range(num_layers):
            whh_ref = wrefs[3 * layer + 1]
            cur = proj_bufs[layer % 2]          # this layer's input projection
            nxt = proj_bufs[(layer + 1) % 2]    # next layer's (written wavefront-style)
            whh = whh_ref[...]                  # bf16 (H, 4H), loaded once per layer
            is_last_layer = layer == num_layers - 1
            if not is_last_layer:
                wih_next = wrefs[3 * (layer + 1)][...]                       # bf16 (H, 4H)
                b_next = jnp.broadcast_to(wrefs[3 * (layer + 1) + 2][...],
                                          (B_pad, H4))                       # hoisted bcast

            h = jnp.zeros((B_pad, H), jnp.float32)
            h_bf = h.astype(jnp.bfloat16)
            c = jnp.zeros((B_pad, H), jnp.float32)

            # T is small & static -> fully unrolled recurrence, static slices only.
            for t in range(T):
                row = t * B_pad
                gates = cur[row:row + B_pad, :] + jnp.dot(
                    h_bf, whh, preferred_element_type=jnp.float32)           # (B_pad, 4H)
                act = jnp.tanh(gates) * act_scale + act_off                  # 1 EUP pass
                i_g = act[:, 0 * H:1 * H]
                f_g = act[:, 1 * H:2 * H]
                o_g = act[:, 2 * H:3 * H]
                g_g = act[:, 3 * H:4 * H]
                c = f_g * c + i_g * g_g
                h = o_g * jnp.tanh(c)
                h_bf = h.astype(jnp.bfloat16)
                if not is_last_layer:
                    # Wavefront: next layer's input projection is independent of the
                    # h -> W_hh chain, so it fills MXU dependency-stall cycles here.
                    nxt[row:row + B_pad, :] = (
                        jnp.dot(h_bf, wih_next, preferred_element_type=jnp.float32)
                        + b_next)
            h_last = h

        # Fused classification head: Linear + log_softmax(dim=1) on lstm_out[-1].
        # Kept in f32 (single one-off matmul; negligible cost, better accuracy).
        logits = (jnp.dot(h_last, wout_ref[...], preferred_element_type=jnp.float32)
                  + bout_ref[...])
        m = jnp.max(logits, axis=-1, keepdims=True)
        shifted = logits - m
        lse = jnp.log(jnp.sum(jnp.exp(shifted), axis=-1, keepdims=True))
        o_ref[...] = shifted - lse

    return kernel


# ------------------------------- full forward --------------------------------
def lstm_forward(x, params):
    """Equivalent of LSTM.forward: num_layers-layer LSTM, last step, Linear, log_softmax."""
    T, B, D = x.shape
    layers = params["layers"]
    num_layers = len(layers)
    H = layers[0][1].shape[0]               # whh_t is (H, 4H)
    O = params["head_w_t"].shape[1]

    # Pad batch to a full sublane group (multiple of 8) -- layout plumbing only.
    B_pad = max(8, ((B + 7) // 8) * 8)
    if B_pad != B:
        x = jnp.pad(x, ((0, 0), (0, B_pad - B), (0, 0)))
    x2 = x.reshape(T * B_pad, D)            # row t*B_pad + b  <->  (t, b)

    flat_w = []
    for (wih_t, whh_t, b) in layers:
        flat_w += [wih_t, whh_t, b]
    flat_w += [params["head_w_t"], params["head_b"]]

    out = pl.pallas_call(
        _make_fused_kernel(T, B_pad, H, num_layers),
        out_shape=jax.ShapeDtypeStruct((B_pad, O), jnp.float32),
        scratch_shapes=[
            pltpu.VMEM((T * B_pad, 4 * H), jnp.float32),   # input projection (ping)
            pltpu.VMEM((T * B_pad, 4 * H), jnp.float32),   # input projection (pong)
        ],
    )(x2, *flat_w)
    return out[:B]


# ------------------------------ parameter setup -------------------------------
def init_torch_params(key, input_size, hidden_size, output_size, num_layers):
    """PyTorch-layout params, U(-1/sqrt(H), 1/sqrt(H)) like torch.nn.LSTM / Linear."""
    bound = 1.0 / jnp.sqrt(jnp.float32(hidden_size))
    layers = []
    for layer in range(num_layers):
        in_dim = input_size if layer == 0 else hidden_size
        key, k1, k2, k3, k4 = jax.random.split(key, 5)
        w_ih = jax.random.uniform(k1, (4 * hidden_size, in_dim), jnp.float32, -bound, bound)
        w_hh = jax.random.uniform(k2, (4 * hidden_size, hidden_size), jnp.float32, -bound, bound)
        b_ih = jax.random.uniform(k3, (4 * hidden_size,), jnp.float32, -bound, bound)
        b_hh = jax.random.uniform(k4, (4 * hidden_size,), jnp.float32, -bound, bound)
        layers.append((w_ih, w_hh, b_ih, b_hh))
    key, k5, k6 = jax.random.split(key, 3)
    lin_w = jax.random.uniform(k5, (output_size, hidden_size), jnp.float32, -bound, bound)
    lin_b = jax.random.uniform(k6, (output_size,), jnp.float32, -bound, bound)
    return {"layers": layers, "lin_w": lin_w, "lin_b": lin_b}


def _reorder_gates(w, H):
    # PyTorch gate order along dim 0 is (i, f, g, o); kernel wants (i, f, o, g)
    # so sigmoid/tanh lanes are each one contiguous range.
    i, f, g, o = w[0:H], w[H:2 * H], w[2 * H:3 * H], w[3 * H:4 * H]
    return jnp.concatenate([i, f, o, g], axis=0)


def prep_params(tp, hidden_size):
    """Transpose / reorder / pre-sum biases, fold the sigmoid 0.5 pre-scale into the
    i/f/o gate columns, and cast the recurrence weights to bf16 for the MXU."""
    H = hidden_size
    # sigmoid(z) = 0.5*tanh(z/2) + 0.5 -> scale i/f/o columns (first 3H) by 0.5.
    col_scale = jnp.concatenate(
        [jnp.full((3 * H,), 0.5, jnp.float32), jnp.ones((H,), jnp.float32)])
    layers = []
    for (w_ih, w_hh, b_ih, b_hh) in tp["layers"]:
        wih_t = (_reorder_gates(w_ih, H).T * col_scale).astype(jnp.bfloat16)   # (Din, 4H)
        whh_t = (_reorder_gates(w_hh, H).T * col_scale).astype(jnp.bfloat16)   # (H, 4H)
        b = (_reorder_gates(b_ih + b_hh, H) * col_scale).reshape(1, 4 * H)     # (1, 4H) f32
        layers.append((wih_t, whh_t, b))
    return {"layers": layers,
            "head_w_t": tp["lin_w"].T,                             # (H, O) f32
            "head_b": tp["lin_b"].reshape(1, -1)}                  # (1, O) f32


# ------------------------------- pure-JAX reference ---------------------------
def lstm_forward_ref(x, tp):
    """Reference using the original PyTorch-layout f32 weights and (i,f,g,o) order."""
    y = x
    for (w_ih, w_hh, b_ih, b_hh) in tp["layers"]:
        H = w_hh.shape[1]
        wih_t, whh_t, b = w_ih.T, w_hh.T, (b_ih + b_hh)

        def step(carry, xt):
            h, c = carry
            gates = xt @ wih_t + h @ whh_t + b
            i_g = jax.nn.sigmoid(gates[:, 0 * H:1 * H])
            f_g = jax.nn.sigmoid(gates[:, 1 * H:2 * H])
            g_g = jnp.tanh(gates[:, 2 * H:3 * H])
            o_g = jax.nn.sigmoid(gates[:, 3 * H:4 * H])
            c_new = f_g * c + i_g * g_g
            h_new = o_g * jnp.tanh(c_new)
            return (h_new, c_new), h_new

        B = y.shape[1]
        init = (jnp.zeros((B, H), jnp.float32), jnp.zeros((B, H), jnp.float32))
        _, y = jax.lax.scan(step, init, y)
    logits = y[-1] @ tp["lin_w"].T + tp["lin_b"]
    return jax.nn.log_softmax(logits, axis=1)


if __name__ == "__main__":
    seq_len, batch, input_size, hidden_size, output_size, num_layers = 8, 4, 16, 32, 2, 3

    key = jax.random.PRNGKey(0)
    key, xk = jax.random.split(key)
    x = jax.random.normal(xk, (seq_len, batch, input_size), jnp.float32)

    torch_params = init_torch_params(key, input_size, hidden_size, output_size, num_layers)
    params = prep_params(torch_params, hidden_size)

    fwd = jax.jit(lstm_forward)
    out = jax.block_until_ready(fwd(x, params))
    ref = jax.block_until_ready(lstm_forward_ref(x, torch_params))

    assert out.shape == (batch, output_size), out.shape
    # Tolerance loosened vs the f32 version: bf16 recurrence weights/activations and
    # the tanh-based sigmoid change low-order bits (per perf-review correctness note).
    assert jnp.allclose(out, ref, atol=5e-2, rtol=5e-2), (out, ref)
    print("KERNEL_OK")
</pallas_src>

<mosaic_0001>
module attributes {stable_mosaic.version = 11 : i64} {
  func.func @kernel(%arg0: memref<64x16xf32, #tpu.memory_space<vmem>>, %arg1: memref<16x128xbf16, #tpu.memory_space<vmem>>, %arg2: memref<32x128xbf16, #tpu.memory_space<vmem>>, %arg3: memref<1x128xf32, #tpu.memory_space<vmem>>, %arg4: memref<32x128xbf16, #tpu.memory_space<vmem>>, %arg5: memref<32x128xbf16, #tpu.memory_space<vmem>>, %arg6: memref<1x128xf32, #tpu.memory_space<vmem>>, %arg7: memref<32x128xbf16, #tpu.memory_space<vmem>>, %arg8: memref<32x128xbf16, #tpu.memory_space<vmem>>, %arg9: memref<1x128xf32, #tpu.memory_space<vmem>>, %arg10: memref<32x2xf32, #tpu.memory_space<vmem>>, %arg11: memref<1x2xf32, #tpu.memory_space<vmem>>, %arg12: memref<8x2xf32, #tpu.memory_space<vmem>>, %arg13: memref<64x128xf32, #tpu.memory_space<vmem>>, %arg14: memref<64x128xf32, #tpu.memory_space<vmem>>) attributes {dimension_semantics = [], scalar_prefetch = 0 : i64, scratch_operands = 2 : i64, tpu.core_type = #tpu.core_type<tc>} {
    %0 = tpu.iota {dimensions = array<i32: 1>} : vector<8x128xi32>
    %c96_i32 = arith.constant 96 : i32
    %1 = vector.broadcast %c96_i32 : i32 to vector<8x128xi32>
    %2 = arith.cmpi slt, %0, %1 : vector<8x128xi32>
    %cst = arith.constant 5.000000e-01 : f32
    %cst_0 = arith.constant 1.000000e+00 : f32
    %3 = vector.broadcast %cst : f32 to vector<8x128xf32>
    %4 = vector.broadcast %cst_0 : f32 to vector<8x128xf32>
    %5 = arith.select %2, %3, %4 : vector<8x128xi1>, vector<8x128xf32>
    %cst_1 = arith.constant 5.000000e-01 : f32
    %cst_2 = arith.constant 0.000000e+00 : f32
    %6 = vector.broadcast %cst_1 : f32 to vector<8x128xf32>
    %7 = vector.broadcast %cst_2 : f32 to vector<8x128xf32>
    %8 = arith.select %2, %6, %7 : vector<8x128xi1>, vector<8x128xf32>
    %c0 = arith.constant 0 : index
    %c0_3 = arith.constant 0 : index
    %9 = vector.load %arg0[%c0, %c0_3] : memref<64x16xf32, #tpu.memory_space<vmem>>, vector<64x16xf32>
    %10 = arith.truncf %9 : vector<64x16xf32> to vector<64x16xbf16>
    %c0_4 = arith.constant 0 : index
    %c0_5 = arith.constant 0 : index
    %11 = vector.load %arg1[%c0_4, %c0_5] : memref<16x128xbf16, #tpu.memory_space<vmem>>, vector<16x128xbf16>
    %cst_6 = arith.constant dense<0.000000e+00> : vector<64x128xf32>
    %12 = tpu.matmul %10, %11, %cst_6 {dimension_numbers = #tpu.dot_dimension_numbers<[1], [0], [0], [1], [0, 0, 1, 1], [], []>} : vector<64x16xbf16>, vector<16x128xbf16>, vector<64x128xf32> -> vector<64x128xf32>
    %c0_7 = arith.constant 0 : index
    %c0_8 = arith.constant 0 : index
    %13 = vector.load %arg3[%c0_7, %c0_8] : memref<1x128xf32, #tpu.memory_space<vmem>>, vector<1x128xf32>
    %14 = vector.broadcast %13 : vector<1x128xf32> to vector<64x128xf32>
    %15 = arith.addf %12, %14 : vector<64x128xf32>
    %c0_9 = arith.constant 0 : index
    %c0_10 = arith.constant 0 : index
    %16 = vector.load %arg13[%c0_9, %c0_10] : memref<64x128xf32, #tpu.memory_space<vmem>>, vector<64x128xf32>
    tpu.vector_store %arg13[%c0_9, %c0_10], %15 {strides = array<i32>} : memref<64x128xf32, #tpu.memory_space<vmem>>, vector<64x128xf32>,
    %c0_11 = arith.constant 0 : index
    %c0_12 = arith.constant 0 : index
    %17 = vector.load %arg2[%c0_11, %c0_12] : memref<32x128xbf16, #tpu.memory_space<vmem>>, vector<32x128xbf16>
    %c0_13 = arith.constant 0 : index
    %c0_14 = arith.constant 0 : index
    %18 = vector.load %arg4[%c0_13, %c0_14] : memref<32x128xbf16, #tpu.memory_space<vmem>>, vector<32x128xbf16>
    %c0_15 = arith.constant 0 : index
    %c0_16 = arith.constant 0 : index
    %19 = vector.load %arg6[%c0_15, %c0_16] : memref<1x128xf32, #tpu.memory_space<vmem>>, vector<1x128xf32>
    %20 = vector.shape_cast %19 : vector<1x128xf32> to vector<1x128xf32>
    %21 = vector.broadcast %20 : vector<1x128xf32> to vector<8x128xf32>
    %cst_17 = arith.constant 0.000000e+00 : f32
    %22 = vector.broadcast %cst_17 : f32 to vector<8x32xf32>
    %23 = arith.truncf %22 : vector<8x32xf32> to vector<8x32xbf16>
    %cst_18 = arith.constant 0.000000e+00 : f32
    %24 = vector.broadcast %cst_18 : f32 to vector<8x32xf32>
    %c0_19 = arith.constant 0 : index
    %c0_20 = arith.constant 0 : index
    %25 = vector.load %arg13[%c0_19, %c0_20] : memref<64x128xf32, #tpu.memory_space<vmem>>, vector<8x128xf32>
    %cst_21 = arith.constant dense<0.000000e+00> : vector<8x128xf32>
    %26 = tpu.matmul %23, %17, %cst_21 {dimension_numbers = #tpu.dot_dimension_numbers<[1], [0], [0], [1], [0, 0, 1, 1], [], []>} : vector<8x32xbf16>, vector<32x128xbf16>, vector<8x128xf32> -> vector<8x128xf32>
    %27 = arith.addf %25, %26 : vector<8x128xf32>
    %28 = math.tanh %27 : vector<8x128xf32>
    %29 = arith.mulf %28, %5 : vector<8x128xf32>
    %30 = arith.addf %29, %8 : vector<8x128xf32>
    %31 = vector.extract_strided_slice %30 {offsets = [0, 0], sizes = [8, 32], strides = [1, 1]} : vector<8x128xf32> to vector<8x32xf32>
    %32 = vector.extract_strided_slice %30 {offsets = [0, 32], sizes = [8, 32], strides = [1, 1]} : vector<8x128xf32> to vector<8x32xf32>
    %33 = vector.extract_strided_slice %30 {offsets = [0, 64], sizes = [8, 32], strides = [1, 1]} : vector<8x128xf32> to vector<8x32xf32>
    %34 = vector.extract_strided_slice %30 {offsets = [0, 96], sizes = [8, 32], strides = [1, 1]} : vector<8x128xf32> to vector<8x32xf32>
    %35 = arith.mulf %32, %24 : vector<8x32xf32>
    %36 = arith.mulf %31, %34 : vector<8x32xf32>
    %37 = arith.addf %35, %36 : vector<8x32xf32>
    %38 = math.tanh %37 : vector<8x32xf32>
    %39 = arith.mulf %33, %38 : vector<8x32xf32>
    %40 = arith.truncf %39 : vector<8x32xf32> to vector<8x32xbf16>
    %cst_22 = arith.constant dense<0.000000e+00> : vector<8x128xf32>
    %41 = tpu.matmul %40, %18, %cst_22 {dimension_numbers = #tpu.dot_dimension_numbers<[1], [0], [0], [1], [0, 0, 1, 1], [], []>} : vector<8x32xbf16>, vector<32x128xbf16>, vector<8x128xf32> -> vector<8x128xf32>
    %42 = arith.addf %41, %21 : vector<8x128xf32>
    %c0_23 = arith.constant 0 : index
    %c0_24 = arith.constant 0 : index
    %43 = vector.load %arg14[%c0_23, %c0_24] : memref<64x128xf32, #tpu.memory_space<vmem>>, vector<8x128xf32>
    tpu.vector_store %arg14[%c0_23, %c0_24], %42 {strides = array<i32>} : memref<64x128xf32, #tpu.memory_space<vmem>>, vector<8x128xf32>,
    %c8 = arith.constant 8 : index
    %c0_25 = arith.constant 0 : index
    %44 = vector.load %arg13[%c8, %c0_25] : memref<64x128xf32, #tpu.memory_space<vmem>>, vector<8x128xf32>
    %cst_26 = arith.constant dense<0.000000e+00> : vector<8x128xf32>
    %45 = tpu.matmul %40, %17, %cst_26 {dimension_numbers = #tpu.dot_dimension_numbers<[1], [0], [0], [1], [0, 0, 1, 1], [], []>} : vector<8x32xbf16>, vector<32x128xbf16>, vector<8x128xf32> -> vector<8x128xf32>
    %46 = arith.addf %44, %45 : vector<8x128xf32>
    %47 = math.tanh %46 : vector<8x128xf32>
    %48 = arith.mulf %47, %5 : vector<8x128xf32>
    %49 = arith.addf %48, %8 : vector<8x128xf32>
    %50 = vector.extract_strided_slice %49 {offsets = [0, 0], sizes = [8, 32], strides = [1, 1]} : vector<8x128xf32> to vector<8x32xf32>
    %51 = vector.extract_strided_slice %49 {offsets = [0, 32], sizes = [8, 32], strides = [1, 1]} : vector<8x128xf32> to vector<8x32xf32>
    %52 = vector.extract_strided_slice %49 {offsets = [0, 64], sizes = [8, 32], strides = [1, 1]} : vector<8x128xf32> to vector<8x32xf32>
    %53 = vector.extract_strided_slice %49 {offsets = [0, 96], sizes = [8, 32], strides = [1, 1]} : vector<8x128xf32> to vector<8x32xf32>
    %54 = arith.mulf %51, %37 : vector<8x32xf32>
    %55 = arith.mulf %50, %53 : vector<8x32xf32>
    %56 = arith.addf %54, %55 : vector<8x32xf32>
    %57 = math.tanh %56 : vector<8x32xf32>
    %58 = arith.mulf %52, %57 : vector<8x32xf32>
    %59 = arith.truncf %58 : vector<8x32xf32> to vector<8x32xbf16>
    %cst_27 = arith.constant dense<0.000000e+00> : vector<8x128xf32>
    %60 = tpu.matmul %59, %18, %cst_27 {dimension_numbers = #tpu.dot_dimension_numbers<[1], [0], [0], [1], [0, 0, 1, 1], [], []>} : vector<8x32xbf16>, vector<32x128xbf16>, vector<8x128xf32> -> vector<8x128xf32>
    %61 = arith.addf %60, %21 : vector<8x128xf32>
    %c8_28 = arith.constant 8 : index
    %c0_29 = arith.constant 0 : index
    %62 = vector.load %arg14[%c8_28, %c0_29] : memref<64x128xf32, #tpu.memory_space<vmem>>, vector<8x128xf32>
    tpu.vector_store %arg14[%c8_28, %c0_29], %61 {strides = array<i32>} : memref<64x128xf32, #tpu.memory_space<vmem>>, vector<8x128xf32>,
    %c16 = arith.constant 16 : index
    %c0_30 = arith.constant 0 : index
    %63 = vector.load %arg13[%c16, %c0_30] : memref<64x128xf32, #tpu.memory_space<vmem>>, vector<8x128xf32>
    %cst_31 = arith.constant dense<0.000000e+00> : vector<8x128xf32>
    %64 = tpu.matmul %59, %17, %cst_31 {dimension_numbers = #tpu.dot_dimension_numbers<[1], [0], [0], [1], [0, 0, 1, 1], [], []>} : vector<8x32xbf16>, vector<32x128xbf16>, vector<8x128xf32> -> vector<8x128xf32>
    %65 = arith.addf %63, %64 : vector<8x128xf32>
    %66 = math.tanh %65 : vector<8x128xf32>
    %67 = arith.mulf %66, %5 : vector<8x128xf32>
    %68 = arith.addf %67, %8 : vector<8x128xf32>
    %69 = vector.extract_strided_slice %68 {offsets = [0, 0], sizes = [8, 32], strides = [1, 1]} : vector<8x128xf32> to vector<8x32xf32>
    %70 = vector.extract_strided_slice %68 {offsets = [0, 32], sizes = [8, 32], strides = [1, 1]} : vector<8x128xf32> to vector<8x32xf32>
    %71 = vector.extract_strided_slice %68 {offsets = [0, 64], sizes = [8, 32], strides = [1, 1]} : vector<8x128xf32> to vector<8x32xf32>
    %72 = vector.extract_strided_slice %68 {offsets = [0, 96], sizes = [8, 32], strides = [1, 1]} : vector<8x128xf32> to vector<8x32xf32>
    %73 = arith.mulf %70, %56 : vector<8x32xf32>
    %74 = arith.mulf %69, %72 : vector<8x32xf32>
    %75 = arith.addf %73, %74 : vector<8x32xf32>
    %76 = math.tanh %75 : vector<8x32xf32>
    %77 = arith.mulf %71, %76 : vector<8x32xf32>
    %78 = arith.truncf %77 : vector<8x32xf32> to vector<8x32xbf16>
    %cst_32 = arith.constant dense<0.000000e+00> : vector<8x128xf32>
    %79 = tpu.matmul %78, %18, %cst_32 {dimension_numbers = #tpu.dot_dimension_numbers<[1], [0], [0], [1], [0, 0, 1, 1], [], []>} : vector<8x32xbf16>, vector<32x128xbf16>, vector<8x128xf32> -> vector<8x128xf32>
    %80 = arith.addf %79, %21 : vector<8x128xf32>
    %c16_33 = arith.constant 16 : index
    %c0_34 = arith.constant 0 : index
    %81 = vector.load %arg14[%c16_33, %c0_34] : memref<64x128xf32, #tpu.memory_space<vmem>>, vector<8x128xf32>
    tpu.vector_store %arg14[%c16_33, %c0_34], %80 {strides = array<i32>} : memref<64x128xf32, #tpu.memory_space<vmem>>, vector<8x128xf32>,
    %c24 = arith.constant 24 : index
    %c0_35 = arith.constant 0 : index
    %82 = vector.load %arg13[%c24, %c0_35] : memref<64x128xf32, #tpu.memory_space<vmem>>, vector<8x128xf32>
    %cst_36 = arith.constant dense<0.000000e+00> : vector<8x128xf32>
    %83 = tpu.matmul %78, %17, %cst_36 {dimension_numbers = #tpu.dot_dimension_numbers<[1], [0], [0], [1], [0, 0, 1, 1], [], []>} : vector<8x32xbf16>, vector<32x128xbf16>, vector<8x128xf32> -> vector<8x128xf32>
    %84 = arith.addf %82, %83 : vector<8x128xf32>
    %85 = math.tanh %84 : vector<8x128xf32>
    %86 = arith.mulf %85, %5 : vector<8x128xf32>
    %87 = arith.addf %86, %8 : vector<8x128xf32>
    %88 = vector.extract_strided_slice %87 {offsets = [0, 0], sizes = [8, 32], strides = [1, 1]} : vector<8x128xf32> to vector<8x32xf32>
    %89 = vector.extract_strided_slice %87 {offsets = [0, 32], sizes = [8, 32], strides = [1, 1]} : vector<8x128xf32> to vector<8x32xf32>
    %90 = vector.extract_strided_slice %87 {offsets = [0, 64], sizes = [8, 32], strides = [1, 1]} : vector<8x128xf32> to vector<8x32xf32>
    %91 = vector.extract_strided_slice %87 {offsets = [0, 96], sizes = [8, 32], strides = [1, 1]} : vector<8x128xf32> to vector<8x32xf32>
    %92 = arith.mulf %89, %75 : vector<8x32xf32>
    %93 = arith.mulf %88, %91 : vector<8x32xf32>
    %94 = arith.addf %92, %93 : vector<8x32xf32>
    %95 = math.tanh %94 : vector<8x32xf32>
    %96 = arith.mulf %90, %95 : vector<8x32xf32>
    %97 = arith.truncf %96 : vector<8x32xf32> to vector<8x32xbf16>
    %cst_37 = arith.constant dense<0.000000e+00> : vector<8x128xf32>
    %98 = tpu.matmul %97, %18, %cst_37 {dimension_numbers = #tpu.dot_dimension_numbers<[1], [0], [0], [1], [0, 0, 1, 1], [], []>} : vector<8x32xbf16>, vector<32x128xbf16>, vector<8x128xf32> -> vector<8x128xf32>
    %99 = arith.addf %98, %21 : vector<8x128xf32>
    %c24_38 = arith.constant 24 : index
    %c0_39 = arith.constant 0 : index
    %100 = vector.load %arg14[%c24_38, %c0_39] : memref<64x128xf32, #tpu.memory_space<vmem>>, vector<8x128xf32>
    tpu.vector_store %arg14[%c24_38, %c0_39], %99 {strides = array<i32>} : memref<64x128xf32, #tpu.memory_space<vmem>>, vector<8x128xf32>,
    %c32 = arith.constant 32 : index
    %c0_40 = arith.constant 0 : index
    %101 = vector.load %arg13[%c32, %c0_40] : memref<64x128xf32, #tpu.memory_space<vmem>>, vector<8x128xf32>
    %cst_41 = arith.constant dense<0.000000e+00> : vector<8x128xf32>
    %102 = tpu.matmul %97, %17, %cst_41 {dimension_numbers = #tpu.dot_dimension_numbers<[1], [0], [0], [1], [0, 0, 1, 1], [], []>} : vector<8x32xbf16>, vector<32x128xbf16>, vector<8x128xf32> -> vector<8x128xf32>
    %103 = arith.addf %101, %102 : vector<8x128xf32>
    %104 = math.tanh %103 : vector<8x128xf32>
    %105 = arith.mulf %104, %5 : vector<8x128xf32>
    %106 = arith.addf %105, %8 : vector<8x128xf32>
    %107 = vector.extract_strided_slice %106 {offsets = [0, 0], sizes = [8, 32], strides = [1, 1]} : vector<8x128xf32> to vector<8x32xf32>
    %108 = vector.extract_strided_slice %106 {offsets = [0, 32], sizes = [8, 32], strides = [1, 1]} : vector<8x128xf32> to vector<8x32xf32>
    %109 = vector.extract_strided_slice %106 {offsets = [0, 64], sizes = [8, 32], strides = [1, 1]} : vector<8x128xf32> to vector<8x32xf32>
    %110 = vector.extract_strided_slice %106 {offsets = [0, 96], sizes = [8, 32], strides = [1, 1]} : vector<8x128xf32> to vector<8x32xf32>
    %111 = arith.mulf %108, %94 : vector<8x32xf32>
    %112 = arith.mulf %107, %110 : vector<8x32xf32>
    %113 = arith.addf %111, %112 : vector<8x32xf32>
    %114 = math.tanh %113 : vector<8x32xf32>
    %115 = arith.mulf %109, %114 : vector<8x32xf32>
    %116 = arith.truncf %115 : vector<8x32xf32> to vector<8x32xbf16>
    %cst_42 = arith.constant dense<0.000000e+00> : vector<8x128xf32>
    %117 = tpu.matmul %116, %18, %cst_42 {dimension_numbers = #tpu.dot_dimension_numbers<[1], [0], [0], [1], [0, 0, 1, 1], [], []>} : vector<8x32xbf16>, vector<32x128xbf16>, vector<8x128xf32> -> vector<8x128xf32>
    %118 = arith.addf %117, %21 : vector<8x128xf32>
    %c32_43 = arith.constant 32 : index
    %c0_44 = arith.constant 0 : index
    %119 = vector.load %arg14[%c32_43, %c0_44] : memref<64x128xf32, #tpu.memory_space<vmem>>, vector<8x128xf32>
    tpu.vector_store %arg14[%c32_43, %c0_44], %118 {strides = array<i32>} : memref<64x128xf32, #tpu.memory_space<vmem>>, vector<8x128xf32>,
    %c40 = arith.constant 40 : index
    %c0_45 = arith.constant 0 : index
    %120 = vector.load %arg13[%c40, %c0_45] : memref<64x128xf32, #tpu.memory_space<vmem>>, vector<8x128xf32>
    %cst_46 = arith.constant dense<0.000000e+00> : vector<8x128xf32>
    %121 = tpu.matmul %116, %17, %cst_46 {dimension_numbers = #tpu.dot_dimension_numbers<[1], [0], [0], [1], [0, 0, 1, 1], [], []>} : vector<8x32xbf16>, vector<32x128xbf16>, vector<8x128xf32> -> vector<8x128xf32>
    %122 = arith.addf %120, %121 : vector<8x128xf32>
    %123 = math.tanh %122 : vector<8x128xf32>
    %124 = arith.mulf %123, %5 : vector<8x128xf32>
    %125 = arith.addf %124, %8 : vector<8x128xf32>
    %126 = vector.extract_strided_slice %125 {offsets = [0, 0], sizes = [8, 32], strides = [1, 1]} : vector<8x128xf32> to vector<8x32xf32>
    %127 = vector.extract_strided_slice %125 {offsets = [0, 32], sizes = [8, 32], strides = [1, 1]} : vector<8x128xf32> to vector<8x32xf32>
    %128 = vector.extract_strided_slice %125 {offsets = [0, 64], sizes = [8, 32], strides = [1, 1]} : vector<8x128xf32> to vector<8x32xf32>
    %129 = vector.extract_strided_slice %125 {offsets = [0, 96], sizes = [8, 32], strides = [1, 1]} : vector<8x128xf32> to vector<8x32xf32>
    %130 = arith.mulf %127, %113 : vector<8x32xf32>
    %131 = arith.mulf %126, %129 : vector<8x32xf32>
    %132 = arith.addf %130, %131 : vector<8x32xf32>
    %133 = math.tanh %132 : vector<8x32xf32>
    %134 = arith.mulf %128, %133 : vector<8x32xf32>
    %135 = arith.truncf %134 : vector<8x32xf32> to vector<8x32xbf16>
    %cst_47 = arith.constant dense<0.000000e+00> : vector<8x128xf32>
    %136 = tpu.matmul %135, %18, %cst_47 {dimension_numbers = #tpu.dot_dimension_numbers<[1], [0], [0], [1], [0, 0, 1, 1], [], []>} : vector<8x32xbf16>, vector<32x128xbf16>, vector<8x128xf32> -> vector<8x128xf32>
    %137 = arith.addf %136, %21 : vector<8x128xf32>
    %c40_48 = arith.constant 40 : index
    %c0_49 = arith.constant 0 : index
    %138 = vector.load %arg14[%c40_48, %c0_49] : memref<64x128xf32, #tpu.memory_space<vmem>>, vector<8x128xf32>
    tpu.vector_store %arg14[%c40_48, %c0_49], %137 {strides = array<i32>} : memref<64x128xf32, #tpu.memory_space<vmem>>, vector<8x128xf32>,
    %c48 = arith.constant 48 : index
    %c0_50 = arith.constant 0 : index
    %139 = vector.load %arg13[%c48, %c0_50] : memref<64x128xf32, #tpu.memory_space<vmem>>, vector<8x128xf32>
    %cst_51 = arith.constant dense<0.000000e+00> : vector<8x128xf32>
    %140 = tpu.matmul %135, %17, %cst_51 {dimension_numbers = #tpu.dot_dimension_numbers<[1], [0], [0], [1], [0, 0, 1, 1], [], []>} : vector<8x32xbf16>, vector<32x128xbf16>, vector<8x128xf32> -> vector<8x128xf32>
    %141 = arith.addf %139, %140 : vector<8x128xf32>
    %142 = math.tanh %141 : vector<8x128xf32>
    %143 = arith.mulf %142, %5 : vector<8x128xf32>
    %144 = arith.addf %143, %8 : vector<8x128xf32>
    %145 = vector.extract_strided_slice %144 {offsets = [0, 0], sizes = [8, 32], strides = [1, 1]} : vector<8x128xf32> to vector<8x32xf32>
    %146 = vector.extract_strided_slice %144 {offsets = [0, 32], sizes = [8, 32], strides = [1, 1]} : vector<8x128xf32> to vector<8x32xf32>
    %147 = vector.extract_strided_slice %144 {offsets = [0, 64], sizes = [8, 32], strides = [1, 1]} : vector<8x128xf32> to vector<8x32xf32>
    %148 = vector.extract_strided_slice %144 {offsets = [0, 96], sizes = [8, 32], strides = [1, 1]} : vector<8x128xf32> to vector<8x32xf32>
    %149 = arith.mulf %146, %132 : vector<8x32xf32>
    %150 = arith.mulf %145, %148 : vector<8x32xf32>
    %151 = arith.addf %149, %150 : vector<8x32xf32>
    %152 = math.tanh %151 : vector<8x32xf32>
    %153 = arith.mulf %147, %152 : vector<8x32xf32>
    %154 = arith.truncf %153 : vector<8x32xf32> to vector<8x32xbf16>
    %cst_52 = arith.constant dense<0.000000e+00> : vector<8x128xf32>
    %155 = tpu.matmul %154, %18, %cst_52 {dimension_numbers = #tpu.dot_dimension_numbers<[1], [0], [0], [1], [0, 0, 1, 1], [], []>} : vector<8x32xbf16>, vector<32x128xbf16>, vector<8x128xf32> -> vector<8x128xf32>
    %156 = arith.addf %155, %21 : vector<8x128xf32>
    %c48_53 = arith.constant 48 : index
    %c0_54 = arith.constant 0 : index
    %157 = vector.load %arg14[%c48_53, %c0_54] : memref<64x128xf32, #tpu.memory_space<vmem>>, vector<8x128xf32>
    tpu.vector_store %arg14[%c48_53, %c0_54], %156 {strides = array<i32>} : memref<64x128xf32, #tpu.memory_space<vmem>>, vector<8x128xf32>,
    %c56 = arith.constant 56 : index
    %c0_55 = arith.constant 0 : index
    %158 = vector.load %arg13[%c56, %c0_55] : memref<64x128xf32, #tpu.memory_space<vmem>>, vector<8x128xf32>
    %cst_56 = arith.constant dense<0.000000e+00> : vector<8x128xf32>
    %159 = tpu.matmul %154, %17, %cst_56 {dimension_numbers = #tpu.dot_dimension_numbers<[1], [0], [0], [1], [0, 0, 1, 1], [], []>} : vector<8x32xbf16>, vector<32x128xbf16>, vector<8x128xf32> -> vector<8x128xf32>
    %160 = arith.addf %158, %159 : vector<8x128xf32>
    %161 = math.tanh %160 : vector<8x128xf32>
    %162 = arith.mulf %161, %5 : vector<8x128xf32>
    %163 = arith.addf %162, %8 : vector<8x128xf32>
    %164 = vector.extract_strided_slice %163 {offsets = [0, 0], sizes = [8, 32], strides = [1, 1]} : vector<8x128xf32> to vector<8x32xf32>
    %165 = vector.extract_strided_slice %163 {offsets = [0, 32], sizes = [8, 32], strides = [1, 1]} : vector<8x128xf32> to vector<8x32xf32>
    %166 = vector.extract_strided_slice %163 {offsets = [0, 64], sizes = [8, 32], strides = [1, 1]} : vector<8x128xf32> to vector<8x32xf32>
    %167 = vector.extract_strided_slice %163 {offsets = [0, 96], sizes = [8, 32], strides = [1, 1]} : vector<8x128xf32> to vector<8x32xf32>
    %168 = arith.mulf %165, %151 : vector<8x32xf32>
    %169 = arith.mulf %164, %167 : vector<8x32xf32>
    %170 = arith.addf %168, %169 : vector<8x32xf32>
    %171 = math.tanh %170 : vector<8x32xf32>
    %172 = arith.mulf %166, %171 : vector<8x32xf32>
    %173 = arith.truncf %172 : vector<8x32xf32> to vector<8x32xbf16>
    %cst_57 = arith.constant dense<0.000000e+00> : vector<8x128xf32>
    %174 = tpu.matmul %173, %18, %cst_57 {dimension_numbers = #tpu.dot_dimension_numbers<[1], [0], [0], [1], [0, 0, 1, 1], [], []>} : vector<8x32xbf16>, vector<32x128xbf16>, vector<8x128xf32> -> vector<8x128xf32>
    %175 = arith.addf %174, %21 : vector<8x128xf32>
    %c56_58 = arith.constant 56 : index
    %c0_59 = arith.constant 0 : index
    %176 = vector.load %arg14[%c56_58, %c0_59] : memref<64x128xf32, #tpu.memory_space<vmem>>, vector<8x128xf32>
    tpu.vector_store %arg14[%c56_58, %c0_59], %175 {strides = array<i32>} : memref<64x128xf32, #tpu.memory_space<vmem>>, vector<8x128xf32>,
    %c0_60 = arith.constant 0 : index
    %c0_61 = arith.constant 0 : index
    %177 = vector.load %arg5[%c0_60, %c0_61] : memref<32x128xbf16, #tpu.memory_space<vmem>>, vector<32x128xbf16>
    %c0_62 = arith.constant 0 : index
    %c0_63 = arith.constant 0 : index
    %178 = vector.load %arg7[%c0_62, %c0_63] : memref<32x128xbf16, #tpu.memory_space<vmem>>, vector<32x128xbf16>
    %c0_64 = arith.constant 0 : index
    %c0_65 = arith.constant 0 : index
    %179 = vector.load %arg9[%c0_64, %c0_65] : memref<1x128xf32, #tpu.memory_space<vmem>>, vector<1x128xf32>
    %180 = vector.shape_cast %179 : vector<1x128xf32> to vector<1x128xf32>
    %181 = vector.broadcast %180 : vector<1x128xf32> to vector<8x128xf32>
    %cst_66 = arith.constant 0.000000e+00 : f32
    %182 = vector.broadcast %cst_66 : f32 to vector<8x32xf32>
    %183 = arith.truncf %182 : vector<8x32xf32> to vector<8x32xbf16>
    %cst_67 = arith.constant 0.000000e+00 : f32
    %184 = vector.broadcast %cst_67 : f32 to vector<8x32xf32>
    %c0_68 = arith.constant 0 : index
    %c0_69 = arith.constant 0 : index
    %185 = vector.load %arg14[%c0_68, %c0_69] : memref<64x128xf32, #tpu.memory_space<vmem>>, vector<8x128xf32>
    %cst_70 = arith.constant dense<0.000000e+00> : vector<8x128xf32>
    %186 = tpu.matmul %183, %177, %cst_70 {dimension_numbers = #tpu.dot_dimension_numbers<[1], [0], [0], [1], [0, 0, 1, 1], [], []>} : vector<8x32xbf16>, vector<32x128xbf16>, vector<8x128xf32> -> vector<8x128xf32>
    %187 = arith.addf %185, %186 : vector<8x128xf32>
    %188 = math.tanh %187 : vector<8x128xf32>
    %189 = arith.mulf %188, %5 : vector<8x128xf32>
    %190 = arith.addf %189, %8 : vector<8x128xf32>
    %191 = vector.extract_strided_slice %190 {offsets = [0, 0], sizes = [8, 32], strides = [1, 1]} : vector<8x128xf32> to vector<8x32xf32>
    %192 = vector.extract_strided_slice %190 {offsets = [0, 32], sizes = [8, 32], strides = [1, 1]} : vector<8x128xf32> to vector<8x32xf32>
    %193 = vector.extract_strided_slice %190 {offsets = [0, 64], sizes = [8, 32], strides = [1, 1]} : vector<8x128xf32> to vector<8x32xf32>
    %194 = vector.extract_strided_slice %190 {offsets = [0, 96], sizes = [8, 32], strides = [1, 1]} : vector<8x128xf32> to vector<8x32xf32>
    %195 = arith.mulf %192, %184 : vector<8x32xf32>
    %196 = arith.mulf %191, %194 : vector<8x32xf32>
    %197 = arith.addf %195, %196 : vector<8x32xf32>
    %198 = math.tanh %197 : vector<8x32xf32>
    %199 = arith.mulf %193, %198 : vector<8x32xf32>
    %200 = arith.truncf %199 : vector<8x32xf32> to vector<8x32xbf16>
    %cst_71 = arith.constant dense<0.000000e+00> : vector<8x128xf32>
    %201 = tpu.matmul %200, %178, %cst_71 {dimension_numbers = #tpu.dot_dimension_numbers<[1], [0], [0], [1], [0, 0, 1, 1], [], []>} : vector<8x32xbf16>, vector<32x128xbf16>, vector<8x128xf32> -> vector<8x128xf32>
    %202 = arith.addf %201, %181 : vector<8x128xf32>
    %c0_72 = arith.constant 0 : index
    %c0_73 = arith.constant 0 : index
    %203 = vector.load %arg13[%c0_72, %c0_73] : memref<64x128xf32, #tpu.memory_space<vmem>>, vector<8x128xf32>
    tpu.vector_store %arg13[%c0_72, %c0_73], %202 {strides = array<i32>} : memref<64x128xf32, #tpu.memory_space<vmem>>, vector<8x128xf32>,
    %c8_74 = arith.constant 8 : index
    %c0_75 = arith.constant 0 : index
    %204 = vector.load %arg14[%c8_74, %c0_75] : memref<64x128xf32, #tpu.memory_space<vmem>>, vector<8x128xf32>
    %cst_76 = arith.constant dense<0.000000e+00> : vector<8x128xf32>
    %205 = tpu.matmul %200, %177, %cst_76 {dimension_numbers = #tpu.dot_dimension_numbers<[1], [0], [0], [1], [0, 0, 1, 1], [], []>} : vector<8x32xbf16>, vector<32x128xbf16>, vector<8x128xf32> -> vector<8x128xf32>
    %206 = arith.addf %204, %205 : vector<8x128xf32>
    %207 = math.tanh %206 : vector<8x128xf32>
    %208 = arith.mulf %207, %5 : vector<8x128xf32>
    %209 = arith.addf %208, %8 : vector<8x128xf32>
    %210 = vector.extract_strided_slice %209 {offsets = [0, 0], sizes = [8, 32], strides = [1, 1]} : vector<8x128xf32> to vector<8x32xf32>
    %211 = vector.extract_strided_slice %209 {offsets = [0, 32], sizes = [8, 32], strides = [1, 1]} : vector<8x128xf32> to vector<8x32xf32>
    %212 = vector.extract_strided_slice %209 {offsets = [0, 64], sizes = [8, 32], strides = [1, 1]} : vector<8x128xf32> to vector<8x32xf32>
    %213 = vector.extract_strided_slice %209 {offsets = [0, 96], sizes = [8, 32], strides = [1, 1]} : vector<8x128xf32> to vector<8x32xf32>
    %214 = arith.mulf %211, %197 : vector<8x32xf32>
    %215 = arith.mulf %210, %213 : vector<8x32xf32>
    %216 = arith.addf %214, %215 : vector<8x32xf32>
    %217 = math.tanh %216 : vector<8x32xf32>
    %218 = arith.mulf %212, %217 : vector<8x32xf32>
    %219 = arith.truncf %218 : vector<8x32xf32> to vector<8x32xbf16>
    %cst_77 = arith.constant dense<0.000000e+00> : vector<8x128xf32>
    %220 = tpu.matmul %219, %178, %cst_77 {dimension_numbers = #tpu.dot_dimension_numbers<[1], [0], [0], [1], [0, 0, 1, 1], [], []>} : vector<8x32xbf16>, vector<32x128xbf16>, vector<8x128xf32> -> vector<8x128xf32>
    %221 = arith.addf %220, %181 : vector<8x128xf32>
    %c8_78 = arith.constant 8 : index
    %c0_79 = arith.constant 0 : index
    %222 = vector.load %arg13[%c8_78, %c0_79] : memref<64x128xf32, #tpu.memory_space<vmem>>, vector<8x128xf32>
    tpu.vector_store %arg13[%c8_78, %c0_79], %221 {strides = array<i32>} : memref<64x128xf32, #tpu.memory_space<vmem>>, vector<8x128xf32>,
    %c16_80 = arith.constant 16 : index
    %c0_81 = arith.constant 0 : index
    %223 = vector.load %arg14[%c16_80, %c0_81] : memref<64x128xf32, #tpu.memory_space<vmem>>, vector<8x128xf32>
    %cst_82 = arith.constant dense<0.000000e+00> : vector<8x128xf32>
    %224 = tpu.matmul %219, %177, %cst_82 {dimension_numbers = #tpu.dot_dimension_numbers<[1], [0], [0], [1], [0, 0, 1, 1], [], []>} : vector<8x32xbf16>, vector<32x128xbf16>, vector<8x128xf32> -> vector<8x128xf32>
    %225 = arith.addf %223, %224 : vector<8x128xf32>
    %226 = math.tanh %225 : vector<8x128xf32>
    %227 = arith.mulf %226, %5 : vector<8x128xf32>
    %228 = arith.addf %227, %8 : vector<8x128xf32>
    %229 = vector.extract_strided_slice %228 {offsets = [0, 0], sizes = [8, 32], strides = [1, 1]} : vector<8x128xf32> to vector<8x32xf32>
    %230 = vector.extract_strided_slice %228 {offsets = [0, 32], sizes = [8, 32], strides = [1, 1]} : vector<8x128xf32> to vector<8x32xf32>
    %231 = vector.extract_strided_slice %228 {offsets = [0, 64], sizes = [8, 32], strides = [1, 1]} : vector<8x128xf32> to vector<8x32xf32>
    %232 = vector.extract_strided_slice %228 {offsets = [0, 96], sizes = [8, 32], strides = [1, 1]} : vector<8x128xf32> to vector<8x32xf32>
    %233 = arith.mulf %230, %216 : vector<8x32xf32>
    %234 = arith.mulf %229, %232 : vector<8x32xf32>
    %235 = arith.addf %233, %234 : vector<8x32xf32>
    %236 = math.tanh %235 : vector<8x32xf32>
    %237 = arith.mulf %231, %236 : vector<8x32xf32>
    %238 = arith.truncf %237 : vector<8x32xf32> to vector<8x32xbf16>
    %cst_83 = arith.constant dense<0.000000e+00> : vector<8x128xf32>
    %239 = tpu.matmul %238, %178, %cst_83 {dimension_numbers = #tpu.dot_dimension_numbers<[1], [0], [0], [1], [0, 0, 1, 1], [], []>} : vector<8x32xbf16>, vector<32x128xbf16>, vector<8x128xf32> -> vector<8x128xf32>
    %240 = arith.addf %239, %181 : vector<8x128xf32>
    %c16_84 = arith.constant 16 : index
    %c0_85 = arith.constant 0 : index
    %241 = vector.load %arg13[%c16_84, %c0_85] : memref<64x128xf32, #tpu.memory_space<vmem>>, vector<8x128xf32>
    tpu.vector_store %arg13[%c16_84, %c0_85], %240 {strides = array<i32>} : memref<64x128xf32, #tpu.memory_space<vmem>>, vector<8x128xf32>,
    %c24_86 = arith.constant 24 : index
    %c0_87 = arith.constant 0 : index
    %242 = vector.load %arg14[%c24_86, %c0_87] : memref<64x128xf32, #tpu.memory_space<vmem>>, vector<8x128xf32>
    %cst_88 = arith.constant dense<0.000000e+00> : vector<8x128xf32>
    %243 = tpu.matmul %238, %177, %cst_88 {dimension_numbers = #tpu.dot_dimension_numbers<[1], [0], [0], [1], [0, 0, 1, 1], [], []>} : vector<8x32xbf16>, vector<32x128xbf16>, vector<8x128xf32> -> vector<8x128xf32>
    %244 = arith.addf %242, %243 : vector<8x128xf32>
    %245 = math.tanh %244 : vector<8x128xf32>
    %246 = arith.mulf %245, %5 : vector<8x128xf32>
    %247 = arith.addf %246, %8 : vector<8x128xf32>
    %248 = vector.extract_strided_slice %247 {offsets = [0, 0], sizes = [8, 32], strides = [1, 1]} : vector<8x128xf32> to vector<8x32xf32>
    %249 = vector.extract_strided_slice %247 {offsets = [0, 32], sizes = [8, 32], strides = [1, 1]} : vector<8x128xf32> to vector<8x32xf32>
    %250 = vector.extract_strided_slice %247 {offsets = [0, 64], sizes = [8, 32], strides = [1, 1]} : vector<8x128xf32> to vector<8x32xf32>
    %251 = vector.extract_strided_slice %247 {offsets = [0, 96], sizes = [8, 32], strides = [1, 1]} : vector<8x128xf32> to vector<8x32xf32>
    %252 = arith.mulf %249, %235 : vector<8x32xf32>
    %253 = arith.mulf %248, %251 : vector<8x32xf32>
    %254 = arith.addf %252, %253 : vector<8x32xf32>
    %255 = math.tanh %254 : vector<8x32xf32>
    %256 = arith.mulf %250, %255 : vector<8x32xf32>
    %257 = arith.truncf %256 : vector<8x32xf32> to vector<8x32xbf16>
    %cst_89 = arith.constant dense<0.000000e+00> : vector<8x128xf32>
    %258 = tpu.matmul %257, %178, %cst_89 {dimension_numbers = #tpu.dot_dimension_numbers<[1], [0], [0], [1], [0, 0, 1, 1], [], []>} : vector<8x32xbf16>, vector<32x128xbf16>, vector<8x128xf32> -> vector<8x128xf32>
    %259 = arith.addf %258, %181 : vector<8x128xf32>
    %c24_90 = arith.constant 24 : index
    %c0_91 = arith.constant 0 : index
    %260 = vector.load %arg13[%c24_90, %c0_91] : memref<64x128xf32, #tpu.memory_space<vmem>>, vector<8x128xf32>
    tpu.vector_store %arg13[%c24_90, %c0_91], %259 {strides = array<i32>} : memref<64x128xf32, #tpu.memory_space<vmem>>, vector<8x128xf32>,
    %c32_92 = arith.constant 32 : index
    %c0_93 = arith.constant 0 : index
    %261 = vector.load %arg14[%c32_92, %c0_93] : memref<64x128xf32, #tpu.memory_space<vmem>>, vector<8x128xf32>
    %cst_94 = arith.constant dense<0.000000e+00> : vector<8x128xf32>
    %262 = tpu.matmul %257, %177, %cst_94 {dimension_numbers = #tpu.dot_dimension_numbers<[1], [0], [0], [1], [0, 0, 1, 1], [], []>} : vector<8x32xbf16>, vector<32x128xbf16>, vector<8x128xf32> -> vector<8x128xf32>
    %263 = arith.addf %261, %262 : vector<8x128xf32>
    %264 = math.tanh %263 : vector<8x128xf32>
    %265 = arith.mulf %264, %5 : vector<8x128xf32>
    %266 = arith.addf %265, %8 : vector<8x128xf32>
    %267 = vector.extract_strided_slice %266 {offsets = [0, 0], sizes = [8, 32], strides = [1, 1]} : vector<8x128xf32> to vector<8x32xf32>
    %268 = vector.extract_strided_slice %266 {offsets = [0, 32], sizes = [8, 32], strides = [1, 1]} : vector<8x128xf32> to vector<8x32xf32>
    %269 = vector.extract_strided_slice %266 {offsets = [0, 64], sizes = [8, 32], strides = [1, 1]} : vector<8x128xf32> to vector<8x32xf32>
    %270 = vector.extract_strided_slice %266 {offsets = [0, 96], sizes = [8, 32], strides = [1, 1]} : vector<8x128xf32> to vector<8x32xf32>
    %271 = arith.mulf %268, %254 : vector<8x32xf32>
    %272 = arith.mulf %267, %270 : vector<8x32xf32>
    %273 = arith.addf %271, %272 : vector<8x32xf32>
    %274 = math.tanh %273 : vector<8x32xf32>
    %275 = arith.mulf %269, %274 : vector<8x32xf32>
    %276 = arith.truncf %275 : vector<8x32xf32> to vector<8x32xbf16>
    %cst_95 = arith.constant dense<0.000000e+00> : vector<8x128xf32>
    %277 = tpu.matmul %276, %178, %cst_95 {dimension_numbers = #tpu.dot_dimension_numbers<[1], [0], [0], [1], [0, 0, 1, 1], [], []>} : vector<8x32xbf16>, vector<32x128xbf16>, vector<8x128xf32> -> vector<8x128xf32>
    %278 = arith.addf %277, %181 : vector<8x128xf32>
    %c32_96 = arith.constant 32 : index
    %c0_97 = arith.constant 0 : index
    %279 = vector.load %arg13[%c32_96, %c0_97] : memref<64x128xf32, #tpu.memory_space<vmem>>, vector<8x128xf32>
    tpu.vector_store %arg13[%c32_96, %c0_97], %278 {strides = array<i32>} : memref<64x128xf32, #tpu.memory_space<vmem>>, vector<8x128xf32>,
    %c40_98 = arith.constant 40 : index
    %c0_99 = arith.constant 0 : index
    %280 = vector.load %arg14[%c40_98, %c0_99] : memref<64x128xf32, #tpu.memory_space<vmem>>, vector<8x128xf32>
    %cst_100 = arith.constant dense<0.000000e+00> : vector<8x128xf32>
    %281 = tpu.matmul %276, %177, %cst_100 {dimension_numbers = #tpu.dot_dimension_numbers<[1], [0], [0], [1], [0, 0, 1, 1], [], []>} : vector<8x32xbf16>, vector<32x128xbf16>, vector<8x128xf32> -> vector<8x128xf32>
    %282 = arith.addf %280, %281 : vector<8x128xf32>
    %283 = math.tanh %282 : vector<8x128xf32>
    %284 = arith.mulf %283, %5 : vector<8x128xf32>
    %285 = arith.addf %284, %8 : vector<8x128xf32>
    %286 = vector.extract_strided_slice %285 {offsets = [0, 0], sizes = [8, 32], strides = [1, 1]} : vector<8x128xf32> to vector<8x32xf32>
    %287 = vector.extract_strided_slice %285 {offsets = [0, 32], sizes = [8, 32], strides = [1, 1]} : vector<8x128xf32> to vector<8x32xf32>
    %288 = vector.extract_strided_slice %285 {offsets = [0, 64], sizes = [8, 32], strides = [1, 1]} : vector<8x128xf32> to vector<8x32xf32>
    %289 = vector.extract_strided_slice %285 {offsets = [0, 96], sizes = [8, 32], strides = [1, 1]} : vector<8x128xf32> to vector<8x32xf32>
    %290 = arith.mulf %287, %273 : vector<8x32xf32>
    %291 = arith.mulf %286, %289 : vector<8x32xf32>
    %292 = arith.addf %290, %291 : vector<8x32xf32>
    %293 = math.tanh %292 : vector<8x32xf32>
    %294 = arith.mulf %288, %293 : vector<8x32xf32>
    %295 = arith.truncf %294 : vector<8x32xf32> to vector<8x32xbf16>
    %cst_101 = arith.constant dense<0.000000e+00> : vector<8x128xf32>
    %296 = tpu.matmul %295, %178, %cst_101 {dimension_numbers = #tpu.dot_dimension_numbers<[1], [0], [0], [1], [0, 0, 1, 1], [], []>} : vector<8x32xbf16>, vector<32x128xbf16>, vector<8x128xf32> -> vector<8x128xf32>
    %297 = arith.addf %296, %181 : vector<8x128xf32>
    %c40_102 = arith.constant 40 : index
    %c0_103 = arith.constant 0 : index
    %298 = vector.load %arg13[%c40_102, %c0_103] : memref<64x128xf32, #tpu.memory_space<vmem>>, vector<8x128xf32>
    tpu.vector_store %arg13[%c40_102, %c0_103], %297 {strides = array<i32>} : memref<64x128xf32, #tpu.memory_space<vmem>>, vector<8x128xf32>,
    %c48_104 = arith.constant 48 : index
    %c0_105 = arith.constant 0 : index
    %299 = vector.load %arg14[%c48_104, %c0_105] : memref<64x128xf32, #tpu.memory_space<vmem>>, vector<8x128xf32>
    %cst_106 = arith.constant dense<0.000000e+00> : vector<8x128xf32>
    %300 = tpu.matmul %295, %177, %cst_106 {dimension_numbers = #tpu.dot_dimension_numbers<[1], [0], [0], [1], [0, 0, 1, 1], [], []>} : vector<8x32xbf16>, vector<32x128xbf16>, vector<8x128xf32> -> vector<8x128xf32>
    %301 = arith.addf %299, %300 : vector<8x128xf32>
    %302 = math.tanh %301 : vector<8x128xf32>
    %303 = arith.mulf %302, %5 : vector<8x128xf32>
    %304 = arith.addf %303, %8 : vector<8x128xf32>
    %305 = vector.extract_strided_slice %304 {offsets = [0, 0], sizes = [8, 32], strides = [1, 1]} : vector<8x128xf32> to vector<8x32xf32>
    %306 = vector.extract_strided_slice %304 {offsets = [0, 32], sizes = [8, 32], strides = [1, 1]} : vector<8x128xf32> to vector<8x32xf32>
    %307 = vector.extract_strided_slice %304 {offsets = [0, 64], sizes = [8, 32], strides = [1, 1]} : vector<8x128xf32> to vector<8x32xf32>
    %308 = vector.extract_strided_slice %304 {offsets = [0, 96], sizes = [8, 32], strides = [1, 1]} : vector<8x128xf32> to vector<8x32xf32>
    %309 = arith.mulf %306, %292 : vector<8x32xf32>
    %310 = arith.mulf %305, %308 : vector<8x32xf32>
    %311 = arith.addf %309, %310 : vector<8x32xf32>
    %312 = math.tanh %311 : vector<8x32xf32>
    %313 = arith.mulf %307, %312 : vector<8x32xf32>
    %314 = arith.truncf %313 : vector<8x32xf32> to vector<8x32xbf16>
    %cst_107 = arith.constant dense<0.000000e+00> : vector<8x128xf32>
    %315 = tpu.matmul %314, %178, %cst_107 {dimension_numbers = #tpu.dot_dimension_numbers<[1], [0], [0], [1], [0, 0, 1, 1], [], []>} : vector<8x32xbf16>, vector<32x128xbf16>, vector<8x128xf32> -> vector<8x128xf32>
    %316 = arith.addf %315, %181 : vector<8x128xf32>
    %c48_108 = arith.constant 48 : index
    %c0_109 = arith.constant 0 : index
    %317 = vector.load %arg13[%c48_108, %c0_109] : memref<64x128xf32, #tpu.memory_space<vmem>>, vector<8x128xf32>
    tpu.vector_store %arg13[%c48_108, %c0_109], %316 {strides = array<i32>} : memref<64x128xf32, #tpu.memory_space<vmem>>, vector<8x128xf32>,
    %c56_110 = arith.constant 56 : index
    %c0_111 = arith.constant 0 : index
    %318 = vector.load %arg14[%c56_110, %c0_111] : memref<64x128xf32, #tpu.memory_space<vmem>>, vector<8x128xf32>
    %cst_112 = arith.constant dense<0.000000e+00> : vector<8x128xf32>
    %319 = tpu.matmul %314, %177, %cst_112 {dimension_numbers = #tpu.dot_dimension_numbers<[1], [0], [0], [1], [0, 0, 1, 1], [], []>} : vector<8x32xbf16>, vector<32x128xbf16>, vector<8x128xf32> -> vector<8x128xf32>
    %320 = arith.addf %318, %319 : vector<8x128xf32>
    %321 = math.tanh %320 : vector<8x128xf32>
    %322 = arith.mulf %321, %5 : vector<8x128xf32>
    %323 = arith.addf %322, %8 : vector<8x128xf32>
    %324 = vector.extract_strided_slice %323 {offsets = [0, 0], sizes = [8, 32], strides = [1, 1]} : vector<8x128xf32> to vector<8x32xf32>
    %325 = vector.extract_strided_slice %323 {offsets = [0, 32], sizes = [8, 32], strides = [1, 1]} : vector<8x128xf32> to vector<8x32xf32>
    %326 = vector.extract_strided_slice %323 {offsets = [0, 64], sizes = [8, 32], strides = [1, 1]} : vector<8x128xf32> to vector<8x32xf32>
    %327 = vector.extract_strided_slice %323 {offsets = [0, 96], sizes = [8, 32], strides = [1, 1]} : vector<8x128xf32> to vector<8x32xf32>
    %328 = arith.mulf %325, %311 : vector<8x32xf32>
    %329 = arith.mulf %324, %327 : vector<8x32xf32>
    %330 = arith.addf %328, %329 : vector<8x32xf32>
    %331 = math.tanh %330 : vector<8x32xf32>
    %332 = arith.mulf %326, %331 : vector<8x32xf32>
    %333 = arith.truncf %332 : vector<8x32xf32> to vector<8x32xbf16>
    %cst_113 = arith.constant dense<0.000000e+00> : vector<8x128xf32>
    %334 = tpu.matmul %333, %178, %cst_113 {dimension_numbers = #tpu.dot_dimension_numbers<[1], [0], [0], [1], [0, 0, 1, 1], [], []>} : vector<8x32xbf16>, vector<32x128xbf16>, vector<8x128xf32> -> vector<8x128xf32>
    %335 = arith.addf %334, %181 : vector<8x128xf32>
    %c56_114 = arith.constant 56 : index
    %c0_115 = arith.constant 0 : index
    %336 = vector.load %arg13[%c56_114, %c0_115] : memref<64x128xf32, #tpu.memory_space<vmem>>, vector<8x128xf32>
    tpu.vector_store %arg13[%c56_114, %c0_115], %335 {strides = array<i32>} : memref<64x128xf32, #tpu.memory_space<vmem>>, vector<8x128xf32>,
    %c0_116 = arith.constant 0 : index
    %c0_117 = arith.constant 0 : index
    %337 = vector.load %arg8[%c0_116, %c0_117] : memref<32x128xbf16, #tpu.memory_space<vmem>>, vector<32x128xbf16>
    %cst_118 = arith.constant 0.000000e+00 : f32
    %338 = vector.broadcast %cst_118 : f32 to vector<8x32xf32>
    %339 = arith.truncf %338 : vector<8x32xf32> to vector<8x32xbf16>
    %cst_119 = arith.constant 0.000000e+00 : f32
    %340 = vector.broadcast %cst_119 : f32 to vector<8x32xf32>
    %c0_120 = arith.constant 0 : index
    %c0_121 = arith.constant 0 : index
    %341 = vector.load %arg13[%c0_120, %c0_121] : memref<64x128xf32, #tpu.memory_space<vmem>>, vector<8x128xf32>
    %cst_122 = arith.constant dense<0.000000e+00> : vector<8x128xf32>
    %342 = tpu.matmul %339, %337, %cst_122 {dimension_numbers = #tpu.dot_dimension_numbers<[1], [0], [0], [1], [0, 0, 1, 1], [], []>} : vector<8x32xbf16>, vector<32x128xbf16>, vector<8x128xf32> -> vector<8x128xf32>
    %343 = arith.addf %341, %342 : vector<8x128xf32>
    %344 = math.tanh %343 : vector<8x128xf32>
    %345 = arith.mulf %344, %5 : vector<8x128xf32>
    %346 = arith.addf %345, %8 : vector<8x128xf32>
    %347 = vector.extract_strided_slice %346 {offsets = [0, 0], sizes = [8, 32], strides = [1, 1]} : vector<8x128xf32> to vector<8x32xf32>
    %348 = vector.extract_strided_slice %346 {offsets = [0, 32], sizes = [8, 32], strides = [1, 1]} : vector<8x128xf32> to vector<8x32xf32>
    %349 = vector.extract_strided_slice %346 {offsets = [0, 64], sizes = [8, 32], strides = [1, 1]} : vector<8x128xf32> to vector<8x32xf32>
    %350 = vector.extract_strided_slice %346 {offsets = [0, 96], sizes = [8, 32], strides = [1, 1]} : vector<8x128xf32> to vector<8x32xf32>
    %351 = arith.mulf %348, %340 : vector<8x32xf32>
    %352 = arith.mulf %347, %350 : vector<8x32xf32>
    %353 = arith.addf %351, %352 : vector<8x32xf32>
    %354 = math.tanh %353 : vector<8x32xf32>
    %355 = arith.mulf %349, %354 : vector<8x32xf32>
    %356 = arith.truncf %355 : vector<8x32xf32> to vector<8x32xbf16>
    %c8_123 = arith.constant 8 : index
    %c0_124 = arith.constant 0 : index
    %357 = vector.load %arg13[%c8_123, %c0_124] : memref<64x128xf32, #tpu.memory_space<vmem>>, vector<8x128xf32>
    %cst_125 = arith.constant dense<0.000000e+00> : vector<8x128xf32>
    %358 = tpu.matmul %356, %337, %cst_125 {dimension_numbers = #tpu.dot_dimension_numbers<[1], [0], [0], [1], [0, 0, 1, 1], [], []>} : vector<8x32xbf16>, vector<32x128xbf16>, vector<8x128xf32> -> vector<8x128xf32>
    %359 = arith.addf %357, %358 : vector<8x128xf32>
    %360 = math.tanh %359 : vector<8x128xf32>
    %361 = arith.mulf %360, %5 : vector<8x128xf32>
    %362 = arith.addf %361, %8 : vector<8x128xf32>
    %363 = vector.extract_strided_slice %362 {offsets = [0, 0], sizes = [8, 32], strides = [1, 1]} : vector<8x128xf32> to vector<8x32xf32>
    %364 = vector.extract_strided_slice %362 {offsets = [0, 32], sizes = [8, 32], strides = [1, 1]} : vector<8x128xf32> to vector<8x32xf32>
    %365 = vector.extract_strided_slice %362 {offsets = [0, 64], sizes = [8, 32], strides = [1, 1]} : vector<8x128xf32> to vector<8x32xf32>
    %366 = vector.extract_strided_slice %362 {offsets = [0, 96], sizes = [8, 32], strides = [1, 1]} : vector<8x128xf32> to vector<8x32xf32>
    %367 = arith.mulf %364, %353 : vector<8x32xf32>
    %368 = arith.mulf %363, %366 : vector<8x32xf32>
    %369 = arith.addf %367, %368 : vector<8x32xf32>
    %370 = math.tanh %369 : vector<8x32xf32>
    %371 = arith.mulf %365, %370 : vector<8x32xf32>
    %372 = arith.truncf %371 : vector<8x32xf32> to vector<8x32xbf16>
    %c16_126 = arith.constant 16 : index
    %c0_127 = arith.constant 0 : index
    %373 = vector.load %arg13[%c16_126, %c0_127] : memref<64x128xf32, #tpu.memory_space<vmem>>, vector<8x128xf32>
    %cst_128 = arith.constant dense<0.000000e+00> : vector<8x128xf32>
    %374 = tpu.matmul %372, %337, %cst_128 {dimension_numbers = #tpu.dot_dimension_numbers<[1], [0], [0], [1], [0, 0, 1, 1], [], []>} : vector<8x32xbf16>, vector<32x128xbf16>, vector<8x128xf32> -> vector<8x128xf32>
    %375 = arith.addf %373, %374 : vector<8x128xf32>
    %376 = math.tanh %375 : vector<8x128xf32>
    %377 = arith.mulf %376, %5 : vector<8x128xf32>
    %378 = arith.addf %377, %8 : vector<8x128xf32>
    %379 = vector.extract_strided_slice %378 {offsets = [0, 0], sizes = [8, 32], strides = [1, 1]} : vector<8x128xf32> to vector<8x32xf32>
    %380 = vector.extract_strided_slice %378 {offsets = [0, 32], sizes = [8, 32], strides = [1, 1]} : vector<8x128xf32> to vector<8x32xf32>
    %381 = vector.extract_strided_slice %378 {offsets = [0, 64], sizes = [8, 32], strides = [1, 1]} : vector<8x128xf32> to vector<8x32xf32>
    %382 = vector.extract_strided_slice %378 {offsets = [0, 96], sizes = [8, 32], strides = [1, 1]} : vector<8x128xf32> to vector<8x32xf32>
    %383 = arith.mulf %380, %369 : vector<8x32xf32>
    %384 = arith.mulf %379, %382 : vector<8x32xf32>
    %385 = arith.addf %383, %384 : vector<8x32xf32>
    %386 = math.tanh %385 : vector<8x32xf32>
    %387 = arith.mulf %381, %386 : vector<8x32xf32>
    %388 = arith.truncf %387 : vector<8x32xf32> to vector<8x32xbf16>
    %c24_129 = arith.constant 24 : index
    %c0_130 = arith.constant 0 : index
    %389 = vector.load %arg13[%c24_129, %c0_130] : memref<64x128xf32, #tpu.memory_space<vmem>>, vector<8x128xf32>
    %cst_131 = arith.constant dense<0.000000e+00> : vector<8x128xf32>
    %390 = tpu.matmul %388, %337, %cst_131 {dimension_numbers = #tpu.dot_dimension_numbers<[1], [0], [0], [1], [0, 0, 1, 1], [], []>} : vector<8x32xbf16>, vector<32x128xbf16>, vector<8x128xf32> -> vector<8x128xf32>
    %391 = arith.addf %389, %390 : vector<8x128xf32>
    %392 = math.tanh %391 : vector<8x128xf32>
    %393 = arith.mulf %392, %5 : vector<8x128xf32>
    %394 = arith.addf %393, %8 : vector<8x128xf32>
    %395 = vector.extract_strided_slice %394 {offsets = [0, 0], sizes = [8, 32], strides = [1, 1]} : vector<8x128xf32> to vector<8x32xf32>
    %396 = vector.extract_strided_slice %394 {offsets = [0, 32], sizes = [8, 32], strides = [1, 1]} : vector<8x128xf32> to vector<8x32xf32>
    %397 = vector.extract_strided_slice %394 {offsets = [0, 64], sizes = [8, 32], strides = [1, 1]} : vector<8x128xf32> to vector<8x32xf32>
    %398 = vector.extract_strided_slice %394 {offsets = [0, 96], sizes = [8, 32], strides = [1, 1]} : vector<8x128xf32> to vector<8x32xf32>
    %399 = arith.mulf %396, %385 : vector<8x32xf32>
    %400 = arith.mulf %395, %398 : vector<8x32xf32>
    %401 = arith.addf %399, %400 : vector<8x32xf32>
    %402 = math.tanh %401 : vector<8x32xf32>
    %403 = arith.mulf %397, %402 : vector<8x32xf32>
    %404 = arith.truncf %403 : vector<8x32xf32> to vector<8x32xbf16>
    %c32_132 = arith.constant 32 : index
    %c0_133 = arith.constant 0 : index
    %405 = vector.load %arg13[%c32_132, %c0_133] : memref<64x128xf32, #tpu.memory_space<vmem>>, vector<8x128xf32>
    %cst_134 = arith.constant dense<0.000000e+00> : vector<8x128xf32>
    %406 = tpu.matmul %404, %337, %cst_134 {dimension_numbers = #tpu.dot_dimension_numbers<[1], [0], [0], [1], [0, 0, 1, 1], [], []>} : vector<8x32xbf16>, vector<32x128xbf16>, vector<8x128xf32> -> vector<8x128xf32>
    %407 = arith.addf %405, %406 : vector<8x128xf32>
    %408 = math.tanh %407 : vector<8x128xf32>
    %409 = arith.mulf %408, %5 : vector<8x128xf32>
    %410 = arith.addf %409, %8 : vector<8x128xf32>
    %411 = vector.extract_strided_slice %410 {offsets = [0, 0], sizes = [8, 32], strides = [1, 1]} : vector<8x128xf32> to vector<8x32xf32>
    %412 = vector.extract_strided_slice %410 {offsets = [0, 32], sizes = [8, 32], strides = [1, 1]} : vector<8x128xf32> to vector<8x32xf32>
    %413 = vector.extract_strided_slice %410 {offsets = [0, 64], sizes = [8, 32], strides = [1, 1]} : vector<8x128xf32> to vector<8x32xf32>
    %414 = vector.extract_strided_slice %410 {offsets = [0, 96], sizes = [8, 32], strides = [1, 1]} : vector<8x128xf32> to vector<8x32xf32>
    %415 = arith.mulf %412, %401 : vector<8x32xf32>
    %416 = arith.mulf %411, %414 : vector<8x32xf32>
    %417 = arith.addf %415, %416 : vector<8x32xf32>
    %418 = math.tanh %417 : vector<8x32xf32>
    %419 = arith.mulf %413, %418 : vector<8x32xf32>
    %420 = arith.truncf %419 : vector<8x32xf32> to vector<8x32xbf16>
    %c40_135 = arith.constant 40 : index
    %c0_136 = arith.constant 0 : index
    %421 = vector.load %arg13[%c40_135, %c0_136] : memref<64x128xf32, #tpu.memory_space<vmem>>, vector<8x128xf32>
    %cst_137 = arith.constant dense<0.000000e+00> : vector<8x128xf32>
    %422 = tpu.matmul %420, %337, %cst_137 {dimension_numbers = #tpu.dot_dimension_numbers<[1], [0], [0], [1], [0, 0, 1, 1], [], []>} : vector<8x32xbf16>, vector<32x128xbf16>, vector<8x128xf32> -> vector<8x128xf32>
    %423 = arith.addf %421, %422 : vector<8x128xf32>
    %424 = math.tanh %423 : vector<8x128xf32>
    %425 = arith.mulf %424, %5 : vector<8x128xf32>
    %426 = arith.addf %425, %8 : vector<8x128xf32>
    %427 = vector.extract_strided_slice %426 {offsets = [0, 0], sizes = [8, 32], strides = [1, 1]} : vector<8x128xf32> to vector<8x32xf32>
    %428 = vector.extract_strided_slice %426 {offsets = [0, 32], sizes = [8, 32], strides = [1, 1]} : vector<8x128xf32> to vector<8x32xf32>
    %429 = vector.extract_strided_slice %426 {offsets = [0, 64], sizes = [8, 32], strides = [1, 1]} : vector<8x128xf32> to vector<8x32xf32>
    %430 = vector.extract_strided_slice %426 {offsets = [0, 96], sizes = [8, 32], strides = [1, 1]} : vector<8x128xf32> to vector<8x32xf32>
    %431 = arith.mulf %428, %417 : vector<8x32xf32>
    %432 = arith.mulf %427, %430 : vector<8x32xf32>
    %433 = arith.addf %431, %432 : vector<8x32xf32>
    %434 = math.tanh %433 : vector<8x32xf32>
    %435 = arith.mulf %429, %434 : vector<8x32xf32>
    %436 = arith.truncf %435 : vector<8x32xf32> to vector<8x32xbf16>
    %c48_138 = arith.constant 48 : index
    %c0_139 = arith.constant 0 : index
    %437 = vector.load %arg13[%c48_138, %c0_139] : memref<64x128xf32, #tpu.memory_space<vmem>>, vector<8x128xf32>
    %cst_140 = arith.constant dense<0.000000e+00> : vector<8x128xf32>
    %438 = tpu.matmul %436, %337, %cst_140 {dimension_numbers = #tpu.dot_dimension_numbers<[1], [0], [0], [1], [0, 0, 1, 1], [], []>} : vector<8x32xbf16>, vector<32x128xbf16>, vector<8x128xf32> -> vector<8x128xf32>
    %439 = arith.addf %437, %438 : vector<8x128xf32>
    %440 = math.tanh %439 : vector<8x128xf32>
    %441 = arith.mulf %440, %5 : vector<8x128xf32>
    %442 = arith.addf %441, %8 : vector<8x128xf32>
    %443 = vector.extract_strided_slice %442 {offsets = [0, 0], sizes = [8, 32], strides = [1, 1]} : vector<8x128xf32> to vector<8x32xf32>
    %444 = vector.extract_strided_slice %442 {offsets = [0, 32], sizes = [8, 32], strides = [1, 1]} : vector<8x128xf32> to vector<8x32xf32>
    %445 = vector.extract_strided_slice %442 {offsets = [0, 64], sizes = [8, 32], strides = [1, 1]} : vector<8x128xf32> to vector<8x32xf32>
    %446 = vector.extract_strided_slice %442 {offsets = [0, 96], sizes = [8, 32], strides = [1, 1]} : vector<8x128xf32> to vector<8x32xf32>
    %447 = arith.mulf %444, %433 : vector<8x32xf32>
    %448 = arith.mulf %443, %446 : vector<8x32xf32>
    %449 = arith.addf %447, %448 : vector<8x32xf32>
    %450 = math.tanh %449 : vector<8x32xf32>
    %451 = arith.mulf %445, %450 : vector<8x32xf32>
    %452 = arith.truncf %451 : vector<8x32xf32> to vector<8x32xbf16>
    %c56_141 = arith.constant 56 : index
    %c0_142 = arith.constant 0 : index
    %453 = vector.load %arg13[%c56_141, %c0_142] : memref<64x128xf32, #tpu.memory_space<vmem>>, vector<8x128xf32>
    %cst_143 = arith.constant dense<0.000000e+00> : vector<8x128xf32>
    %454 = tpu.matmul %452, %337, %cst_143 {dimension_numbers = #tpu.dot_dimension_numbers<[1], [0], [0], [1], [0, 0, 1, 1], [], []>} : vector<8x32xbf16>, vector<32x128xbf16>, vector<8x128xf32> -> vector<8x128xf32>
    %455 = arith.addf %453, %454 : vector<8x128xf32>
    %456 = math.tanh %455 : vector<8x128xf32>
    %457 = arith.mulf %456, %5 : vector<8x128xf32>
    %458 = arith.addf %457, %8 : vector<8x128xf32>
    %459 = vector.extract_strided_slice %458 {offsets = [0, 0], sizes = [8, 32], strides = [1, 1]} : vector<8x128xf32> to vector<8x32xf32>
    %460 = vector.extract_strided_slice %458 {offsets = [0, 32], sizes = [8, 32], strides = [1, 1]} : vector<8x128xf32> to vector<8x32xf32>
    %461 = vector.extract_strided_slice %458 {offsets = [0, 64], sizes = [8, 32], strides = [1, 1]} : vector<8x128xf32> to vector<8x32xf32>
    %462 = vector.extract_strided_slice %458 {offsets = [0, 96], sizes = [8, 32], strides = [1, 1]} : vector<8x128xf32> to vector<8x32xf32>
    %463 = arith.mulf %460, %449 : vector<8x32xf32>
    %464 = arith.mulf %459, %462 : vector<8x32xf32>
    %465 = arith.addf %463, %464 : vector<8x32xf32>
    %466 = math.tanh %465 : vector<8x32xf32>
    %467 = arith.mulf %461, %466 : vector<8x32xf32>
    %c0_144 = arith.constant 0 : index
    %c0_145 = arith.constant 0 : index
    %468 = vector.load %arg10[%c0_144, %c0_145] : memref<32x2xf32, #tpu.memory_space<vmem>>, vector<32x2xf32>
    %cst_146 = arith.constant dense<0.000000e+00> : vector<8x2xf32>
    %469 = tpu.matmul %467, %468, %cst_146 {dimension_numbers = #tpu.dot_dimension_numbers<[1], [0], [0], [1], [0, 0, 1, 1], [], []>} : vector<8x32xf32>, vector<32x2xf32>, vector<8x2xf32> -> vector<8x2xf32>
    %c0_147 = arith.constant 0 : index
    %c0_148 = arith.constant 0 : index
    %470 = vector.load %arg11[%c0_147, %c0_148] : memref<1x2xf32, #tpu.memory_space<vmem>>, vector<1x2xf32>
    %471 = vector.broadcast %470 : vector<1x2xf32> to vector<8x2xf32>
    %472 = arith.addf %469, %471 : vector<8x2xf32>
    %cst_149 = arith.constant dense<0xFF800000> : vector<8xf32>
    %473 = vector.multi_reduction <maximumf>, %472, %cst_149 [1] : vector<8x2xf32> to vector<8xf32>
    %474 = vector.shape_cast %473 : vector<8xf32> to vector<8x1xf32>
    %475 = vector.broadcast %474 : vector<8x1xf32> to vector<8x2xf32>
    %476 = arith.subf %472, %475 : vector<8x2xf32>
    %477 = math.exp %476 : vector<8x2xf32>
    %cst_150 = arith.constant dense<0.000000e+00> : vector<8xf32>
    %478 = vector.multi_reduction <add>, %477, %cst_150 [1] : vector<8x2xf32> to vector<8xf32>
    %479 = vector.shape_cast %478 : vector<8xf32> to vector<8x1xf32>
    %480 = math.log %479 : vector<8x1xf32>
    %481 = vector.broadcast %480 : vector<8x1xf32> to vector<8x2xf32>
    %482 = arith.subf %476, %481 : vector<8x2xf32>
    %c0_151 = arith.constant 0 : index
    %c0_152 = arith.constant 0 : index
    %483 = vector.load %arg12[%c0_151, %c0_152] : memref<8x2xf32, #tpu.memory_space<vmem>>, vector<8x2xf32>
    tpu.vector_store %arg12[%c0_151, %c0_152], %482 {strides = array<i32>} : memref<8x2xf32, #tpu.memory_space<vmem>>, vector<8x2xf32>,
    return
  }
}

</mosaic_0001>

<llo_original>
// kernel: lstm_forward.1
$region0: #{lstm_forward.1}
  #allocation0 [shape = 'u32[]', space=smem, size = 0x4, offset = 0x4, fixed_abs, tag = 'smem constant byte address 0x4 - core index']
  #allocation1 [shape = 'u32[144,128]{1,0:T(1,128)}', space=vmem, size = 0x12000, scoped, tag = 'internal scratch']
  #allocation2 [shape = 'f32[64,128]{1,0:T(8,128)}', space=vmem, size = 0x8000, scoped, tag = 'scratch operand']
  #allocation3 [shape = 'f32[64,128]{1,0:T(8,128)}', space=vmem, size = 0x8000, scoped, tag = 'scratch operand']
  %s0 = inlined_call_operand.vmem [shape: f32[64,16], index: 0, kind: input, shape index: {}]
  %s1 = inlined_call_operand.vmem [shape: bf16[16,128], index: 1, kind: input, shape index: {}]
  %s2 = inlined_call_operand.vmem [shape: bf16[32,128], index: 2, kind: input, shape index: {}]
  %s3 = inlined_call_operand.vmem [shape: f32[1,128], index: 3, kind: input, shape index: {}]
  %s4 = inlined_call_operand.vmem [shape: bf16[32,128], index: 4, kind: input, shape index: {}]
  %s5 = inlined_call_operand.vmem [shape: bf16[32,128], index: 5, kind: input, shape index: {}]
  %s6 = inlined_call_operand.vmem [shape: f32[1,128], index: 6, kind: input, shape index: {}]
  %s7 = inlined_call_operand.vmem [shape: bf16[32,128], index: 7, kind: input, shape index: {}]
  %s8 = inlined_call_operand.vmem [shape: bf16[32,128], index: 8, kind: input, shape index: {}]
  %s9 = inlined_call_operand.vmem [shape: f32[1,128], index: 9, kind: input, shape index: {}]
  %s10 = inlined_call_operand.vmem [shape: f32[32,2], index: 10, kind: input, shape index: {}]
  %s11 = inlined_call_operand.vmem [shape: f32[1,2], index: 11, kind: input, shape index: {}]
  %s12 = inlined_call_operand.vmem [shape: f32[8,2], index: 12, kind: output, shape index: {}]
  %s13 = sld [smem:[#allocation0]]
  $region58: #{lstm_forward.1} parent=0
    _
  %s15 = ssub.s32 1, %s13
  %s16 = scalar_select 0, %s15, %s13
  // Predicated region
  $region2: #{lstm_forward.1} parent=0 // pred_check
    _
  $region3: #{lstm_forward.1} parent=0 // pred_check_branch
    %18 = sbr.rel (0) target = $region5
  $region4: #{lstm_forward.1} parent=0 // pred_region
    _
  $region5: #{lstm_forward.1} parent=0 // pred_fallthru
    _
  // Predicated region
  $region6: #{lstm_forward.1} parent=0 // pred_check
    _
  $region7: #{lstm_forward.1} parent=0 // pred_check_branch
    %20 = sbr.rel (0) target = $region9
  $region8: #{lstm_forward.1} parent=0 // pred_region
    _
  $region9: #{lstm_forward.1} parent=0 // pred_fallthru
    _
  // Predicated region
  $region10: #{lstm_forward.1} parent=0 // pred_check
    _
  $region11: #{lstm_forward.1} parent=0 // pred_check_branch
    %22 = sbr.rel (0) target = $region13
  $region12: #{lstm_forward.1} parent=0 // pred_region
    _
  $region13: #{lstm_forward.1} parent=0 // pred_fallthru
    _
  // Predicated region
  $region14: #{lstm_forward.1} parent=0 // pred_check
    _
  $region15: #{lstm_forward.1} parent=0 // pred_check_branch
    %24 = sbr.rel (0) target = $region17
  $region16: #{lstm_forward.1} parent=0 // pred_region
    _
  $region17: #{lstm_forward.1} parent=0 // pred_fallthru
    _
  // Predicated region
  $region18: #{lstm_forward.1} parent=0 // pred_check
    _
  $region19: #{lstm_forward.1} parent=0 // pred_check_branch
    %26 = sbr.rel (0) target = $region21
  $region20: #{lstm_forward.1} parent=0 // pred_region
    _
  $region21: #{lstm_forward.1} parent=0 // pred_fallthru
    _
  // Predicated region
  $region22: #{lstm_forward.1} parent=0 // pred_check
    _
  $region23: #{lstm_forward.1} parent=0 // pred_check_branch
    %28 = sbr.rel (0) target = $region25
  $region24: #{lstm_forward.1} parent=0 // pred_region
    _
  $region25: #{lstm_forward.1} parent=0 // pred_fallthru
    _
  // Predicated region
  $region26: #{lstm_forward.1} parent=0 // pred_check
    _
  $region27: #{lstm_forward.1} parent=0 // pred_check_branch
    %30 = sbr.rel (0) target = $region29
  $region28: #{lstm_forward.1} parent=0 // pred_region
    _
  $region29: #{lstm_forward.1} parent=0 // pred_fallthru
    _
  // Predicated region
  $region30: #{lstm_forward.1} parent=0 // pred_check
    _
  $region31: #{lstm_forward.1} parent=0 // pred_check_branch
    %32 = sbr.rel (0) target = $region33
  $region32: #{lstm_forward.1} parent=0 // pred_region
    _
  $region33: #{lstm_forward.1} parent=0 // pred_fallthru
    _
  // Predicated region
  $region34: #{lstm_forward.1} parent=0 // pred_check
    _
  $region35: #{lstm_forward.1} parent=0 // pred_check_branch
    %34 = sbr.rel (0) target = $region37
  $region36: #{lstm_forward.1} parent=0 // pred_region
    _
  $region37: #{lstm_forward.1} parent=0 // pred_fallthru
    _
  // Predicated region
  $region38: #{lstm_forward.1} parent=0 // pred_check
    _
  $region39: #{lstm_forward.1} parent=0 // pred_check_branch
    %36 = sbr.rel (0) target = $region41
  $region40: #{lstm_forward.1} parent=0 // pred_region
    _
  $region41: #{lstm_forward.1} parent=0 // pred_fallthru
    _
  // Predicated region
  $region42: #{lstm_forward.1} parent=0 // pred_check
    _
  $region43: #{lstm_forward.1} parent=0 // pred_check_branch
    %38 = sbr.rel (0) target = $region45
  $region44: #{lstm_forward.1} parent=0 // pred_region
    _
  $region45: #{lstm_forward.1} parent=0 // pred_fallthru
    _
  // Predicated region
  $region46: #{lstm_forward.1} parent=0 // pred_check
    _
  $region47: #{lstm_forward.1} parent=0 // pred_check_branch
    %40 = sbr.rel (0) target = $region49
  $region48: #{lstm_forward.1} parent=0 // pred_region
    _
  $region49: #{lstm_forward.1} parent=0 // pred_fallthru
    _
  %v42 = vlaneseq
  %v43 = vand.u32 %v42, 127
  %vm44 = vcmp.lt.s32.totalorder %v43, 96
  %v45 = vsel %vm44, 0.5, 1.0
  %v46 = vsel %vm44, 0.5, 0.0
  %v47 = vld [vmem:[%s0] sm:$0xff]
  %v48 = vld [vmem:[%s0 + $0x8] sm:$0xff]
  %v49 = vld [vmem:[%s0 + $0x10] sm:$0xff]
  %v50 = vld [vmem:[%s0 + $0x18] sm:$0xff]
  %v51 = vld [vmem:[%s0 + $0x20] sm:$0xff]
  %v52 = vld [vmem:[%s0 + $0x28] sm:$0xff]
  %v53 = vld [vmem:[%s0 + $0x30] sm:$0xff]
  %v54 = vld [vmem:[%s0 + $0x38] sm:$0xff]
  %v55 = vpack.c.bf16 %v48, %v47
  %v56 = vpack.c.bf16 %v50, %v49
  %v57 = vpack.c.bf16 %v52, %v51
  %v58 = vpack.c.bf16 %v54, %v53
  %v59 = vld [vmem:[%s1] sm:$0xf]
  %v60 = vld [vmem:[%s1 + $0x4] sm:$0xf]
  %v61 = vld [vmem:[%s3] sm:$0x1]
  %v63 = vlaneseq
  %v64 = vshrl.u32 %v63, 7
  %v65 = vsub.s32 0, %v64
  %v66 = vrot.slane %v61, %v65
  %v70 = vunpack.c.l.b16 %v59
  %v71 = vunpack.c.l.b16 %v60
  %v72 = vpack.c.b16 %v71, %v70
  %vm74 = vcmask 130048
  %v76 = vsel %vm74, %v55, 0
  %v79 = vsel %vm74, %v56, 0
  %v82 = vsel %vm74, %v57, 0
  %v85 = vsel %vm74, %v58, 0
  %87 = vmatprep.subr.bf16.mxu0 0
  %88 = vmatpush1.bf16.msra.mxu0 0
  %89 = vmatprep.subr.bf16.mxu0 0
  %90 = vmatpush1.bf16.msra.mxu0 0
  %91 = vmatprep.subr.bf16.mxu0 0
  %92 = vmatpush1.bf16.msra.mxu0 0
  %93 = vmatprep.subr.bf16.mxu0 0
  %94 = vmatpush1.bf16.msra.mxu0 0
  %95 = vmatprep.subr.bf16.mxu0 0
  %96 = vmatpush1.bf16.msra.mxu0 0
  %97 = vmatprep.subr.bf16.mxu0 0
  %98 = vmatpush1.bf16.msra.mxu0 0
  %99 = vmatprep.subr.bf16.mxu0 0
  %100 = vmatpush1.bf16.msra.mxu0 0
  %101 = vmatprep.subr.bf16.mxu0 0
  %102 = vmatpush1.bf16.msra.mxu0 %v72
  %103 = vmatprep.subr.bf16.mxu0 0
  %104 = vmatpush2.bf16.msra.mxu0 0
  %105 = vmatprep.subr.bf16.mxu0 0
  %106 = vmatpush2.bf16.msra.mxu0 0
  %107 = vmatprep.subr.bf16.mxu0 0
  %108 = vmatpush2.bf16.msra.mxu0 0
  %109 = vmatprep.subr.bf16.mxu0 0
  %110 = vmatpush2.bf16.msra.mxu0 0
  %111 = vmatprep.subr.bf16.mxu0 0
  %112 = vmatpush2.bf16.msra.mxu0 0
  %113 = vmatprep.subr.bf16.mxu0 0
  %114 = vmatpush2.bf16.msra.mxu0 0
  %115 = vmatprep.subr.bf16.mxu0 0
  %116 = vmatpush2.bf16.msra.mxu0 0
  %117 = vmatprep.subr.bf16.mxu0 0
  %118 = vmatpush2.bf16.msra.mxu0 0
  %119 = vmatprep.mubr.bf16.mxu0 0
  %120 = vmatmul.mubr.bf16.gmra.mxu0 %v76
  %v121 = vpop.f32.mrf.mxu0
  %v122 = vadd.f32 %v66, %v121
  %v123 = vpop.f32.mrf.mxu0
  %v124 = vpop.f32.mrf.mxu0
  %v125 = vadd.f32 %v66, %v124
  %v126 = vpop.f32.mrf.mxu0
  %127 = vmatprep.mubr.bf16.mxu0 0
  %128 = vmatmul.mubr.bf16.gmra.mxu0 %v79
  %v129 = vpop.f32.mrf.mxu0
  %v130 = vadd.f32 %v66, %v129
  %v131 = vpop.f32.mrf.mxu0
  %v132 = vpop.f32.mrf.mxu0
  %v133 = vadd.f32 %v66, %v132
  %v134 = vpop.f32.mrf.mxu0
  %135 = vmatprep.mubr.bf16.mxu0 0
  %136 = vmatmul.mubr.bf16.gmra.mxu0 %v82
  %v137 = vpop.f32.mrf.mxu0
  %v138 = vadd.f32 %v66, %v137
  %v139 = vpop.f32.mrf.mxu0
  %v140 = vpop.f32.mrf.mxu0
  %v141 = vadd.f32 %v66, %v140
  %v142 = vpop.f32.mrf.mxu0
  %143 = vmatprep.mubr.bf16.mxu0 0
  %144 = vmatmul.mubr.bf16.gmra.mxu0 %v85
  %v145 = vpop.f32.mrf.mxu0
  %v146 = vadd.f32 %v66, %v145
  %v147 = vpop.f32.mrf.mxu0
  %v148 = vpop.f32.mrf.mxu0
  %v149 = vadd.f32 %v66, %v148
  %v150 = vpop.f32.mrf.mxu0
  %151 = vdwg.mxu0
  %152 = vst [vmem:[#allocation2] sm:$0xff] %v122
  %153 = vst [vmem:[#allocation2 + $0x8] sm:$0xff] %v125
  %154 = vst [vmem:[#allocation2 + $0x10] sm:$0xff] %v130
  %155 = vst [vmem:[#allocation2 + $0x18] sm:$0xff] %v133
  %156 = vst [vmem:[#allocation2 + $0x20] sm:$0xff] %v138
  %157 = vst [vmem:[#allocation2 + $0x28] sm:$0xff] %v141
  %158 = vst [vmem:[#allocation2 + $0x30] sm:$0xff] %v146
  %159 = vst [vmem:[#allocation2 + $0x38] sm:$0xff] %v149
  %v160 = vld [vmem:[%s2] sm:$0xf]
  %v161 = vld [vmem:[%s2 + $0x4] sm:$0xf]
  %v162 = vld [vmem:[%s2 + $0x8] sm:$0xf]
  %v163 = vld [vmem:[%s2 + $0xc] sm:$0xf]
  %v164 = vld [vmem:[%s4] sm:$0xf]
  %v165 = vld [vmem:[%s4 + $0x4] sm:$0xf]
  %v166 = vld [vmem:[%s4 + $0x8] sm:$0xf]
  %v167 = vld [vmem:[%s4 + $0xc] sm:$0xf]
  %v168 = vld [vmem:[%s6] sm:$0x1]
  %v170 = vlaneseq
  %v171 = vshrl.u32 %v170, 7
  %v172 = vsub.s32 0, %v171
  %v173 = vrot.slane %v168, %v172
  %v175 = vld [vmem:[#allocation2] sm:$0xff]
  %v180 = vunpack.c.l.b16 %v160
  %v181 = vunpack.c.l.b16 %v161
  %v182 = vunpack.c.l.b16 %v162
  %v183 = vunpack.c.l.b16 %v163
  %v184 = vpack.c.b16 %v181, %v180
  %v185 = vpack.c.b16 %v183, %v182
  %vm188 = vcmask 261120
  %v190 = vsel %vm188, 0, 0
  %192 = vmatprep.subr.bf16.mxu0 0
  %193 = vmatpush1.bf16.msra.mxu0 0
  %194 = vmatprep.subr.bf16.mxu0 0
  %195 = vmatpush1.bf16.msra.mxu0 0
  %196 = vmatprep.subr.bf16.mxu0 0
  %197 = vmatpush1.bf16.msra.mxu0 0
  %198 = vmatprep.subr.bf16.mxu0 0
  %199 = vmatpush1.bf16.msra.mxu0 0
  %200 = vmatprep.subr.bf16.mxu0 0
  %201 = vmatpush1.bf16.msra.mxu0 0
  %202 = vmatprep.subr.bf16.mxu0 0
  %203 = vmatpush1.bf16.msra.mxu0 0
  %204 = vmatprep.subr.bf16.mxu0 0
  %205 = vmatpush1.bf16.msra.mxu0 %v185
  %206 = vmatprep.subr.bf16.mxu0 0
  %207 = vmatpush1.bf16.msra.mxu0 %v184
  %208 = vmatprep.subr.bf16.mxu0 0
  %209 = vmatpush2.bf16.msra.mxu0 0
  %210 = vmatprep.subr.bf16.mxu0 0
  %211 = vmatpush2.bf16.msra.mxu0 0
  %212 = vmatprep.subr.bf16.mxu0 0
  %213 = vmatpush2.bf16.msra.mxu0 0
  %214 = vmatprep.subr.bf16.mxu0 0
  %215 = vmatpush2.bf16.msra.mxu0 0
  %216 = vmatprep.subr.bf16.mxu0 0
  %217 = vmatpush2.bf16.msra.mxu0 0
  %218 = vmatprep.subr.bf16.mxu0 0
  %219 = vmatpush2.bf16.msra.mxu0 0
  %220 = vmatprep.subr.bf16.mxu0 0
  %221 = vmatpush2.bf16.msra.mxu0 0
  %222 = vmatprep.subr.bf16.mxu0 0
  %223 = vmatpush2.bf16.msra.mxu0 0
  %224 = vmatprep.mubr.bf16.mxu0 0
  %225 = vmatmul.mubr.bf16.gmra.mxu0 %v190
  %v226 = vpop.f32.mrf.mxu0
  %v227 = vadd.f32 0.0, %v226
  %v228 = vpop.f32.mrf.mxu0
  %v229 = vpop.f32.mrf.mxu0
  %v230 = vpop.f32.mrf.mxu0
  %231 = vdwg.mxu0
  %v232 = vadd.f32 %v175, %v227
  %v233 = vtanh.pop %v232
  %v234 = vmul.f32 %v233, %v45
  %v235 = vadd.f32 %v234, %v46
  %v236 = vmul.f32 %v235, 0.0
  %238 = vrot.lane.b32.xlu0 %v235, 32
  %v239 = vpop.permute.xlu0 %238
  %v241 = vmul.f32 %v235, %v239
  %243 = vrot.lane.b32.xlu0 %v241, 32
  %v244 = vpop.permute.xlu0 %243
  %v246 = vadd.f32 %v236, %v244
  %v247 = vtanh.pop %v246
  %249 = vrot.lane.b32.xlu0 %v247, 32
  %v250 = vpop.permute.xlu0 %249
  %v252 = vmul.f32 %v235, %v250
  %v253 = vpack.c.bf16 %v252, %v252
  %255 = vrot.lane.b32.xlu0 %v253, 64
  %v256 = vpop.permute.xlu0 %255
  %v261 = vunpack.c.l.b16 %v164
  %v262 = vunpack.c.l.b16 %v165
  %v263 = vunpack.c.l.b16 %v166
  %v264 = vunpack.c.l.b16 %v167
  %v265 = vpack.c.b16 %v262, %v261
  %v266 = vpack.c.b16 %v264, %v263
  %v270 = vsel %vm188, %v256, 0
  %272 = vmatprep.subr.bf16.mxu0 0
  %273 = vmatpush1.bf16.msra.mxu0 0
  %274 = vmatprep.subr.bf16.mxu0 0
  %275 = vmatpush1.bf16.msra.mxu0 0
  %276 = vmatprep.subr.bf16.mxu0 0
  %277 = vmatpush1.bf16.msra.mxu0 0
  %278 = vmatprep.subr.bf16.mxu0 0
  %279 = vmatpush1.bf16.msra.mxu0 0
  %280 = vmatprep.subr.bf16.mxu0 0
  %281 = vmatpush1.bf16.msra.mxu0 0
  %282 = vmatprep.subr.bf16.mxu0 0
  %283 = vmatpush1.bf16.msra.mxu0 0
  %284 = vmatprep.subr.bf16.mxu0 0
  %285 = vmatpush1.bf16.msra.mxu0 %v266
  %286 = vmatprep.subr.bf16.mxu0 0
  %287 = vmatpush1.bf16.msra.mxu0 %v265
  %288 = vmatprep.subr.bf16.mxu0 0
  %289 = vmatpush2.bf16.msra.mxu0 0
  %290 = vmatprep.subr.bf16.mxu0 0
  %291 = vmatpush2.bf16.msra.mxu0 0
  %292 = vmatprep.subr.bf16.mxu0 0
  %293 = vmatpush2.bf16.msra.mxu0 0
  %294 = vmatprep.subr.bf16.mxu0 0
  %295 = vmatpush2.bf16.msra.mxu0 0
  %296 = vmatprep.subr.bf16.mxu0 0
  %297 = vmatpush2.bf16.msra.mxu0 0
  %298 = vmatprep.subr.bf16.mxu0 0
  %299 = vmatpush2.bf16.msra.mxu0 0
  %300 = vmatprep.subr.bf16.mxu0 0
  %301 = vmatpush2.bf16.msra.mxu0 0
  %302 = vmatprep.subr.bf16.mxu0 0
  %303 = vmatpush2.bf16.msra.mxu0 0
  %304 = vmatprep.mubr.bf16.mxu0 0
  %305 = vmatmul.mubr.bf16.gmra.mxu0 %v270
  %v306 = vpop.f32.mrf.mxu0
  %v307 = vadd.f32 %v173, %v306
  %v308 = vpop.f32.mrf.mxu0
  %v309 = vpop.f32.mrf.mxu0
  %v310 = vpop.f32.mrf.mxu0
  %311 = vdwg.mxu0
  %312 = vst [vmem:[#allocation3] sm:$0xff] %v307
  %v313 = vld [vmem:[#allocation2 + $0x8] sm:$0xff]
  %314 = vmatprep.subr.bf16.mxu0 0
  %315 = vmatpush1.bf16.msra.mxu0 0
  %316 = vmatprep.subr.bf16.mxu0 0
  %317 = vmatpush1.bf16.msra.mxu0 0
  %318 = vmatprep.subr.bf16.mxu0 0
  %319 = vmatpush1.bf16.msra.mxu0 0
  %320 = vmatprep.subr.bf16.mxu0 0
  %321 = vmatpush1.bf16.msra.mxu0 0
  %322 = vmatprep.subr.bf16.mxu0 0
  %323 = vmatpush1.bf16.msra.mxu0 0
  %324 = vmatprep.subr.bf16.mxu0 0
  %325 = vmatpush1.bf16.msra.mxu0 0
  %326 = vmatprep.subr.bf16.mxu0 0
  %327 = vmatpush1.bf16.msra.mxu0 %v185
  %328 = vmatprep.subr.bf16.mxu0 0
  %329 = vmatpush1.bf16.msra.mxu0 %v184
  %330 = vmatprep.subr.bf16.mxu0 0
  %331 = vmatpush2.bf16.msra.mxu0 0
  %332 = vmatprep.subr.bf16.mxu0 0
  %333 = vmatpush2.bf16.msra.mxu0 0
  %334 = vmatprep.subr.bf16.mxu0 0
  %335 = vmatpush2.bf16.msra.mxu0 0
  %336 = vmatprep.subr.bf16.mxu0 0
  %337 = vmatpush2.bf16.msra.mxu0 0
  %338 = vmatprep.subr.bf16.mxu0 0
  %339 = vmatpush2.bf16.msra.mxu0 0
  %340 = vmatprep.subr.bf16.mxu0 0
  %341 = vmatpush2.bf16.msra.mxu0 0
  %342 = vmatprep.subr.bf16.mxu0 0
  %343 = vmatpush2.bf16.msra.mxu0 0
  %344 = vmatprep.subr.bf16.mxu0 0
  %345 = vmatpush2.bf16.msra.mxu0 0
  %346 = vmatprep.mubr.bf16.mxu0 0
  %347 = vmatmul.mubr.bf16.gmra.mxu0 %v270
  %v348 = vpop.f32.mrf.mxu0
  %v349 = vadd.f32 0.0, %v348
  %v350 = vpop.f32.mrf.mxu0
  %v351 = vpop.f32.mrf.mxu0
  %v352 = vpop.f32.mrf.mxu0
  %353 = vdwg.mxu0
  %v354 = vadd.f32 %v313, %v349
  %v355 = vtanh.pop %v354
  %v356 = vmul.f32 %v355, %v45
  %v357 = vadd.f32 %v356, %v46
  %v358 = vmul.f32 %v357, %v246
  %360 = vrot.lane.b32.xlu0 %v357, 32
  %v361 = vpop.permute.xlu0 %360
  %v363 = vmul.f32 %v357, %v361
  %365 = vrot.lane.b32.xlu0 %v363, 32
  %v366 = vpop.permute.xlu0 %365
  %v368 = vadd.f32 %v358, %v366
  %v369 = vtanh.pop %v368
  %371 = vrot.lane.b32.xlu0 %v369, 32
  %v372 = vpop.permute.xlu0 %371
  %v374 = vmul.f32 %v357, %v372
  %v375 = vpack.c.bf16 %v374, %v374
  %377 = vrot.lane.b32.xlu0 %v375, 64
  %v378 = vpop.permute.xlu0 %377
  %v380 = vsel %vm188, %v378, 0
  %382 = vmatprep.subr.bf16.mxu0 0
  %383 = vmatpush1.bf16.msra.mxu0 0
  %384 = vmatprep.subr.bf16.mxu0 0
  %385 = vmatpush1.bf16.msra.mxu0 0
  %386 = vmatprep.subr.bf16.mxu0 0
  %387 = vmatpush1.bf16.msra.mxu0 0
  %388 = vmatprep.subr.bf16.mxu0 0
  %389 = vmatpush1.bf16.msra.mxu0 0
  %390 = vmatprep.subr.bf16.mxu0 0
  %391 = vmatpush1.bf16.msra.mxu0 0
  %392 = vmatprep.subr.bf16.mxu0 0
  %393 = vmatpush1.bf16.msra.mxu0 0
  %394 = vmatprep.subr.bf16.mxu0 0
  %395 = vmatpush1.bf16.msra.mxu0 %v266
  %396 = vmatprep.subr.bf16.mxu0 0
  %397 = vmatpush1.bf16.msra.mxu0 %v265
  %398 = vmatprep.subr.bf16.mxu0 0
  %399 = vmatpush2.bf16.msra.mxu0 0
  %400 = vmatprep.subr.bf16.mxu0 0
  %401 = vmatpush2.bf16.msra.mxu0 0
  %402 = vmatprep.subr.bf16.mxu0 0
  %403 = vmatpush2.bf16.msra.mxu0 0
  %404 = vmatprep.subr.bf16.mxu0 0
  %405 = vmatpush2.bf16.msra.mxu0 0
  %406 = vmatprep.subr.bf16.mxu0 0
  %407 = vmatpush2.bf16.msra.mxu0 0
  %408 = vmatprep.subr.bf16.mxu0 0
  %409 = vmatpush2.bf16.msra.mxu0 0
  %410 = vmatprep.subr.bf16.mxu0 0
  %411 = vmatpush2.bf16.msra.mxu0 0
  %412 = vmatprep.subr.bf16.mxu0 0
  %413 = vmatpush2.bf16.msra.mxu0 0
  %414 = vmatprep.mubr.bf16.mxu0 0
  %415 = vmatmul.mubr.bf16.gmra.mxu0 %v380
  %v416 = vpop.f32.mrf.mxu0
  %v417 = vadd.f32 %v173, %v416
  %v418 = vpop.f32.mrf.mxu0
  %v419 = vpop.f32.mrf.mxu0
  %v420 = vpop.f32.mrf.mxu0
  %421 = vdwg.mxu0
  %422 = vst [vmem:[#allocation3 + $0x8] sm:$0xff] %v417
  %v423 = vld [vmem:[#allocation2 + $0x10] sm:$0xff]
  %424 = vmatprep.subr.bf16.mxu0 0
  %425 = vmatpush1.bf16.msra.mxu0 0
  %426 = vmatprep.subr.bf16.mxu0 0
  %427 = vmatpush1.bf16.msra.mxu0 0
  %428 = vmatprep.subr.bf16.mxu0 0
  %429 = vmatpush1.bf16.msra.mxu0 0
  %430 = vmatprep.subr.bf16.mxu0 0
  %431 = vmatpush1.bf16.msra.mxu0 0
  %432 = vmatprep.subr.bf16.mxu0 0
  %433 = vmatpush1.bf16.msra.mxu0 0
  %434 = vmatprep.subr.bf16.mxu0 0
  %435 = vmatpush1.bf16.msra.mxu0 0
  %436 = vmatprep.subr.bf16.mxu0 0
  %437 = vmatpush1.bf16.msra.mxu0 %v185
  %438 = vmatprep.subr.bf16.mxu0 0
  %439 = vmatpush1.bf16.msra.mxu0 %v184
  %440 = vmatprep.subr.bf16.mxu0 0
  %441 = vmatpush2.bf16.msra.mxu0 0
  %442 = vmatprep.subr.bf16.mxu0 0
  %443 = vmatpush2.bf16.msra.mxu0 0
  %444 = vmatprep.subr.bf16.mxu0 0
  %445 = vmatpush2.bf16.msra.mxu0 0
  %446 = vmatprep.subr.bf16.mxu0 0
  %447 = vmatpush2.bf16.msra.mxu0 0
  %448 = vmatprep.subr.bf16.mxu0 0
  %449 = vmatpush2.bf16.msra.mxu0 0
  %450 = vmatprep.subr.bf16.mxu0 0
  %451 = vmatpush2.bf16.msra.mxu0 0
  %452 = vmatprep.subr.bf16.mxu0 0
  %453 = vmatpush2.bf16.msra.mxu0 0
  %454 = vmatprep.subr.bf16.mxu0 0
  %455 = vmatpush2.bf16.msra.mxu0 0
  %456 = vmatprep.mubr.bf16.mxu0 0
  %457 = vmatmul.mubr.bf16.gmra.mxu0 %v380
  %v458 = vpop.f32.mrf.mxu0
  %v459 = vadd.f32 0.0, %v458
  %v460 = vpop.f32.mrf.mxu0
  %v461 = vpop.f32.mrf.mxu0
  %v462 = vpop.f32.mrf.mxu0
  %463 = vdwg.mxu0
  %v464 = vadd.f32 %v423, %v459
  %v465 = vtanh.pop %v464
  %v466 = vmul.f32 %v465, %v45
  %v467 = vadd.f32 %v466, %v46
  %v468 = vmul.f32 %v467, %v368
  %470 = vrot.lane.b32.xlu0 %v467, 32
  %v471 = vpop.permute.xlu0 %470
  %v473 = vmul.f32 %v467, %v471
  %475 = vrot.lane.b32.xlu0 %v473, 32
  %v476 = vpop.permute.xlu0 %475
  %v478 = vadd.f32 %v468, %v476
  %v479 = vtanh.pop %v478
  %481 = vrot.lane.b32.xlu0 %v479, 32
  %v482 = vpop.permute.xlu0 %481
  %v484 = vmul.f32 %v467, %v482
  %v485 = vpack.c.bf16 %v484, %v484
  %487 = vrot.lane.b32.xlu0 %v485, 64
  %v488 = vpop.permute.xlu0 %487
  %v490 = vsel %vm188, %v488, 0
  %492 = vmatprep.subr.bf16.mxu0 0
  %493 = vmatpush1.bf16.msra.mxu0 0
  %494 = vmatprep.subr.bf16.mxu0 0
  %495 = vmatpush1.bf16.msra.mxu0 0
  %496 = vmatprep.subr.bf16.mxu0 0
  %497 = vmatpush1.bf16.msra.mxu0 0
  %498 = vmatprep.subr.bf16.mxu0 0
  %499 = vmatpush1.bf16.msra.mxu0 0
  %500 = vmatprep.subr.bf16.mxu0 0
  %501 = vmatpush1.bf16.msra.mxu0 0
  %502 = vmatprep.subr.bf16.mxu0 0
  %503 = vmatpush1.bf16.msra.mxu0 0
  %504 = vmatprep.subr.bf16.mxu0 0
  %505 = vmatpush1.bf16.msra.mxu0 %v266
  %506 = vmatprep.subr.bf16.mxu0 0
  %507 = vmatpush1.bf16.msra.mxu0 %v265
  %508 = vmatprep.subr.bf16.mxu0 0
  %509 = vmatpush2.bf16.msra.mxu0 0
  %510 = vmatprep.subr.bf16.mxu0 0
  %511 = vmatpush2.bf16.msra.mxu0 0
  %512 = vmatprep.subr.bf16.mxu0 0
  %513 = vmatpush2.bf16.msra.mxu0 0
  %514 = vmatprep.subr.bf16.mxu0 0
  %515 = vmatpush2.bf16.msra.mxu0 0
  %516 = vmatprep.subr.bf16.mxu0 0
  %517 = vmatpush2.bf16.msra.mxu0 0
  %518 = vmatprep.subr.bf16.mxu0 0
  %519 = vmatpush2.bf16.msra.mxu0 0
  %520 = vmatprep.subr.bf16.mxu0 0
  %521 = vmatpush2.bf16.msra.mxu0 0
  %522 = vmatprep.subr.bf16.mxu0 0
  %523 = vmatpush2.bf16.msra.mxu0 0
  %524 = vmatprep.mubr.bf16.mxu0 0
  %525 = vmatmul.mubr.bf16.gmra.mxu0 %v490
  %v526 = vpop.f32.mrf.mxu0
  %v527 = vadd.f32 %v173, %v526
  %v528 = vpop.f32.mrf.mxu0
  %v529 = vpop.f32.mrf.mxu0
  %v530 = vpop.f32.mrf.mxu0
  %531 = vdwg.mxu0
  %532 = vst [vmem:[#allocation3 + $0x10] sm:$0xff] %v527
  %v533 = vld [vmem:[#allocation2 + $0x18] sm:$0xff]
  %534 = vmatprep.subr.bf16.mxu0 0
  %535 = vmatpush1.bf16.msra.mxu0 0
  %536 = vmatprep.subr.bf16.mxu0 0
  %537 = vmatpush1.bf16.msra.mxu0 0
  %538 = vmatprep.subr.bf16.mxu0 0
  %539 = vmatpush1.bf16.msra.mxu0 0
  %540 = vmatprep.subr.bf16.mxu0 0
  %541 = vmatpush1.bf16.msra.mxu0 0
  %542 = vmatprep.subr.bf16.mxu0 0
  %543 = vmatpush1.bf16.msra.mxu0 0
  %544 = vmatprep.subr.bf16.mxu0 0
  %545 = vmatpush1.bf16.msra.mxu0 0
  %546 = vmatprep.subr.bf16.mxu0 0
  %547 = vmatpush1.bf16.msra.mxu0 %v185
  %548 = vmatprep.subr.bf16.mxu0 0
  %549 = vmatpush1.bf16.msra.mxu0 %v184
  %550 = vmatprep.subr.bf16.mxu0 0
  %551 = vmatpush2.bf16.msra.mxu0 0
  %552 = vmatprep.subr.bf16.mxu0 0
  %553 = vmatpush2.bf16.msra.mxu0 0
  %554 = vmatprep.subr.bf16.mxu0 0
  %555 = vmatpush2.bf16.msra.mxu0 0
  %556 = vmatprep.subr.bf16.mxu0 0
  %557 = vmatpush2.bf16.msra.mxu0 0
  %558 = vmatprep.subr.bf16.mxu0 0
  %559 = vmatpush2.bf16.msra.mxu0 0
  %560 = vmatprep.subr.bf16.mxu0 0
  %561 = vmatpush2.bf16.msra.mxu0 0
  %562 = vmatprep.subr.bf16.mxu0 0
  %563 = vmatpush2.bf16.msra.mxu0 0
  %564 = vmatprep.subr.bf16.mxu0 0
  %565 = vmatpush2.bf16.msra.mxu0 0
  %566 = vmatprep.mubr.bf16.mxu0 0
  %567 = vmatmul.mubr.bf16.gmra.mxu0 %v490
  %v568 = vpop.f32.mrf.mxu0
  %v569 = vadd.f32 0.0, %v568
  %v570 = vpop.f32.mrf.mxu0
  %v571 = vpop.f32.mrf.mxu0
  %v572 = vpop.f32.mrf.mxu0
  %573 = vdwg.mxu0
  %v574 = vadd.f32 %v533, %v569
  %v575 = vtanh.pop %v574
  %v576 = vmul.f32 %v575, %v45
  %v577 = vadd.f32 %v576, %v46
  %v578 = vmul.f32 %v577, %v478
  %580 = vrot.lane.b32.xlu0 %v577, 32
  %v581 = vpop.permute.xlu0 %580
  %v583 = vmul.f32 %v577, %v581
  %585 = vrot.lane.b32.xlu0 %v583, 32
  %v586 = vpop.permute.xlu0 %585
  %v588 = vadd.f32 %v578, %v586
  %v589 = vtanh.pop %v588
  %591 = vrot.lane.b32.xlu0 %v589, 32
  %v592 = vpop.permute.xlu0 %591
  %v594 = vmul.f32 %v577, %v592
  %v595 = vpack.c.bf16 %v594, %v594
  %597 = vrot.lane.b32.xlu0 %v595, 64
  %v598 = vpop.permute.xlu0 %597
  %v600 = vsel %vm188, %v598, 0
  %602 = vmatprep.subr.bf16.mxu0 0
  %603 = vmatpush1.bf16.msra.mxu0 0
  %604 = vmatprep.subr.bf16.mxu0 0
  %605 = vmatpush1.bf16.msra.mxu0 0
  %606 = vmatprep.subr.bf16.mxu0 0
  %607 = vmatpush1.bf16.msra.mxu0 0
  %608 = vmatprep.subr.bf16.mxu0 0
  %609 = vmatpush1.bf16.msra.mxu0 0
  %610 = vmatprep.subr.bf16.mxu0 0
  %611 = vmatpush1.bf16.msra.mxu0 0
  %612 = vmatprep.subr.bf16.mxu0 0
  %613 = vmatpush1.bf16.msra.mxu0 0
  %614 = vmatprep.subr.bf16.mxu0 0
  %615 = vmatpush1.bf16.msra.mxu0 %v266
  %616 = vmatprep.subr.bf16.mxu0 0
  %617 = vmatpush1.bf16.msra.mxu0 %v265
  %618 = vmatprep.subr.bf16.mxu0 0
  %619 = vmatpush2.bf16.msra.mxu0 0
  %620 = vmatprep.subr.bf16.mxu0 0
  %621 = vmatpush2.bf16.msra.mxu0 0
  %622 = vmatprep.subr.bf16.mxu0 0
  %623 = vmatpush2.bf16.msra.mxu0 0
  %624 = vmatprep.subr.bf16.mxu0 0
  %625 = vmatpush2.bf16.msra.mxu0 0
  %626 = vmatprep.subr.bf16.mxu0 0
  %627 = vmatpush2.bf16.msra.mxu0 0
  %628 = vmatprep.subr.bf16.mxu0 0
  %629 = vmatpush2.bf16.msra.mxu0 0
  %630 = vmatprep.subr.bf16.mxu0 0
  %631 = vmatpush2.bf16.msra.mxu0 0
  %632 = vmatprep.subr.bf16.mxu0 0
  %633 = vmatpush2.bf16.msra.mxu0 0
  %634 = vmatprep.mubr.bf16.mxu0 0
  %635 = vmatmul.mubr.bf16.gmra.mxu0 %v600
  %v636 = vpop.f32.mrf.mxu0
  %v637 = vadd.f32 %v173, %v636
  %v638 = vpop.f32.mrf.mxu0
  %v639 = vpop.f32.mrf.mxu0
  %v640 = vpop.f32.mrf.mxu0
  %641 = vdwg.mxu0
  %642 = vst [vmem:[#allocation3 + $0x18] sm:$0xff] %v637
  %v643 = vld [vmem:[#allocation2 + $0x20] sm:$0xff]
  %644 = vmatprep.subr.bf16.mxu0 0
  %645 = vmatpush1.bf16.msra.mxu0 0
  %646 = vmatprep.subr.bf16.mxu0 0
  %647 = vmatpush1.bf16.msra.mxu0 0
  %648 = vmatprep.subr.bf16.mxu0 0
  %649 = vmatpush1.bf16.msra.mxu0 0
  %650 = vmatprep.subr.bf16.mxu0 0
  %651 = vmatpush1.bf16.msra.mxu0 0
  %652 = vmatprep.subr.bf16.mxu0 0
  %653 = vmatpush1.bf16.msra.mxu0 0
  %654 = vmatprep.subr.bf16.mxu0 0
  %655 = vmatpush1.bf16.msra.mxu0 0
  %656 = vmatprep.subr.bf16.mxu0 0
  %657 = vmatpush1.bf16.msra.mxu0 %v185
  %658 = vmatprep.subr.bf16.mxu0 0
  %659 = vmatpush1.bf16.msra.mxu0 %v184
  %660 = vmatprep.subr.bf16.mxu0 0
  %661 = vmatpush2.bf16.msra.mxu0 0
  %662 = vmatprep.subr.bf16.mxu0 0
  %663 = vmatpush2.bf16.msra.mxu0 0
  %664 = vmatprep.subr.bf16.mxu0 0
  %665 = vmatpush2.bf16.msra.mxu0 0
  %666 = vmatprep.subr.bf16.mxu0 0
  %667 = vmatpush2.bf16.msra.mxu0 0
  %668 = vmatprep.subr.bf16.mxu0 0
  %669 = vmatpush2.bf16.msra.mxu0 0
  %670 = vmatprep.subr.bf16.mxu0 0
  %671 = vmatpush2.bf16.msra.mxu0 0
  %672 = vmatprep.subr.bf16.mxu0 0
  %673 = vmatpush2.bf16.msra.mxu0 0
  %674 = vmatprep.subr.bf16.mxu0 0
  %675 = vmatpush2.bf16.msra.mxu0 0
  %676 = vmatprep.mubr.bf16.mxu0 0
  %677 = vmatmul.mubr.bf16.gmra.mxu0 %v600
  %v678 = vpop.f32.mrf.mxu0
  %v679 = vadd.f32 0.0, %v678
  %v680 = vpop.f32.mrf.mxu0
  %v681 = vpop.f32.mrf.mxu0
  %v682 = vpop.f32.mrf.mxu0
  %683 = vdwg.mxu0
  %v684 = vadd.f32 %v643, %v679
  %v685 = vtanh.pop %v684
  %v686 = vmul.f32 %v685, %v45
  %v687 = vadd.f32 %v686, %v46
  %v688 = vmul.f32 %v687, %v588
  %690 = vrot.lane.b32.xlu0 %v687, 32
  %v691 = vpop.permute.xlu0 %690
  %v693 = vmul.f32 %v687, %v691
  %695 = vrot.lane.b32.xlu0 %v693, 32
  %v696 = vpop.permute.xlu0 %695
  %v698 = vadd.f32 %v688, %v696
  %v699 = vtanh.pop %v698
  %701 = vrot.lane.b32.xlu0 %v699, 32
  %v702 = vpop.permute.xlu0 %701
  %v704 = vmul.f32 %v687, %v702
  %v705 = vpack.c.bf16 %v704, %v704
  %707 = vrot.lane.b32.xlu0 %v705, 64
  %v708 = vpop.permute.xlu0 %707
  %v710 = vsel %vm188, %v708, 0
  %712 = vmatprep.subr.bf16.mxu0 0
  %713 = vmatpush1.bf16.msra.mxu0 0
  %714 = vmatprep.subr.bf16.mxu0 0
  %715 = vmatpush1.bf16.msra.mxu0 0
  %716 = vmatprep.subr.bf16.mxu0 0
  %717 = vmatpush1.bf16.msra.mxu0 0
  %718 = vmatprep.subr.bf16.mxu0 0
  %719 = vmatpush1.bf16.msra.mxu0 0
  %720 = vmatprep.subr.bf16.mxu0 0
  %721 = vmatpush1.bf16.msra.mxu0 0
  %722 = vmatprep.subr.bf16.mxu0 0
  %723 = vmatpush1.bf16.msra.mxu0 0
  %724 = vmatprep.subr.bf16.mxu0 0
  %725 = vmatpush1.bf16.msra.mxu0 %v266
  %726 = vmatprep.subr.bf16.mxu0 0
  %727 = vmatpush1.bf16.msra.mxu0 %v265
  %728 = vmatprep.subr.bf16.mxu0 0
  %729 = vmatpush2.bf16.msra.mxu0 0
  %730 = vmatprep.subr.bf16.mxu0 0
  %731 = vmatpush2.bf16.msra.mxu0 0
  %732 = vmatprep.subr.bf16.mxu0 0
  %733 = vmatpush2.bf16.msra.mxu0 0
  %734 = vmatprep.subr.bf16.mxu0 0
  %735 = vmatpush2.bf16.msra.mxu0 0
  %736 = vmatprep.subr.bf16.mxu0 0
  %737 = vmatpush2.bf16.msra.mxu0 0
  %738 = vmatprep.subr.bf16.mxu0 0
  %739 = vmatpush2.bf16.msra.mxu0 0
  %740 = vmatprep.subr.bf16.mxu0 0
  %741 = vmatpush2.bf16.msra.mxu0 0
  %742 = vmatprep.subr.bf16.mxu0 0
  %743 = vmatpush2.bf16.msra.mxu0 0
  %744 = vmatprep.mubr.bf16.mxu0 0
  %745 = vmatmul.mubr.bf16.gmra.mxu0 %v710
  %v746 = vpop.f32.mrf.mxu0
  %v747 = vadd.f32 %v173, %v746
  %v748 = vpop.f32.mrf.mxu0
  %v749 = vpop.f32.mrf.mxu0
  %v750 = vpop.f32.mrf.mxu0
  %751 = vdwg.mxu0
  %752 = vst [vmem:[#allocation3 + $0x20] sm:$0xff] %v747
  %v753 = vld [vmem:[#allocation2 + $0x28] sm:$0xff]
  %754 = vmatprep.subr.bf16.mxu0 0
  %755 = vmatpush1.bf16.msra.mxu0 0
  %756 = vmatprep.subr.bf16.mxu0 0
  %757 = vmatpush1.bf16.msra.mxu0 0
  %758 = vmatprep.subr.bf16.mxu0 0
  %759 = vmatpush1.bf16.msra.mxu0 0
  %760 = vmatprep.subr.bf16.mxu0 0
  %761 = vmatpush1.bf16.msra.mxu0 0
  %762 = vmatprep.subr.bf16.mxu0 0
  %763 = vmatpush1.bf16.msra.mxu0 0
  %764 = vmatprep.subr.bf16.mxu0 0
  %765 = vmatpush1.bf16.msra.mxu0 0
  %766 = vmatprep.subr.bf16.mxu0 0
  %767 = vmatpush1.bf16.msra.mxu0 %v185
  %768 = vmatprep.subr.bf16.mxu0 0
  %769 = vmatpush1.bf16.msra.mxu0 %v184
  %770 = vmatprep.subr.bf16.mxu0 0
  %771 = vmatpush2.bf16.msra.mxu0 0
  %772 = vmatprep.subr.bf16.mxu0 0
  %773 = vmatpush2.bf16.msra.mxu0 0
  %774 = vmatprep.subr.bf16.mxu0 0
  %775 = vmatpush2.bf16.msra.mxu0 0
  %776 = vmatprep.subr.bf16.mxu0 0
  %777 = vmatpush2.bf16.msra.mxu0 0
  %778 = vmatprep.subr.bf16.mxu0 0
  %779 = vmatpush2.bf16.msra.mxu0 0
  %780 = vmatprep.subr.bf16.mxu0 0
  %781 = vmatpush2.bf16.msra.mxu0 0
  %782 = vmatprep.subr.bf16.mxu0 0
  %783 = vmatpush2.bf16.msra.mxu0 0
  %784 = vmatprep.subr.bf16.mxu0 0
  %785 = vmatpush2.bf16.msra.mxu0 0
  %786 = vmatprep.mubr.bf16.mxu0 0
  %787 = vmatmul.mubr.bf16.gmra.mxu0 %v710
  %v788 = vpop.f32.mrf.mxu0
  %v789 = vadd.f32 0.0, %v788
  %v790 = vpop.f32.mrf.mxu0
  %v791 = vpop.f32.mrf.mxu0
  %v792 = vpop.f32.mrf.mxu0
  %793 = vdwg.mxu0
  %v794 = vadd.f32 %v753, %v789
  %v795 = vtanh.pop %v794
  %v796 = vmul.f32 %v795, %v45
  %v797 = vadd.f32 %v796, %v46
  %v798 = vmul.f32 %v797, %v698
  %800 = vrot.lane.b32.xlu0 %v797, 32
  %v801 = vpop.permute.xlu0 %800
  %v803 = vmul.f32 %v797, %v801
  %805 = vrot.lane.b32.xlu0 %v803, 32
  %v806 = vpop.permute.xlu0 %805
  %v808 = vadd.f32 %v798, %v806
  %v809 = vtanh.pop %v808
  %811 = vrot.lane.b32.xlu0 %v809, 32
  %v812 = vpop.permute.xlu0 %811
  %v814 = vmul.f32 %v797, %v812
  %v815 = vpack.c.bf16 %v814, %v814
  %817 = vrot.lane.b32.xlu0 %v815, 64
  %v818 = vpop.permute.xlu0 %817
  %v820 = vsel %vm188, %v818, 0
  %822 = vmatprep.subr.bf16.mxu0 0
  %823 = vmatpush1.bf16.msra.mxu0 0
  %824 = vmatprep.subr.bf16.mxu0 0
  %825 = vmatpush1.bf16.msra.mxu0 0
  %826 = vmatprep.subr.bf16.mxu0 0
  %827 = vmatpush1.bf16.msra.mxu0 0
  %828 = vmatprep.subr.bf16.mxu0 0
  %829 = vmatpush1.bf16.msra.mxu0 0
  %830 = vmatprep.subr.bf16.mxu0 0
  %831 = vmatpush1.bf16.msra.mxu0 0
  %832 = vmatprep.subr.bf16.mxu0 0
  %833 = vmatpush1.bf16.msra.mxu0 0
  %834 = vmatprep.subr.bf16.mxu0 0
  %835 = vmatpush1.bf16.msra.mxu0 %v266
  %836 = vmatprep.subr.bf16.mxu0 0
  %837 = vmatpush1.bf16.msra.mxu0 %v265
  %838 = vmatprep.subr.bf16.mxu0 0
  %839 = vmatpush2.bf16.msra.mxu0 0
  %840 = vmatprep.subr.bf16.mxu0 0
  %841 = vmatpush2.bf16.msra.mxu0 0
  %842 = vmatprep.subr.bf16.mxu0 0
  %843 = vmatpush2.bf16.msra.mxu0 0
  %844 = vmatprep.subr.bf16.mxu0 0
  %845 = vmatpush2.bf16.msra.mxu0 0
  %846 = vmatprep.subr.bf16.mxu0 0
  %847 = vmatpush2.bf16.msra.mxu0 0
  %848 = vmatprep.subr.bf16.mxu0 0
  %849 = vmatpush2.bf16.msra.mxu0 0
  %850 = vmatprep.subr.bf16.mxu0 0
  %851 = vmatpush2.bf16.msra.mxu0 0
  %852 = vmatprep.subr.bf16.mxu0 0
  %853 = vmatpush2.bf16.msra.mxu0 0
  %854 = vmatprep.mubr.bf16.mxu0 0
  %855 = vmatmul.mubr.bf16.gmra.mxu0 %v820
  %v856 = vpop.f32.mrf.mxu0
  %v857 = vadd.f32 %v173, %v856
  %v858 = vpop.f32.mrf.mxu0
  %v859 = vpop.f32.mrf.mxu0
  %v860 = vpop.f32.mrf.mxu0
  %861 = vdwg.mxu0
  %862 = vst [vmem:[#allocation3 + $0x28] sm:$0xff] %v857
  %v863 = vld [vmem:[#allocation2 + $0x30] sm:$0xff]
  %864 = vmatprep.subr.bf16.mxu0 0
  %865 = vmatpush1.bf16.msra.mxu0 0
  %866 = vmatprep.subr.bf16.mxu0 0
  %867 = vmatpush1.bf16.msra.mxu0 0
  %868 = vmatprep.subr.bf16.mxu0 0
  %869 = vmatpush1.bf16.msra.mxu0 0
  %870 = vmatprep.subr.bf16.mxu0 0
  %871 = vmatpush1.bf16.msra.mxu0 0
  %872 = vmatprep.subr.bf16.mxu0 0
  %873 = vmatpush1.bf16.msra.mxu0 0
  %874 = vmatprep.subr.bf16.mxu0 0
  %875 = vmatpush1.bf16.msra.mxu0 0
  %876 = vmatprep.subr.bf16.mxu0 0
  %877 = vmatpush1.bf16.msra.mxu0 %v185
  %878 = vmatprep.subr.bf16.mxu0 0
  %879 = vmatpush1.bf16.msra.mxu0 %v184
  %880 = vmatprep.subr.bf16.mxu0 0
  %881 = vmatpush2.bf16.msra.mxu0 0
  %882 = vmatprep.subr.bf16.mxu0 0
  %883 = vmatpush2.bf16.msra.mxu0 0
  %884 = vmatprep.subr.bf16.mxu0 0
  %885 = vmatpush2.bf16.msra.mxu0 0
  %886 = vmatprep.subr.bf16.mxu0 0
  %887 = vmatpush2.bf16.msra.mxu0 0
  %888 = vmatprep.subr.bf16.mxu0 0
  %889 = vmatpush2.bf16.msra.mxu0 0
  %890 = vmatprep.subr.bf16.mxu0 0
  %891 = vmatpush2.bf16.msra.mxu0 0
  %892 = vmatprep.subr.bf16.mxu0 0
  %893 = vmatpush2.bf16.msra.mxu0 0
  %894 = vmatprep.subr.bf16.mxu0 0
  %895 = vmatpush2.bf16.msra.mxu0 0
  %896 = vmatprep.mubr.bf16.mxu0 0
  %897 = vmatmul.mubr.bf16.gmra.mxu0 %v820
  %v898 = vpop.f32.mrf.mxu0
  %v899 = vadd.f32 0.0, %v898
  %v900 = vpop.f32.mrf.mxu0
  %v901 = vpop.f32.mrf.mxu0
  %v902 = vpop.f32.mrf.mxu0
  %903 = vdwg.mxu0
  %v904 = vadd.f32 %v863, %v899
  %v905 = vtanh.pop %v904
  %v906 = vmul.f32 %v905, %v45
  %v907 = vadd.f32 %v906, %v46
  %v908 = vmul.f32 %v907, %v808
  %910 = vrot.lane.b32.xlu0 %v907, 32
  %v911 = vpop.permute.xlu0 %910
  %v913 = vmul.f32 %v907, %v911
  %915 = vrot.lane.b32.xlu0 %v913, 32
  %v916 = vpop.permute.xlu0 %915
  %v918 = vadd.f32 %v908, %v916
  %v919 = vtanh.pop %v918
  %921 = vrot.lane.b32.xlu0 %v919, 32
  %v922 = vpop.permute.xlu0 %921
  %v924 = vmul.f32 %v907, %v922
  %v925 = vpack.c.bf16 %v924, %v924
  %927 = vrot.lane.b32.xlu0 %v925, 64
  %v928 = vpop.permute.xlu0 %927
  %v930 = vsel %vm188, %v928, 0
  %932 = vmatprep.subr.bf16.mxu0 0
  %933 = vmatpush1.bf16.msra.mxu0 0
  %934 = vmatprep.subr.bf16.mxu0 0
  %935 = vmatpush1.bf16.msra.mxu0 0
  %936 = vmatprep.subr.bf16.mxu0 0
  %937 = vmatpush1.bf16.msra.mxu0 0
  %938 = vmatprep.subr.bf16.mxu0 0
  %939 = vmatpush1.bf16.msra.mxu0 0
  %940 = vmatprep.subr.bf16.mxu0 0
  %941 = vmatpush1.bf16.msra.mxu0 0
  %942 = vmatprep.subr.bf16.mxu0 0
  %943 = vmatpush1.bf16.msra.mxu0 0
  %944 = vmatprep.subr.bf16.mxu0 0
  %945 = vmatpush1.bf16.msra.mxu0 %v266
  %946 = vmatprep.subr.bf16.mxu0 0
  %947 = vmatpush1.bf16.msra.mxu0 %v265
  %948 = vmatprep.subr.bf16.mxu0 0
  %949 = vmatpush2.bf16.msra.mxu0 0
  %950 = vmatprep.subr.bf16.mxu0 0
  %951 = vmatpush2.bf16.msra.mxu0 0
  %952 = vmatprep.subr.bf16.mxu0 0
  %953 = vmatpush2.bf16.msra.mxu0 0
  %954 = vmatprep.subr.bf16.mxu0 0
  %955 = vmatpush2.bf16.msra.mxu0 0
  %956 = vmatprep.subr.bf16.mxu0 0
  %957 = vmatpush2.bf16.msra.mxu0 0
  %958 = vmatprep.subr.bf16.mxu0 0
  %959 = vmatpush2.bf16.msra.mxu0 0
  %960 = vmatprep.subr.bf16.mxu0 0
  %961 = vmatpush2.bf16.msra.mxu0 0
  %962 = vmatprep.subr.bf16.mxu0 0
  %963 = vmatpush2.bf16.msra.mxu0 0
  %964 = vmatprep.mubr.bf16.mxu0 0
  %965 = vmatmul.mubr.bf16.gmra.mxu0 %v930
  %v966 = vpop.f32.mrf.mxu0
  %v967 = vadd.f32 %v173, %v966
  %v968 = vpop.f32.mrf.mxu0
  %v969 = vpop.f32.mrf.mxu0
  %v970 = vpop.f32.mrf.mxu0
  %971 = vdwg.mxu0
  %972 = vst [vmem:[#allocation3 + $0x30] sm:$0xff] %v967
  %v973 = vld [vmem:[#allocation2 + $0x38] sm:$0xff]
  %974 = vmatprep.subr.bf16.mxu0 0
  %975 = vmatpush1.bf16.msra.mxu0 0
  %976 = vmatprep.subr.bf16.mxu0 0
  %977 = vmatpush1.bf16.msra.mxu0 0
  %978 = vmatprep.subr.bf16.mxu0 0
  %979 = vmatpush1.bf16.msra.mxu0 0
  %980 = vmatprep.subr.bf16.mxu0 0
  %981 = vmatpush1.bf16.msra.mxu0 0
  %982 = vmatprep.subr.bf16.mxu0 0
  %983 = vmatpush1.bf16.msra.mxu0 0
  %984 = vmatprep.subr.bf16.mxu0 0
  %985 = vmatpush1.bf16.msra.mxu0 0
  %986 = vmatprep.subr.bf16.mxu0 0
  %987 = vmatpush1.bf16.msra.mxu0 %v185
  %988 = vmatprep.subr.bf16.mxu0 0
  %989 = vmatpush1.bf16.msra.mxu0 %v184
  %990 = vmatprep.subr.bf16.mxu0 0
  %991 = vmatpush2.bf16.msra.mxu0 0
  %992 = vmatprep.subr.bf16.mxu0 0
  %993 = vmatpush2.bf16.msra.mxu0 0
  %994 = vmatprep.subr.bf16.mxu0 0
  %995 = vmatpush2.bf16.msra.mxu0 0
  %996 = vmatprep.subr.bf16.mxu0 0
  %997 = vmatpush2.bf16.msra.mxu0 0
  %998 = vmatprep.subr.bf16.mxu0 0
  %999 = vmatpush2.bf16.msra.mxu0 0
  %1000 = vmatprep.subr.bf16.mxu0 0
  %1001 = vmatpush2.bf16.msra.mxu0 0
  %1002 = vmatprep.subr.bf16.mxu0 0
  %1003 = vmatpush2.bf16.msra.mxu0 0
  %1004 = vmatprep.subr.bf16.mxu0 0
  %1005 = vmatpush2.bf16.msra.mxu0 0
  %1006 = vmatprep.mubr.bf16.mxu0 0
  %1007 = vmatmul.mubr.bf16.gmra.mxu0 %v930
  %v1008 = vpop.f32.mrf.mxu0
  %v1009 = vadd.f32 0.0, %v1008
  %v1010 = vpop.f32.mrf.mxu0
  %v1011 = vpop.f32.mrf.mxu0
  %v1012 = vpop.f32.mrf.mxu0
  %1013 = vdwg.mxu0
  %v1014 = vadd.f32 %v973, %v1009
  %v1015 = vtanh.pop %v1014
  %v1016 = vmul.f32 %v1015, %v45
  %v1017 = vadd.f32 %v1016, %v46
  %v1018 = vmul.f32 %v1017, %v918
  %1020 = vrot.lane.b32.xlu0 %v1017, 32
  %v1021 = vpop.permute.xlu0 %1020
  %v1023 = vmul.f32 %v1017, %v1021
  %1025 = vrot.lane.b32.xlu0 %v1023, 32
  %v1026 = vpop.permute.xlu0 %1025
  %v1028 = vadd.f32 %v1018, %v1026
  %v1029 = vtanh.pop %v1028
  %1031 = vrot.lane.b32.xlu0 %v1029, 32
  %v1032 = vpop.permute.xlu0 %1031
  %v1034 = vmul.f32 %v1017, %v1032
  %v1035 = vpack.c.bf16 %v1034, %v1034
  %1037 = vrot.lane.b32.xlu0 %v1035, 64
  %v1038 = vpop.permute.xlu0 %1037
  %v1040 = vsel %vm188, %v1038, 0
  %1042 = vmatprep.subr.bf16.mxu0 0
  %1043 = vmatpush1.bf16.msra.mxu0 0
  %1044 = vmatprep.subr.bf16.mxu0 0
  %1045 = vmatpush1.bf16.msra.mxu0 0
  %1046 = vmatprep.subr.bf16.mxu0 0
  %1047 = vmatpush1.bf16.msra.mxu0 0
  %1048 = vmatprep.subr.bf16.mxu0 0
  %1049 = vmatpush1.bf16.msra.mxu0 0
  %1050 = vmatprep.subr.bf16.mxu0 0
  %1051 = vmatpush1.bf16.msra.mxu0 0
  %1052 = vmatprep.subr.bf16.mxu0 0
  %1053 = vmatpush1.bf16.msra.mxu0 0
  %1054 = vmatprep.subr.bf16.mxu0 0
  %1055 = vmatpush1.bf16.msra.mxu0 %v266
  %1056 = vmatprep.subr.bf16.mxu0 0
  %1057 = vmatpush1.bf16.msra.mxu0 %v265
  %1058 = vmatprep.subr.bf16.mxu0 0
  %1059 = vmatpush2.bf16.msra.mxu0 0
  %1060 = vmatprep.subr.bf16.mxu0 0
  %1061 = vmatpush2.bf16.msra.mxu0 0
  %1062 = vmatprep.subr.bf16.mxu0 0
  %1063 = vmatpush2.bf16.msra.mxu0 0
  %1064 = vmatprep.subr.bf16.mxu0 0
  %1065 = vmatpush2.bf16.msra.mxu0 0
  %1066 = vmatprep.subr.bf16.mxu0 0
  %1067 = vmatpush2.bf16.msra.mxu0 0
  %1068 = vmatprep.subr.bf16.mxu0 0
  %1069 = vmatpush2.bf16.msra.mxu0 0
  %1070 = vmatprep.subr.bf16.mxu0 0
  %1071 = vmatpush2.bf16.msra.mxu0 0
  %1072 = vmatprep.subr.bf16.mxu0 0
  %1073 = vmatpush2.bf16.msra.mxu0 0
  %1074 = vmatprep.mubr.bf16.mxu0 0
  %1075 = vmatmul.mubr.bf16.gmra.mxu0 %v1040
  %v1076 = vpop.f32.mrf.mxu0
  %v1077 = vadd.f32 %v173, %v1076
  %v1078 = vpop.f32.mrf.mxu0
  %v1079 = vpop.f32.mrf.mxu0
  %v1080 = vpop.f32.mrf.mxu0
  %1081 = vdwg.mxu0
  %1082 = vst [vmem:[#allocation3 + $0x38] sm:$0xff] %v1077
  %v1083 = vld [vmem:[%s5] sm:$0xf]
  %v1084 = vld [vmem:[%s5 + $0x4] sm:$0xf]
  %v1085 = vld [vmem:[%s5 + $0x8] sm:$0xf]
  %v1086 = vld [vmem:[%s5 + $0xc] sm:$0xf]
  %v1087 = vld [vmem:[%s7] sm:$0xf]
  %v1088 = vld [vmem:[%s7 + $0x4] sm:$0xf]
  %v1089 = vld [vmem:[%s7 + $0x8] sm:$0xf]
  %v1090 = vld [vmem:[%s7 + $0xc] sm:$0xf]
  %v1091 = vld [vmem:[%s9] sm:$0x1]
  %v1093 = vlaneseq
  %v1094 = vshrl.u32 %v1093, 7
  %v1095 = vsub.s32 0, %v1094
  %v1096 = vrot.slane %v1091, %v1095
  %v1098 = vld [vmem:[#allocation3] sm:$0xff]
  %v1103 = vunpack.c.l.b16 %v1083
  %v1104 = vunpack.c.l.b16 %v1084
  %v1105 = vunpack.c.l.b16 %v1085
  %v1106 = vunpack.c.l.b16 %v1086
  %v1107 = vpack.c.b16 %v1104, %v1103
  %v1108 = vpack.c.b16 %v1106, %v1105
  %1111 = vmatprep.subr.bf16.mxu0 0
  %1112 = vmatpush1.bf16.msra.mxu0 0
  %1113 = vmatprep.subr.bf16.mxu0 0
  %1114 = vmatpush1.bf16.msra.mxu0 0
  %1115 = vmatprep.subr.bf16.mxu0 0
  %1116 = vmatpush1.bf16.msra.mxu0 0
  %1117 = vmatprep.subr.bf16.mxu0 0
  %1118 = vmatpush1.bf16.msra.mxu0 0
  %1119 = vmatprep.subr.bf16.mxu0 0
  %1120 = vmatpush1.bf16.msra.mxu0 0
  %1121 = vmatprep.subr.bf16.mxu0 0
  %1122 = vmatpush1.bf16.msra.mxu0 0
  %1123 = vmatprep.subr.bf16.mxu0 0
  %1124 = vmatpush1.bf16.msra.mxu0 %v1108
  %1125 = vmatprep.subr.bf16.mxu0 0
  %1126 = vmatpush1.bf16.msra.mxu0 %v1107
  %1127 = vmatprep.subr.bf16.mxu0 0
  %1128 = vmatpush2.bf16.msra.mxu0 0
  %1129 = vmatprep.subr.bf16.mxu0 0
  %1130 = vmatpush2.bf16.msra.mxu0 0
  %1131 = vmatprep.subr.bf16.mxu0 0
  %1132 = vmatpush2.bf16.msra.mxu0 0
  %1133 = vmatprep.subr.bf16.mxu0 0
  %1134 = vmatpush2.bf16.msra.mxu0 0
  %1135 = vmatprep.subr.bf16.mxu0 0
  %1136 = vmatpush2.bf16.msra.mxu0 0
  %1137 = vmatprep.subr.bf16.mxu0 0
  %1138 = vmatpush2.bf16.msra.mxu0 0
  %1139 = vmatprep.subr.bf16.mxu0 0
  %1140 = vmatpush2.bf16.msra.mxu0 0
  %1141 = vmatprep.subr.bf16.mxu0 0
  %1142 = vmatpush2.bf16.msra.mxu0 0
  %1143 = vmatprep.mubr.bf16.mxu0 0
  %1144 = vmatmul.mubr.bf16.gmra.mxu0 %v190
  %v1145 = vpop.f32.mrf.mxu0
  %v1146 = vadd.f32 0.0, %v1145
  %v1147 = vpop.f32.mrf.mxu0
  %v1148 = vpop.f32.mrf.mxu0
  %v1149 = vpop.f32.mrf.mxu0
  %1150 = vdwg.mxu0
  %v1151 = vadd.f32 %v1098, %v1146
  %v1152 = vtanh.pop %v1151
  %v1153 = vmul.f32 %v1152, %v45
  %v1154 = vadd.f32 %v1153, %v46
  %v1155 = vmul.f32 %v1154, 0.0
  %1157 = vrot.lane.b32.xlu0 %v1154, 32
  %v1158 = vpop.permute.xlu0 %1157
  %v1160 = vmul.f32 %v1154, %v1158
  %1162 = vrot.lane.b32.xlu0 %v1160, 32
  %v1163 = vpop.permute.xlu0 %1162
  %v1165 = vadd.f32 %v1155, %v1163
  %v1166 = vtanh.pop %v1165
  %1168 = vrot.lane.b32.xlu0 %v1166, 32
  %v1169 = vpop.permute.xlu0 %1168
  %v1171 = vmul.f32 %v1154, %v1169
  %v1172 = vpack.c.bf16 %v1171, %v1171
  %1174 = vrot.lane.b32.xlu0 %v1172, 64
  %v1175 = vpop.permute.xlu0 %1174
  %v1180 = vunpack.c.l.b16 %v1087
  %v1181 = vunpack.c.l.b16 %v1088
  %v1182 = vunpack.c.l.b16 %v1089
  %v1183 = vunpack.c.l.b16 %v1090
  %v1184 = vpack.c.b16 %v1181, %v1180
  %v1185 = vpack.c.b16 %v1183, %v1182
  %v1189 = vsel %vm188, %v1175, 0
  %1191 = vmatprep.subr.bf16.mxu0 0
  %1192 = vmatpush1.bf16.msra.mxu0 0
  %1193 = vmatprep.subr.bf16.mxu0 0
  %1194 = vmatpush1.bf16.msra.mxu0 0
  %1195 = vmatprep.subr.bf16.mxu0 0
  %1196 = vmatpush1.bf16.msra.mxu0 0
  %1197 = vmatprep.subr.bf16.mxu0 0
  %1198 = vmatpush1.bf16.msra.mxu0 0
  %1199 = vmatprep.subr.bf16.mxu0 0
  %1200 = vmatpush1.bf16.msra.mxu0 0
  %1201 = vmatprep.subr.bf16.mxu0 0
  %1202 = vmatpush1.bf16.msra.mxu0 0
  %1203 = vmatprep.subr.bf16.mxu0 0
  %1204 = vmatpush1.bf16.msra.mxu0 %v1185
  %1205 = vmatprep.subr.bf16.mxu0 0
  %1206 = vmatpush1.bf16.msra.mxu0 %v1184
  %1207 = vmatprep.subr.bf16.mxu0 0
  %1208 = vmatpush2.bf16.msra.mxu0 0
  %1209 = vmatprep.subr.bf16.mxu0 0
  %1210 = vmatpush2.bf16.msra.mxu0 0
  %1211 = vmatprep.subr.bf16.mxu0 0
  %1212 = vmatpush2.bf16.msra.mxu0 0
  %1213 = vmatprep.subr.bf16.mxu0 0
  %1214 = vmatpush2.bf16.msra.mxu0 0
  %1215 = vmatprep.subr.bf16.mxu0 0
  %1216 = vmatpush2.bf16.msra.mxu0 0
  %1217 = vmatprep.subr.bf16.mxu0 0
  %1218 = vmatpush2.bf16.msra.mxu0 0
  %1219 = vmatprep.subr.bf16.mxu0 0
  %1220 = vmatpush2.bf16.msra.mxu0 0
  %1221 = vmatprep.subr.bf16.mxu0 0
  %1222 = vmatpush2.bf16.msra.mxu0 0
  %1223 = vmatprep.mubr.bf16.mxu0 0
  %1224 = vmatmul.mubr.bf16.gmra.mxu0 %v1189
  %v1225 = vpop.f32.mrf.mxu0
  %v1226 = vadd.f32 %v1096, %v1225
  %v1227 = vpop.f32.mrf.mxu0
  %v1228 = vpop.f32.mrf.mxu0
  %v1229 = vpop.f32.mrf.mxu0
  %1230 = vdwg.mxu0
  %1231 = vst [vmem:[#allocation2] sm:$0xff] %v1226
  %v1232 = vld [vmem:[#allocation3 + $0x8] sm:$0xff]
  %1233 = vmatprep.subr.bf16.mxu0 0
  %1234 = vmatpush1.bf16.msra.mxu0 0
  %1235 = vmatprep.subr.bf16.mxu0 0
  %1236 = vmatpush1.bf16.msra.mxu0 0
  %1237 = vmatprep.subr.bf16.mxu0 0
  %1238 = vmatpush1.bf16.msra.mxu0 0
  %1239 = vmatprep.subr.bf16.mxu0 0
  %1240 = vmatpush1.bf16.msra.mxu0 0
  %1241 = vmatprep.subr.bf16.mxu0 0
  %1242 = vmatpush1.bf16.msra.mxu0 0
  %1243 = vmatprep.subr.bf16.mxu0 0
  %1244 = vmatpush1.bf16.msra.mxu0 0
  %1245 = vmatprep.subr.bf16.mxu0 0
  %1246 = vmatpush1.bf16.msra.mxu0 %v1108
  %1247 = vmatprep.subr.bf16.mxu0 0
  %1248 = vmatpush1.bf16.msra.mxu0 %v1107
  %1249 = vmatprep.subr.bf16.mxu0 0
  %1250 = vmatpush2.bf16.msra.mxu0 0
  %1251 = vmatprep.subr.bf16.mxu0 0
  %1252 = vmatpush2.bf16.msra.mxu0 0
  %1253 = vmatprep.subr.bf16.mxu0 0
  %1254 = vmatpush2.bf16.msra.mxu0 0
  %1255 = vmatprep.subr.bf16.mxu0 0
  %1256 = vmatpush2.bf16.msra.mxu0 0
  %1257 = vmatprep.subr.bf16.mxu0 0
  %1258 = vmatpush2.bf16.msra.mxu0 0
  %1259 = vmatprep.subr.bf16.mxu0 0
  %1260 = vmatpush2.bf16.msra.mxu0 0
  %1261 = vmatprep.subr.bf16.mxu0 0
  %1262 = vmatpush2.bf16.msra.mxu0 0
  %1263 = vmatprep.subr.bf16.mxu0 0
  %1264 = vmatpush2.bf16.msra.mxu0 0
  %1265 = vmatprep.mubr.bf16.mxu0 0
  %1266 = vmatmul.mubr.bf16.gmra.mxu0 %v1189
  %v1267 = vpop.f32.mrf.mxu0
  %v1268 = vadd.f32 0.0, %v1267
  %v1269 = vpop.f32.mrf.mxu0
  %v1270 = vpop.f32.mrf.mxu0
  %v1271 = vpop.f32.mrf.mxu0
  %1272 = vdwg.mxu0
  %v1273 = vadd.f32 %v1232, %v1268
  %v1274 = vtanh.pop %v1273
  %v1275 = vmul.f32 %v1274, %v45
  %v1276 = vadd.f32 %v1275, %v46
  %v1277 = vmul.f32 %v1276, %v1165
  %1279 = vrot.lane.b32.xlu0 %v1276, 32
  %v1280 = vpop.permute.xlu0 %1279
  %v1282 = vmul.f32 %v1276, %v1280
  %1284 = vrot.lane.b32.xlu0 %v1282, 32
  %v1285 = vpop.permute.xlu0 %1284
  %v1287 = vadd.f32 %v1277, %v1285
  %v1288 = vtanh.pop %v1287
  %1290 = vrot.lane.b32.xlu0 %v1288, 32
  %v1291 = vpop.permute.xlu0 %1290
  %v1293 = vmul.f32 %v1276, %v1291
  %v1294 = vpack.c.bf16 %v1293, %v1293
  %1296 = vrot.lane.b32.xlu0 %v1294, 64
  %v1297 = vpop.permute.xlu0 %1296
  %v1299 = vsel %vm188, %v1297, 0
  %1301 = vmatprep.subr.bf16.mxu0 0
  %1302 = vmatpush1.bf16.msra.mxu0 0
  %1303 = vmatprep.subr.bf16.mxu0 0
  %1304 = vmatpush1.bf16.msra.mxu0 0
  %1305 = vmatprep.subr.bf16.mxu0 0
  %1306 = vmatpush1.bf16.msra.mxu0 0
  %1307 = vmatprep.subr.bf16.mxu0 0
  %1308 = vmatpush1.bf16.msra.mxu0 0
  %1309 = vmatprep.subr.bf16.mxu0 0
  %1310 = vmatpush1.bf16.msra.mxu0 0
  %1311 = vmatprep.subr.bf16.mxu0 0
  %1312 = vmatpush1.bf16.msra.mxu0 0
  %1313 = vmatprep.subr.bf16.mxu0 0
  %1314 = vmatpush1.bf16.msra.mxu0 %v1185
  %1315 = vmatprep.subr.bf16.mxu0 0
  %1316 = vmatpush1.bf16.msra.mxu0 %v1184
  %1317 = vmatprep.subr.bf16.mxu0 0
  %1318 = vmatpush2.bf16.msra.mxu0 0
  %1319 = vmatprep.subr.bf16.mxu0 0
  %1320 = vmatpush2.bf16.msra.mxu0 0
  %1321 = vmatprep.subr.bf16.mxu0 0
  %1322 = vmatpush2.bf16.msra.mxu0 0
  %1323 = vmatprep.subr.bf16.mxu0 0
  %1324 = vmatpush2.bf16.msra.mxu0 0
  %1325 = vmatprep.subr.bf16.mxu0 0
  %1326 = vmatpush2.bf16.msra.mxu0 0
  %1327 = vmatprep.subr.bf16.mxu0 0
  %1328 = vmatpush2.bf16.msra.mxu0 0
  %1329 = vmatprep.subr.bf16.mxu0 0
  %1330 = vmatpush2.bf16.msra.mxu0 0
  %1331 = vmatprep.subr.bf16.mxu0 0
  %1332 = vmatpush2.bf16.msra.mxu0 0
  %1333 = vmatprep.mubr.bf16.mxu0 0
  %1334 = vmatmul.mubr.bf16.gmra.mxu0 %v1299
  %v1335 = vpop.f32.mrf.mxu0
  %v1336 = vadd.f32 %v1096, %v1335
  %v1337 = vpop.f32.mrf.mxu0
  %v1338 = vpop.f32.mrf.mxu0
  %v1339 = vpop.f32.mrf.mxu0
  %1340 = vdwg.mxu0
  %1341 = vst [vmem:[#allocation2 + $0x8] sm:$0xff] %v1336
  %v1342 = vld [vmem:[#allocation3 + $0x10] sm:$0xff]
  %1343 = vmatprep.subr.bf16.mxu0 0
  %1344 = vmatpush1.bf16.msra.mxu0 0
  %1345 = vmatprep.subr.bf16.mxu0 0
  %1346 = vmatpush1.bf16.msra.mxu0 0
  %1347 = vmatprep.subr.bf16.mxu0 0
  %1348 = vmatpush1.bf16.msra.mxu0 0
  %1349 = vmatprep.subr.bf16.mxu0 0
  %1350 = vmatpush1.bf16.msra.mxu0 0
  %1351 = vmatprep.subr.bf16.mxu0 0
  %1352 = vmatpush1.bf16.msra.mxu0 0
  %1353 = vmatprep.subr.bf16.mxu0 0
  %1354 = vmatpush1.bf16.msra.mxu0 0
  %1355 = vmatprep.subr.bf16.mxu0 0
  %1356 = vmatpush1.bf16.msra.mxu0 %v1108
  %1357 = vmatprep.subr.bf16.mxu0 0
  %1358 = vmatpush1.bf16.msra.mxu0 %v1107
  %1359 = vmatprep.subr.bf16.mxu0 0
  %1360 = vmatpush2.bf16.msra.mxu0 0
  %1361 = vmatprep.subr.bf16.mxu0 0
  %1362 = vmatpush2.bf16.msra.mxu0 0
  %1363 = vmatprep.subr.bf16.mxu0 0
  %1364 = vmatpush2.bf16.msra.mxu0 0
  %1365 = vmatprep.subr.bf16.mxu0 0
  %1366 = vmatpush2.bf16.msra.mxu0 0
  %1367 = vmatprep.subr.bf16.mxu0 0
  %1368 = vmatpush2.bf16.msra.mxu0 0
  %1369 = vmatprep.subr.bf16.mxu0 0
  %1370 = vmatpush2.bf16.msra.mxu0 0
  %1371 = vmatprep.subr.bf16.mxu0 0
  %1372 = vmatpush2.bf16.msra.mxu0 0
  %1373 = vmatprep.subr.bf16.mxu0 0
  %1374 = vmatpush2.bf16.msra.mxu0 0
  %1375 = vmatprep.mubr.bf16.mxu0 0
  %1376 = vmatmul.mubr.bf16.gmra.mxu0 %v1299
  %v1377 = vpop.f32.mrf.mxu0
  %v1378 = vadd.f32 0.0, %v1377
  %v1379 = vpop.f32.mrf.mxu0
  %v1380 = vpop.f32.mrf.mxu0
  %v1381 = vpop.f32.mrf.mxu0
  %1382 = vdwg.mxu0
  %v1383 = vadd.f32 %v1342, %v1378
  %v1384 = vtanh.pop %v1383
  %v1385 = vmul.f32 %v1384, %v45
  %v1386 = vadd.f32 %v1385, %v46
  %v1387 = vmul.f32 %v1386, %v1287
  %1389 = vrot.lane.b32.xlu0 %v1386, 32
  %v1390 = vpop.permute.xlu0 %1389
  %v1392 = vmul.f32 %v1386, %v1390
  %1394 = vrot.lane.b32.xlu0 %v1392, 32
  %v1395 = vpop.permute.xlu0 %1394
  %v1397 = vadd.f32 %v1387, %v1395
  %v1398 = vtanh.pop %v1397
  %1400 = vrot.lane.b32.xlu0 %v1398, 32
  %v1401 = vpop.permute.xlu0 %1400
  %v1403 = vmul.f32 %v1386, %v1401
  %v1404 = vpack.c.bf16 %v1403, %v1403
  %1406 = vrot.lane.b32.xlu0 %v1404, 64
  %v1407 = vpop.permute.xlu0 %1406
  %v1409 = vsel %vm188, %v1407, 0
  %1411 = vmatprep.subr.bf16.mxu0 0
  %1412 = vmatpush1.bf16.msra.mxu0 0
  %1413 = vmatprep.subr.bf16.mxu0 0
  %1414 = vmatpush1.bf16.msra.mxu0 0
  %1415 = vmatprep.subr.bf16.mxu0 0
  %1416 = vmatpush1.bf16.msra.mxu0 0
  %1417 = vmatprep.subr.bf16.mxu0 0
  %1418 = vmatpush1.bf16.msra.mxu0 0
  %1419 = vmatprep.subr.bf16.mxu0 0
  %1420 = vmatpush1.bf16.msra.mxu0 0
  %1421 = vmatprep.subr.bf16.mxu0 0
  %1422 = vmatpush1.bf16.msra.mxu0 0
  %1423 = vmatprep.subr.bf16.mxu0 0
  %1424 = vmatpush1.bf16.msra.mxu0 %v1185
  %1425 = vmatprep.subr.bf16.mxu0 0
  %1426 = vmatpush1.bf16.msra.mxu0 %v1184
  %1427 = vmatprep.subr.bf16.mxu0 0
  %1428 = vmatpush2.bf16.msra.mxu0 0
  %1429 = vmatprep.subr.bf16.mxu0 0
  %1430 = vmatpush2.bf16.msra.mxu0 0
  %1431 = vmatprep.subr.bf16.mxu0 0
  %1432 = vmatpush2.bf16.msra.mxu0 0
  %1433 = vmatprep.subr.bf16.mxu0 0
  %1434 = vmatpush2.bf16.msra.mxu0 0
  %1435 = vmatprep.subr.bf16.mxu0 0
  %1436 = vmatpush2.bf16.msra.mxu0 0
  %1437 = vmatprep.subr.bf16.mxu0 0
  %1438 = vmatpush2.bf16.msra.mxu0 0
  %1439 = vmatprep.subr.bf16.mxu0 0
  %1440 = vmatpush2.bf16.msra.mxu0 0
  %1441 = vmatprep.subr.bf16.mxu0 0
  %1442 = vmatpush2.bf16.msra.mxu0 0
  %1443 = vmatprep.mubr.bf16.mxu0 0
  %1444 = vmatmul.mubr.bf16.gmra.mxu0 %v1409
  %v1445 = vpop.f32.mrf.mxu0
  %v1446 = vadd.f32 %v1096, %v1445
  %v1447 = vpop.f32.mrf.mxu0
  %v1448 = vpop.f32.mrf.mxu0
  %v1449 = vpop.f32.mrf.mxu0
  %1450 = vdwg.mxu0
  %1451 = vst [vmem:[#allocation2 + $0x10] sm:$0xff] %v1446
  %v1452 = vld [vmem:[#allocation3 + $0x18] sm:$0xff]
  %1453 = vmatprep.subr.bf16.mxu0 0
  %1454 = vmatpush1.bf16.msra.mxu0 0
  %1455 = vmatprep.subr.bf16.mxu0 0
  %1456 = vmatpush1.bf16.msra.mxu0 0
  %1457 = vmatprep.subr.bf16.mxu0 0
  %1458 = vmatpush1.bf16.msra.mxu0 0
  %1459 = vmatprep.subr.bf16.mxu0 0
  %1460 = vmatpush1.bf16.msra.mxu0 0
  %1461 = vmatprep.subr.bf16.mxu0 0
  %1462 = vmatpush1.bf16.msra.mxu0 0
  %1463 = vmatprep.subr.bf16.mxu0 0
  %1464 = vmatpush1.bf16.msra.mxu0 0
  %1465 = vmatprep.subr.bf16.mxu0 0
  %1466 = vmatpush1.bf16.msra.mxu0 %v1108
  %1467 = vmatprep.subr.bf16.mxu0 0
  %1468 = vmatpush1.bf16.msra.mxu0 %v1107
  %1469 = vmatprep.subr.bf16.mxu0 0
  %1470 = vmatpush2.bf16.msra.mxu0 0
  %1471 = vmatprep.subr.bf16.mxu0 0
  %1472 = vmatpush2.bf16.msra.mxu0 0
  %1473 = vmatprep.subr.bf16.mxu0 0
  %1474 = vmatpush2.bf16.msra.mxu0 0
  %1475 = vmatprep.subr.bf16.mxu0 0
  %1476 = vmatpush2.bf16.msra.mxu0 0
  %1477 = vmatprep.subr.bf16.mxu0 0
  %1478 = vmatpush2.bf16.msra.mxu0 0
  %1479 = vmatprep.subr.bf16.mxu0 0
  %1480 = vmatpush2.bf16.msra.mxu0 0
  %1481 = vmatprep.subr.bf16.mxu0 0
  %1482 = vmatpush2.bf16.msra.mxu0 0
  %1483 = vmatprep.subr.bf16.mxu0 0
  %1484 = vmatpush2.bf16.msra.mxu0 0
  %1485 = vmatprep.mubr.bf16.mxu0 0
  %1486 = vmatmul.mubr.bf16.gmra.mxu0 %v1409
  %v1487 = vpop.f32.mrf.mxu0
  %v1488 = vadd.f32 0.0, %v1487
  %v1489 = vpop.f32.mrf.mxu0
  %v1490 = vpop.f32.mrf.mxu0
  %v1491 = vpop.f32.mrf.mxu0
  %1492 = vdwg.mxu0
  %v1493 = vadd.f32 %v1452, %v1488
  %v1494 = vtanh.pop %v1493
  %v1495 = vmul.f32 %v1494, %v45
  %v1496 = vadd.f32 %v1495, %v46
  %v1497 = vmul.f32 %v1496, %v1397
  %1499 = vrot.lane.b32.xlu0 %v1496, 32
  %v1500 = vpop.permute.xlu0 %1499
  %v1502 = vmul.f32 %v1496, %v1500
  %1504 = vrot.lane.b32.xlu0 %v1502, 32
  %v1505 = vpop.permute.xlu0 %1504
  %v1507 = vadd.f32 %v1497, %v1505
  %v1508 = vtanh.pop %v1507
  %1510 = vrot.lane.b32.xlu0 %v1508, 32
  %v1511 = vpop.permute.xlu0 %1510
  %v1513 = vmul.f32 %v1496, %v1511
  %v1514 = vpack.c.bf16 %v1513, %v1513
  %1516 = vrot.lane.b32.xlu0 %v1514, 64
  %v1517 = vpop.permute.xlu0 %1516
  %v1519 = vsel %vm188, %v1517, 0
  %1521 = vmatprep.subr.bf16.mxu0 0
  %1522 = vmatpush1.bf16.msra.mxu0 0
  %1523 = vmatprep.subr.bf16.mxu0 0
  %1524 = vmatpush1.bf16.msra.mxu0 0
  %1525 = vmatprep.subr.bf16.mxu0 0
  %1526 = vmatpush1.bf16.msra.mxu0 0
  %1527 = vmatprep.subr.bf16.mxu0 0
  %1528 = vmatpush1.bf16.msra.mxu0 0
  %1529 = vmatprep.subr.bf16.mxu0 0
  %1530 = vmatpush1.bf16.msra.mxu0 0
  %1531 = vmatprep.subr.bf16.mxu0 0
  %1532 = vmatpush1.bf16.msra.mxu0 0
  %1533 = vmatprep.subr.bf16.mxu0 0
  %1534 = vmatpush1.bf16.msra.mxu0 %v1185
  %1535 = vmatprep.subr.bf16.mxu0 0
  %1536 = vmatpush1.bf16.msra.mxu0 %v1184
  %1537 = vmatprep.subr.bf16.mxu0 0
  %1538 = vmatpush2.bf16.msra.mxu0 0
  %1539 = vmatprep.subr.bf16.mxu0 0
  %1540 = vmatpush2.bf16.msra.mxu0 0
  %1541 = vmatprep.subr.bf16.mxu0 0
  %1542 = vmatpush2.bf16.msra.mxu0 0
  %1543 = vmatprep.subr.bf16.mxu0 0
  %1544 = vmatpush2.bf16.msra.mxu0 0
  %1545 = vmatprep.subr.bf16.mxu0 0
  %1546 = vmatpush2.bf16.msra.mxu0 0
  %1547 = vmatprep.subr.bf16.mxu0 0
  %1548 = vmatpush2.bf16.msra.mxu0 0
  %1549 = vmatprep.subr.bf16.mxu0 0
  %1550 = vmatpush2.bf16.msra.mxu0 0
  %1551 = vmatprep.subr.bf16.mxu0 0
  %1552 = vmatpush2.bf16.msra.mxu0 0
  %1553 = vmatprep.mubr.bf16.mxu0 0
  %1554 = vmatmul.mubr.bf16.gmra.mxu0 %v1519
  %v1555 = vpop.f32.mrf.mxu0
  %v1556 = vadd.f32 %v1096, %v1555
  %v1557 = vpop.f32.mrf.mxu0
  %v1558 = vpop.f32.mrf.mxu0
  %v1559 = vpop.f32.mrf.mxu0
  %1560 = vdwg.mxu0
  %1561 = vst [vmem:[#allocation2 + $0x18] sm:$0xff] %v1556
  %v1562 = vld [vmem:[#allocation3 + $0x20] sm:$0xff]
  %1563 = vmatprep.subr.bf16.mxu0 0
  %1564 = vmatpush1.bf16.msra.mxu0 0
  %1565 = vmatprep.subr.bf16.mxu0 0
  %1566 = vmatpush1.bf16.msra.mxu0 0
  %1567 = vmatprep.subr.bf16.mxu0 0
  %1568 = vmatpush1.bf16.msra.mxu0 0
  %1569 = vmatprep.subr.bf16.mxu0 0
  %1570 = vmatpush1.bf16.msra.mxu0 0
  %1571 = vmatprep.subr.bf16.mxu0 0
  %1572 = vmatpush1.bf16.msra.mxu0 0
  %1573 = vmatprep.subr.bf16.mxu0 0
  %1574 = vmatpush1.bf16.msra.mxu0 0
  %1575 = vmatprep.subr.bf16.mxu0 0
  %1576 = vmatpush1.bf16.msra.mxu0 %v1108
  %1577 = vmatprep.subr.bf16.mxu0 0
  %1578 = vmatpush1.bf16.msra.mxu0 %v1107
  %1579 = vmatprep.subr.bf16.mxu0 0
  %1580 = vmatpush2.bf16.msra.mxu0 0
  %1581 = vmatprep.subr.bf16.mxu0 0
  %1582 = vmatpush2.bf16.msra.mxu0 0
  %1583 = vmatprep.subr.bf16.mxu0 0
  %1584 = vmatpush2.bf16.msra.mxu0 0
  %1585 = vmatprep.subr.bf16.mxu0 0
  %1586 = vmatpush2.bf16.msra.mxu0 0
  %1587 = vmatprep.subr.bf16.mxu0 0
  %1588 = vmatpush2.bf16.msra.mxu0 0
  %1589 = vmatprep.subr.bf16.mxu0 0
  %1590 = vmatpush2.bf16.msra.mxu0 0
  %1591 = vmatprep.subr.bf16.mxu0 0
  %1592 = vmatpush2.bf16.msra.mxu0 0
  %1593 = vmatprep.subr.bf16.mxu0 0
  %1594 = vmatpush2.bf16.msra.mxu0 0
  %1595 = vmatprep.mubr.bf16.mxu0 0
  %1596 = vmatmul.mubr.bf16.gmra.mxu0 %v1519
  %v1597 = vpop.f32.mrf.mxu0
  %v1598 = vadd.f32 0.0, %v1597
  %v1599 = vpop.f32.mrf.mxu0
  %v1600 = vpop.f32.mrf.mxu0
  %v1601 = vpop.f32.mrf.mxu0
  %1602 = vdwg.mxu0
  %v1603 = vadd.f32 %v1562, %v1598
  %v1604 = vtanh.pop %v1603
  %v1605 = vmul.f32 %v1604, %v45
  %v1606 = vadd.f32 %v1605, %v46
  %v1607 = vmul.f32 %v1606, %v1507
  %1609 = vrot.lane.b32.xlu0 %v1606, 32
  %v1610 = vpop.permute.xlu0 %1609
  %v1612 = vmul.f32 %v1606, %v1610
  %1614 = vrot.lane.b32.xlu0 %v1612, 32
  %v1615 = vpop.permute.xlu0 %1614
  %v1617 = vadd.f32 %v1607, %v1615
  %v1618 = vtanh.pop %v1617
  %1620 = vrot.lane.b32.xlu0 %v1618, 32
  %v1621 = vpop.permute.xlu0 %1620
  %v1623 = vmul.f32 %v1606, %v1621
  %v1624 = vpack.c.bf16 %v1623, %v1623
  %1626 = vrot.lane.b32.xlu0 %v1624, 64
  %v1627 = vpop.permute.xlu0 %1626
  %v1629 = vsel %vm188, %v1627, 0
  %1631 = vmatprep.subr.bf16.mxu0 0
  %1632 = vmatpush1.bf16.msra.mxu0 0
  %1633 = vmatprep.subr.bf16.mxu0 0
  %1634 = vmatpush1.bf16.msra.mxu0 0
  %1635 = vmatprep.subr.bf16.mxu0 0
  %1636 = vmatpush1.bf16.msra.mxu0 0
  %1637 = vmatprep.subr.bf16.mxu0 0
  %1638 = vmatpush1.bf16.msra.mxu0 0
  %1639 = vmatprep.subr.bf16.mxu0 0
  %1640 = vmatpush1.bf16.msra.mxu0 0
  %1641 = vmatprep.subr.bf16.mxu0 0
  %1642 = vmatpush1.bf16.msra.mxu0 0
  %1643 = vmatprep.subr.bf16.mxu0 0
  %1644 = vmatpush1.bf16.msra.mxu0 %v1185
  %1645 = vmatprep.subr.bf16.mxu0 0
  %1646 = vmatpush1.bf16.msra.mxu0 %v1184
  %1647 = vmatprep.subr.bf16.mxu0 0
  %1648 = vmatpush2.bf16.msra.mxu0 0
  %1649 = vmatprep.subr.bf16.mxu0 0
  %1650 = vmatpush2.bf16.msra.mxu0 0
  %1651 = vmatprep.subr.bf16.mxu0 0
  %1652 = vmatpush2.bf16.msra.mxu0 0
  %1653 = vmatprep.subr.bf16.mxu0 0
  %1654 = vmatpush2.bf16.msra.mxu0 0
  %1655 = vmatprep.subr.bf16.mxu0 0
  %1656 = vmatpush2.bf16.msra.mxu0 0
  %1657 = vmatprep.subr.bf16.mxu0 0
  %1658 = vmatpush2.bf16.msra.mxu0 0
  %1659 = vmatprep.subr.bf16.mxu0 0
  %1660 = vmatpush2.bf16.msra.mxu0 0
  %1661 = vmatprep.subr.bf16.mxu0 0
  %1662 = vmatpush2.bf16.msra.mxu0 0
  %1663 = vmatprep.mubr.bf16.mxu0 0
  %1664 = vmatmul.mubr.bf16.gmra.mxu0 %v1629
  %v1665 = vpop.f32.mrf.mxu0
  %v1666 = vadd.f32 %v1096, %v1665
  %v1667 = vpop.f32.mrf.mxu0
  %v1668 = vpop.f32.mrf.mxu0
  %v1669 = vpop.f32.mrf.mxu0
  %1670 = vdwg.mxu0
  %1671 = vst [vmem:[#allocation2 + $0x20] sm:$0xff] %v1666
  %v1672 = vld [vmem:[#allocation3 + $0x28] sm:$0xff]
  %1673 = vmatprep.subr.bf16.mxu0 0
  %1674 = vmatpush1.bf16.msra.mxu0 0
  %1675 = vmatprep.subr.bf16.mxu0 0
  %1676 = vmatpush1.bf16.msra.mxu0 0
  %1677 = vmatprep.subr.bf16.mxu0 0
  %1678 = vmatpush1.bf16.msra.mxu0 0
  %1679 = vmatprep.subr.bf16.mxu0 0
  %1680 = vmatpush1.bf16.msra.mxu0 0
  %1681 = vmatprep.subr.bf16.mxu0 0
  %1682 = vmatpush1.bf16.msra.mxu0 0
  %1683 = vmatprep.subr.bf16.mxu0 0
  %1684 = vmatpush1.bf16.msra.mxu0 0
  %1685 = vmatprep.subr.bf16.mxu0 0
  %1686 = vmatpush1.bf16.msra.mxu0 %v1108
  %1687 = vmatprep.subr.bf16.mxu0 0
  %1688 = vmatpush1.bf16.msra.mxu0 %v1107
  %1689 = vmatprep.subr.bf16.mxu0 0
  %1690 = vmatpush2.bf16.msra.mxu0 0
  %1691 = vmatprep.subr.bf16.mxu0 0
  %1692 = vmatpush2.bf16.msra.mxu0 0
  %1693 = vmatprep.subr.bf16.mxu0 0
  %1694 = vmatpush2.bf16.msra.mxu0 0
  %1695 = vmatprep.subr.bf16.mxu0 0
  %1696 = vmatpush2.bf16.msra.mxu0 0
  %1697 = vmatprep.subr.bf16.mxu0 0
  %1698 = vmatpush2.bf16.msra.mxu0 0
  %1699 = vmatprep.subr.bf16.mxu0 0
  %1700 = vmatpush2.bf16.msra.mxu0 0
  %1701 = vmatprep.subr.bf16.mxu0 0
  %1702 = vmatpush2.bf16.msra.mxu0 0
  %1703 = vmatprep.subr.bf16.mxu0 0
  %1704 = vmatpush2.bf16.msra.mxu0 0
  %1705 = vmatprep.mubr.bf16.mxu0 0
  %1706 = vmatmul.mubr.bf16.gmra.mxu0 %v1629
  %v1707 = vpop.f32.mrf.mxu0
  %v1708 = vadd.f32 0.0, %v1707
  %v1709 = vpop.f32.mrf.mxu0
  %v1710 = vpop.f32.mrf.mxu0
  %v1711 = vpop.f32.mrf.mxu0
  %1712 = vdwg.mxu0
  %v1713 = vadd.f32 %v1672, %v1708
  %v1714 = vtanh.pop %v1713
  %v1715 = vmul.f32 %v1714, %v45
  %v1716 = vadd.f32 %v1715, %v46
  %v1717 = vmul.f32 %v1716, %v1617
  %1719 = vrot.lane.b32.xlu0 %v1716, 32
  %v1720 = vpop.permute.xlu0 %1719
  %v1722 = vmul.f32 %v1716, %v1720
  %1724 = vrot.lane.b32.xlu0 %v1722, 32
  %v1725 = vpop.permute.xlu0 %1724
  %v1727 = vadd.f32 %v1717, %v1725
  %v1728 = vtanh.pop %v1727
  %1730 = vrot.lane.b32.xlu0 %v1728, 32
  %v1731 = vpop.permute.xlu0 %1730
  %v1733 = vmul.f32 %v1716, %v1731
  %v1734 = vpack.c.bf16 %v1733, %v1733
  %1736 = vrot.lane.b32.xlu0 %v1734, 64
  %v1737 = vpop.permute.xlu0 %1736
  %v1739 = vsel %vm188, %v1737, 0
  %1741 = vmatprep.subr.bf16.mxu0 0
  %1742 = vmatpush1.bf16.msra.mxu0 0
  %1743 = vmatprep.subr.bf16.mxu0 0
  %1744 = vmatpush1.bf16.msra.mxu0 0
  %1745 = vmatprep.subr.bf16.mxu0 0
  %1746 = vmatpush1.bf16.msra.mxu0 0
  %1747 = vmatprep.subr.bf16.mxu0 0
  %1748 = vmatpush1.bf16.msra.mxu0 0
  %1749 = vmatprep.subr.bf16.mxu0 0
  %1750 = vmatpush1.bf16.msra.mxu0 0
  %1751 = vmatprep.subr.bf16.mxu0 0
  %1752 = vmatpush1.bf16.msra.mxu0 0
  %1753 = vmatprep.subr.bf16.mxu0 0
  %1754 = vmatpush1.bf16.msra.mxu0 %v1185
  %1755 = vmatprep.subr.bf16.mxu0 0
  %1756 = vmatpush1.bf16.msra.mxu0 %v1184
  %1757 = vmatprep.subr.bf16.mxu0 0
  %1758 = vmatpush2.bf16.msra.mxu0 0
  %1759 = vmatprep.subr.bf16.mxu0 0
  %1760 = vmatpush2.bf16.msra.mxu0 0
  %1761 = vmatprep.subr.bf16.mxu0 0
  %1762 = vmatpush2.bf16.msra.mxu0 0
  %1763 = vmatprep.subr.bf16.mxu0 0
  %1764 = vmatpush2.bf16.msra.mxu0 0
  %1765 = vmatprep.subr.bf16.mxu0 0
  %1766 = vmatpush2.bf16.msra.mxu0 0
  %1767 = vmatprep.subr.bf16.mxu0 0
  %1768 = vmatpush2.bf16.msra.mxu0 0
  %1769 = vmatprep.subr.bf16.mxu0 0
  %1770 = vmatpush2.bf16.msra.mxu0 0
  %1771 = vmatprep.subr.bf16.mxu0 0
  %1772 = vmatpush2.bf16.msra.mxu0 0
  %1773 = vmatprep.mubr.bf16.mxu0 0
  %1774 = vmatmul.mubr.bf16.gmra.mxu0 %v1739
  %v1775 = vpop.f32.mrf.mxu0
  %v1776 = vadd.f32 %v1096, %v1775
  %v1777 = vpop.f32.mrf.mxu0
  %v1778 = vpop.f32.mrf.mxu0
  %v1779 = vpop.f32.mrf.mxu0
  %1780 = vdwg.mxu0
  %1781 = vst [vmem:[#allocation2 + $0x28] sm:$0xff] %v1776
  %v1782 = vld [vmem:[#allocation3 + $0x30] sm:$0xff]
  %1783 = vmatprep.subr.bf16.mxu0 0
  %1784 = vmatpush1.bf16.msra.mxu0 0
  %1785 = vmatprep.subr.bf16.mxu0 0
  %1786 = vmatpush1.bf16.msra.mxu0 0
  %1787 = vmatprep.subr.bf16.mxu0 0
  %1788 = vmatpush1.bf16.msra.mxu0 0
  %1789 = vmatprep.subr.bf16.mxu0 0
  %1790 = vmatpush1.bf16.msra.mxu0 0
  %1791 = vmatprep.subr.bf16.mxu0 0
  %1792 = vmatpush1.bf16.msra.mxu0 0
  %1793 = vmatprep.subr.bf16.mxu0 0
  %1794 = vmatpush1.bf16.msra.mxu0 0
  %1795 = vmatprep.subr.bf16.mxu0 0
  %1796 = vmatpush1.bf16.msra.mxu0 %v1108
  %1797 = vmatprep.subr.bf16.mxu0 0
  %1798 = vmatpush1.bf16.msra.mxu0 %v1107
  %1799 = vmatprep.subr.bf16.mxu0 0
  %1800 = vmatpush2.bf16.msra.mxu0 0
  %1801 = vmatprep.subr.bf16.mxu0 0
  %1802 = vmatpush2.bf16.msra.mxu0 0
  %1803 = vmatprep.subr.bf16.mxu0 0
  %1804 = vmatpush2.bf16.msra.mxu0 0
  %1805 = vmatprep.subr.bf16.mxu0 0
  %1806 = vmatpush2.bf16.msra.mxu0 0
  %1807 = vmatprep.subr.bf16.mxu0 0
  %1808 = vmatpush2.bf16.msra.mxu0 0
  %1809 = vmatprep.subr.bf16.mxu0 0
  %1810 = vmatpush2.bf16.msra.mxu0 0
  %1811 = vmatprep.subr.bf16.mxu0 0
  %1812 = vmatpush2.bf16.msra.mxu0 0
  %1813 = vmatprep.subr.bf16.mxu0 0
  %1814 = vmatpush2.bf16.msra.mxu0 0
  %1815 = vmatprep.mubr.bf16.mxu0 0
  %1816 = vmatmul.mubr.bf16.gmra.mxu0 %v1739
  %v1817 = vpop.f32.mrf.mxu0
  %v1818 = vadd.f32 0.0, %v1817
  %v1819 = vpop.f32.mrf.mxu0
  %v1820 = vpop.f32.mrf.mxu0
  %v1821 = vpop.f32.mrf.mxu0
  %1822 = vdwg.mxu0
  %v1823 = vadd.f32 %v1782, %v1818
  %v1824 = vtanh.pop %v1823
  %v1825 = vmul.f32 %v1824, %v45
  %v1826 = vadd.f32 %v1825, %v46
  %v1827 = vmul.f32 %v1826, %v1727
  %1829 = vrot.lane.b32.xlu0 %v1826, 32
  %v1830 = vpop.permute.xlu0 %1829
  %v1832 = vmul.f32 %v1826, %v1830
  %1834 = vrot.lane.b32.xlu0 %v1832, 32
  %v1835 = vpop.permute.xlu0 %1834
  %v1837 = vadd.f32 %v1827, %v1835
  %v1838 = vtanh.pop %v1837
  %1840 = vrot.lane.b32.xlu0 %v1838, 32
  %v1841 = vpop.permute.xlu0 %1840
  %v1843 = vmul.f32 %v1826, %v1841
  %v1844 = vpack.c.bf16 %v1843, %v1843
  %1846 = vrot.lane.b32.xlu0 %v1844, 64
  %v1847 = vpop.permute.xlu0 %1846
  %v1849 = vsel %vm188, %v1847, 0
  %1851 = vmatprep.subr.bf16.mxu0 0
  %1852 = vmatpush1.bf16.msra.mxu0 0
  %1853 = vmatprep.subr.bf16.mxu0 0
  %1854 = vmatpush1.bf16.msra.mxu0 0
  %1855 = vmatprep.subr.bf16.mxu0 0
  %1856 = vmatpush1.bf16.msra.mxu0 0
  %1857 = vmatprep.subr.bf16.mxu0 0
  %1858 = vmatpush1.bf16.msra.mxu0 0
  %1859 = vmatprep.subr.bf16.mxu0 0
  %1860 = vmatpush1.bf16.msra.mxu0 0
  %1861 = vmatprep.subr.bf16.mxu0 0
  %1862 = vmatpush1.bf16.msra.mxu0 0
  %1863 = vmatprep.subr.bf16.mxu0 0
  %1864 = vmatpush1.bf16.msra.mxu0 %v1185
  %1865 = vmatprep.subr.bf16.mxu0 0
  %1866 = vmatpush1.bf16.msra.mxu0 %v1184
  %1867 = vmatprep.subr.bf16.mxu0 0
  %1868 = vmatpush2.bf16.msra.mxu0 0
  %1869 = vmatprep.subr.bf16.mxu0 0
  %1870 = vmatpush2.bf16.msra.mxu0 0
  %1871 = vmatprep.subr.bf16.mxu0 0
  %1872 = vmatpush2.bf16.msra.mxu0 0
  %1873 = vmatprep.subr.bf16.mxu0 0
  %1874 = vmatpush2.bf16.msra.mxu0 0
  %1875 = vmatprep.subr.bf16.mxu0 0
  %1876 = vmatpush2.bf16.msra.mxu0 0
  %1877 = vmatprep.subr.bf16.mxu0 0
  %1878 = vmatpush2.bf16.msra.mxu0 0
  %1879 = vmatprep.subr.bf16.mxu0 0
  %1880 = vmatpush2.bf16.msra.mxu0 0
  %1881 = vmatprep.subr.bf16.mxu0 0
  %1882 = vmatpush2.bf16.msra.mxu0 0
  %1883 = vmatprep.mubr.bf16.mxu0 0
  %1884 = vmatmul.mubr.bf16.gmra.mxu0 %v1849
  %v1885 = vpop.f32.mrf.mxu0
  %v1886 = vadd.f32 %v1096, %v1885
  %v1887 = vpop.f32.mrf.mxu0
  %v1888 = vpop.f32.mrf.mxu0
  %v1889 = vpop.f32.mrf.mxu0
  %1890 = vdwg.mxu0
  %1891 = vst [vmem:[#allocation2 + $0x30] sm:$0xff] %v1886
  %v1892 = vld [vmem:[#allocation3 + $0x38] sm:$0xff]
  %1893 = vmatprep.subr.bf16.mxu0 0
  %1894 = vmatpush1.bf16.msra.mxu0 0
  %1895 = vmatprep.subr.bf16.mxu0 0
  %1896 = vmatpush1.bf16.msra.mxu0 0
  %1897 = vmatprep.subr.bf16.mxu0 0
  %1898 = vmatpush1.bf16.msra.mxu0 0
  %1899 = vmatprep.subr.bf16.mxu0 0
  %1900 = vmatpush1.bf16.msra.mxu0 0
  %1901 = vmatprep.subr.bf16.mxu0 0
  %1902 = vmatpush1.bf16.msra.mxu0 0
  %1903 = vmatprep.subr.bf16.mxu0 0
  %1904 = vmatpush1.bf16.msra.mxu0 0
  %1905 = vmatprep.subr.bf16.mxu0 0
  %1906 = vmatpush1.bf16.msra.mxu0 %v1108
  %1907 = vmatprep.subr.bf16.mxu0 0
  %1908 = vmatpush1.bf16.msra.mxu0 %v1107
  %1909 = vmatprep.subr.bf16.mxu0 0
  %1910 = vmatpush2.bf16.msra.mxu0 0
  %1911 = vmatprep.subr.bf16.mxu0 0
  %1912 = vmatpush2.bf16.msra.mxu0 0
  %1913 = vmatprep.subr.bf16.mxu0 0
  %1914 = vmatpush2.bf16.msra.mxu0 0
  %1915 = vmatprep.subr.bf16.mxu0 0
  %1916 = vmatpush2.bf16.msra.mxu0 0
  %1917 = vmatprep.subr.bf16.mxu0 0
  %1918 = vmatpush2.bf16.msra.mxu0 0
  %1919 = vmatprep.subr.bf16.mxu0 0
  %1920 = vmatpush2.bf16.msra.mxu0 0
  %1921 = vmatprep.subr.bf16.mxu0 0
  %1922 = vmatpush2.bf16.msra.mxu0 0
  %1923 = vmatprep.subr.bf16.mxu0 0
  %1924 = vmatpush2.bf16.msra.mxu0 0
  %1925 = vmatprep.mubr.bf16.mxu0 0
  %1926 = vmatmul.mubr.bf16.gmra.mxu0 %v1849
  %v1927 = vpop.f32.mrf.mxu0
  %v1928 = vadd.f32 0.0, %v1927
  %v1929 = vpop.f32.mrf.mxu0
  %v1930 = vpop.f32.mrf.mxu0
  %v1931 = vpop.f32.mrf.mxu0
  %1932 = vdwg.mxu0
  %v1933 = vadd.f32 %v1892, %v1928
  %v1934 = vtanh.pop %v1933
  %v1935 = vmul.f32 %v1934, %v45
  %v1936 = vadd.f32 %v1935, %v46
  %v1937 = vmul.f32 %v1936, %v1837
  %1939 = vrot.lane.b32.xlu0 %v1936, 32
  %v1940 = vpop.permute.xlu0 %1939
  %v1942 = vmul.f32 %v1936, %v1940
  %1944 = vrot.lane.b32.xlu0 %v1942, 32
  %v1945 = vpop.permute.xlu0 %1944
  %v1947 = vadd.f32 %v1937, %v1945
  %v1948 = vtanh.pop %v1947
  %1950 = vrot.lane.b32.xlu0 %v1948, 32
  %v1951 = vpop.permute.xlu0 %1950
  %v1953 = vmul.f32 %v1936, %v1951
  %v1954 = vpack.c.bf16 %v1953, %v1953
  %1956 = vrot.lane.b32.xlu0 %v1954, 64
  %v1957 = vpop.permute.xlu0 %1956
  %v1959 = vsel %vm188, %v1957, 0
  %1961 = vmatprep.subr.bf16.mxu0 0
  %1962 = vmatpush1.bf16.msra.mxu0 0
  %1963 = vmatprep.subr.bf16.mxu0 0
  %1964 = vmatpush1.bf16.msra.mxu0 0
  %1965 = vmatprep.subr.bf16.mxu0 0
  %1966 = vmatpush1.bf16.msra.mxu0 0
  %1967 = vmatprep.subr.bf16.mxu0 0
  %1968 = vmatpush1.bf16.msra.mxu0 0
  %1969 = vmatprep.subr.bf16.mxu0 0
  %1970 = vmatpush1.bf16.msra.mxu0 0
  %1971 = vmatprep.subr.bf16.mxu0 0
  %1972 = vmatpush1.bf16.msra.mxu0 0
  %1973 = vmatprep.subr.bf16.mxu0 0
  %1974 = vmatpush1.bf16.msra.mxu0 %v1185
  %1975 = vmatprep.subr.bf16.mxu0 0
  %1976 = vmatpush1.bf16.msra.mxu0 %v1184
  %1977 = vmatprep.subr.bf16.mxu0 0
  %1978 = vmatpush2.bf16.msra.mxu0 0
  %1979 = vmatprep.subr.bf16.mxu0 0
  %1980 = vmatpush2.bf16.msra.mxu0 0
  %1981 = vmatprep.subr.bf16.mxu0 0
  %1982 = vmatpush2.bf16.msra.mxu0 0
  %1983 = vmatprep.subr.bf16.mxu0 0
  %1984 = vmatpush2.bf16.msra.mxu0 0
  %1985 = vmatprep.subr.bf16.mxu0 0
  %1986 = vmatpush2.bf16.msra.mxu0 0
  %1987 = vmatprep.subr.bf16.mxu0 0
  %1988 = vmatpush2.bf16.msra.mxu0 0
  %1989 = vmatprep.subr.bf16.mxu0 0
  %1990 = vmatpush2.bf16.msra.mxu0 0
  %1991 = vmatprep.subr.bf16.mxu0 0
  %1992 = vmatpush2.bf16.msra.mxu0 0
  %1993 = vmatprep.mubr.bf16.mxu0 0
  %1994 = vmatmul.mubr.bf16.gmra.mxu0 %v1959
  %v1995 = vpop.f32.mrf.mxu0
  %v1996 = vadd.f32 %v1096, %v1995
  %v1997 = vpop.f32.mrf.mxu0
  %v1998 = vpop.f32.mrf.mxu0
  %v1999 = vpop.f32.mrf.mxu0
  %2000 = vdwg.mxu0
  %2001 = vst [vmem:[#allocation2 + $0x38] sm:$0xff] %v1996
  %v2002 = vld [vmem:[%s8] sm:$0xf]
  %v2003 = vld [vmem:[%s8 + $0x4] sm:$0xf]
  %v2004 = vld [vmem:[%s8 + $0x8] sm:$0xf]
  %v2005 = vld [vmem:[%s8 + $0xc] sm:$0xf]
  %v2006 = vld [vmem:[#allocation2] sm:$0xff]
  %v2011 = vunpack.c.l.b16 %v2002
  %v2012 = vunpack.c.l.b16 %v2003
  %v2013 = vunpack.c.l.b16 %v2004
  %v2014 = vunpack.c.l.b16 %v2005
  %v2015 = vpack.c.b16 %v2012, %v2011
  %v2016 = vpack.c.b16 %v2014, %v2013
  %2019 = vmatprep.subr.bf16.mxu0 0
  %2020 = vmatpush1.bf16.msra.mxu0 0
  %2021 = vmatprep.subr.bf16.mxu0 0
  %2022 = vmatpush1.bf16.msra.mxu0 0
  %2023 = vmatprep.subr.bf16.mxu0 0
  %2024 = vmatpush1.bf16.msra.mxu0 0
  %2025 = vmatprep.subr.bf16.mxu0 0
  %2026 = vmatpush1.bf16.msra.mxu0 0
  %2027 = vmatprep.subr.bf16.mxu0 0
  %2028 = vmatpush1.bf16.msra.mxu0 0
  %2029 = vmatprep.subr.bf16.mxu0 0
  %2030 = vmatpush1.bf16.msra.mxu0 0
  %2031 = vmatprep.subr.bf16.mxu0 0
  %2032 = vmatpush1.bf16.msra.mxu0 %v2016
  %2033 = vmatprep.subr.bf16.mxu0 0
  %2034 = vmatpush1.bf16.msra.mxu0 %v2015
  %2035 = vmatprep.subr.bf16.mxu0 0
  %2036 = vmatpush2.bf16.msra.mxu0 0
  %2037 = vmatprep.subr.bf16.mxu0 0
  %2038 = vmatpush2.bf16.msra.mxu0 0
  %2039 = vmatprep.subr.bf16.mxu0 0
  %2040 = vmatpush2.bf16.msra.mxu0 0
  %2041 = vmatprep.subr.bf16.mxu0 0
  %2042 = vmatpush2.bf16.msra.mxu0 0
  %2043 = vmatprep.subr.bf16.mxu0 0
  %2044 = vmatpush2.bf16.msra.mxu0 0
  %2045 = vmatprep.subr.bf16.mxu0 0
  %2046 = vmatpush2.bf16.msra.mxu0 0
  %2047 = vmatprep.subr.bf16.mxu0 0
  %2048 = vmatpush2.bf16.msra.mxu0 0
  %2049 = vmatprep.subr.bf16.mxu0 0
  %2050 = vmatpush2.bf16.msra.mxu0 0
  %2051 = vmatprep.mubr.bf16.mxu0 0
  %2052 = vmatmul.mubr.bf16.gmra.mxu0 %v190
  %v2053 = vpop.f32.mrf.mxu0
  %v2054 = vadd.f32 0.0, %v2053
  %v2055 = vpop.f32.mrf.mxu0
  %v2056 = vpop.f32.mrf.mxu0
  %v2057 = vpop.f32.mrf.mxu0
  %2058 = vdwg.mxu0
  %v2059 = vadd.f32 %v2006, %v2054
  %v2060 = vtanh.pop %v2059
  %v2061 = vmul.f32 %v2060, %v45
  %v2062 = vadd.f32 %v2061, %v46
  %v2063 = vmul.f32 %v2062, 0.0
  %2065 = vrot.lane.b32.xlu0 %v2062, 32
  %v2066 = vpop.permute.xlu0 %2065
  %v2068 = vmul.f32 %v2062, %v2066
  %2070 = vrot.lane.b32.xlu0 %v2068, 32
  %v2071 = vpop.permute.xlu0 %2070
  %v2073 = vadd.f32 %v2063, %v2071
  %v2074 = vtanh.pop %v2073
  %2076 = vrot.lane.b32.xlu0 %v2074, 32
  %v2077 = vpop.permute.xlu0 %2076
  %v2079 = vmul.f32 %v2062, %v2077
  %v2080 = vpack.c.bf16 %v2079, %v2079
  %v2081 = vld [vmem:[#allocation2 + $0x8] sm:$0xff]
  %2083 = vrot.lane.b32.xlu0 %v2080, 64
  %v2084 = vpop.permute.xlu0 %2083
  %v2086 = vsel %vm188, %v2084, 0
  %2088 = vmatprep.subr.bf16.mxu0 0
  %2089 = vmatpush1.bf16.msra.mxu0 0
  %2090 = vmatprep.subr.bf16.mxu0 0
  %2091 = vmatpush1.bf16.msra.mxu0 0
  %2092 = vmatprep.subr.bf16.mxu0 0
  %2093 = vmatpush1.bf16.msra.mxu0 0
  %2094 = vmatprep.subr.bf16.mxu0 0
  %2095 = vmatpush1.bf16.msra.mxu0 0
  %2096 = vmatprep.subr.bf16.mxu0 0
  %2097 = vmatpush1.bf16.msra.mxu0 0
  %2098 = vmatprep.subr.bf16.mxu0 0
  %2099 = vmatpush1.bf16.msra.mxu0 0
  %2100 = vmatprep.subr.bf16.mxu0 0
  %2101 = vmatpush1.bf16.msra.mxu0 %v2016
  %2102 = vmatprep.subr.bf16.mxu0 0
  %2103 = vmatpush1.bf16.msra.mxu0 %v2015
  %2104 = vmatprep.subr.bf16.mxu0 0
  %2105 = vmatpush2.bf16.msra.mxu0 0
  %2106 = vmatprep.subr.bf16.mxu0 0
  %2107 = vmatpush2.bf16.msra.mxu0 0
  %2108 = vmatprep.subr.bf16.mxu0 0
  %2109 = vmatpush2.bf16.msra.mxu0 0
  %2110 = vmatprep.subr.bf16.mxu0 0
  %2111 = vmatpush2.bf16.msra.mxu0 0
  %2112 = vmatprep.subr.bf16.mxu0 0
  %2113 = vmatpush2.bf16.msra.mxu0 0
  %2114 = vmatprep.subr.bf16.mxu0 0
  %2115 = vmatpush2.bf16.msra.mxu0 0
  %2116 = vmatprep.subr.bf16.mxu0 0
  %2117 = vmatpush2.bf16.msra.mxu0 0
  %2118 = vmatprep.subr.bf16.mxu0 0
  %2119 = vmatpush2.bf16.msra.mxu0 0
  %2120 = vmatprep.mubr.bf16.mxu0 0
  %2121 = vmatmul.mubr.bf16.gmra.mxu0 %v2086
  %v2122 = vpop.f32.mrf.mxu0
  %v2123 = vadd.f32 0.0, %v2122
  %v2124 = vpop.f32.mrf.mxu0
  %v2125 = vpop.f32.mrf.mxu0
  %v2126 = vpop.f32.mrf.mxu0
  %2127 = vdwg.mxu0
  %v2128 = vadd.f32 %v2081, %v2123
  %v2129 = vtanh.pop %v2128
  %v2130 = vmul.f32 %v2129, %v45
  %v2131 = vadd.f32 %v2130, %v46
  %v2132 = vmul.f32 %v2131, %v2073
  %2134 = vrot.lane.b32.xlu0 %v2131, 32
  %v2135 = vpop.permute.xlu0 %2134
  %v2137 = vmul.f32 %v2131, %v2135
  %2139 = vrot.lane.b32.xlu0 %v2137, 32
  %v2140 = vpop.permute.xlu0 %2139
  %v2142 = vadd.f32 %v2132, %v2140
  %v2143 = vtanh.pop %v2142
  %2145 = vrot.lane.b32.xlu0 %v2143, 32
  %v2146 = vpop.permute.xlu0 %2145
  %v2148 = vmul.f32 %v2131, %v2146
  %v2149 = vpack.c.bf16 %v2148, %v2148
  %v2150 = vld [vmem:[#allocation2 + $0x10] sm:$0xff]
  %2152 = vrot.lane.b32.xlu0 %v2149, 64
  %v2153 = vpop.permute.xlu0 %2152
  %v2155 = vsel %vm188, %v2153, 0
  %2157 = vmatprep.subr.bf16.mxu0 0
  %2158 = vmatpush1.bf16.msra.mxu0 0
  %2159 = vmatprep.subr.bf16.mxu0 0
  %2160 = vmatpush1.bf16.msra.mxu0 0
  %2161 = vmatprep.subr.bf16.mxu0 0
  %2162 = vmatpush1.bf16.msra.mxu0 0
  %2163 = vmatprep.subr.bf16.mxu0 0
  %2164 = vmatpush1.bf16.msra.mxu0 0
  %2165 = vmatprep.subr.bf16.mxu0 0
  %2166 = vmatpush1.bf16.msra.mxu0 0
  %2167 = vmatprep.subr.bf16.mxu0 0
  %2168 = vmatpush1.bf16.msra.mxu0 0
  %2169 = vmatprep.subr.bf16.mxu0 0
  %2170 = vmatpush1.bf16.msra.mxu0 %v2016
  %2171 = vmatprep.subr.bf16.mxu0 0
  %2172 = vmatpush1.bf16.msra.mxu0 %v2015
  %2173 = vmatprep.subr.bf16.mxu0 0
  %2174 = vmatpush2.bf16.msra.mxu0 0
  %2175 = vmatprep.subr.bf16.mxu0 0
  %2176 = vmatpush2.bf16.msra.mxu0 0
  %2177 = vmatprep.subr.bf16.mxu0 0
  %2178 = vmatpush2.bf16.msra.mxu0 0
  %2179 = vmatprep.subr.bf16.mxu0 0
  %2180 = vmatpush2.bf16.msra.mxu0 0
  %2181 = vmatprep.subr.bf16.mxu0 0
  %2182 = vmatpush2.bf16.msra.mxu0 0
  %2183 = vmatprep.subr.bf16.mxu0 0
  %2184 = vmatpush2.bf16.msra.mxu0 0
  %2185 = vmatprep.subr.bf16.mxu0 0
  %2186 = vmatpush2.bf16.msra.mxu0 0
  %2187 = vmatprep.subr.bf16.mxu0 0
  %2188 = vmatpush2.bf16.msra.mxu0 0
  %2189 = vmatprep.mubr.bf16.mxu0 0
  %2190 = vmatmul.mubr.bf16.gmra.mxu0 %v2155
  %v2191 = vpop.f32.mrf.mxu0
  %v2192 = vadd.f32 0.0, %v2191
  %v2193 = vpop.f32.mrf.mxu0
  %v2194 = vpop.f32.mrf.mxu0
  %v2195 = vpop.f32.mrf.mxu0
  %2196 = vdwg.mxu0
  %v2197 = vadd.f32 %v2150, %v2192
  %v2198 = vtanh.pop %v2197
  %v2199 = vmul.f32 %v2198, %v45
  %v2200 = vadd.f32 %v2199, %v46
  %v2201 = vmul.f32 %v2200, %v2142
  %2203 = vrot.lane.b32.xlu0 %v2200, 32
  %v2204 = vpop.permute.xlu0 %2203
  %v2206 = vmul.f32 %v2200, %v2204
  %2208 = vrot.lane.b32.xlu0 %v2206, 32
  %v2209 = vpop.permute.xlu0 %2208
  %v2211 = vadd.f32 %v2201, %v2209
  %v2212 = vtanh.pop %v2211
  %2214 = vrot.lane.b32.xlu0 %v2212, 32
  %v2215 = vpop.permute.xlu0 %2214
  %v2217 = vmul.f32 %v2200, %v2215
  %v2218 = vpack.c.bf16 %v2217, %v2217
  %v2219 = vld [vmem:[#allocation2 + $0x18] sm:$0xff]
  %2221 = vrot.lane.b32.xlu0 %v2218, 64
  %v2222 = vpop.permute.xlu0 %2221
  %v2224 = vsel %vm188, %v2222, 0
  %2226 = vmatprep.subr.bf16.mxu0 0
  %2227 = vmatpush1.bf16.msra.mxu0 0
  %2228 = vmatprep.subr.bf16.mxu0 0
  %2229 = vmatpush1.bf16.msra.mxu0 0
  %2230 = vmatprep.subr.bf16.mxu0 0
  %2231 = vmatpush1.bf16.msra.mxu0 0
  %2232 = vmatprep.subr.bf16.mxu0 0
  %2233 = vmatpush1.bf16.msra.mxu0 0
  %2234 = vmatprep.subr.bf16.mxu0 0
  %2235 = vmatpush1.bf16.msra.mxu0 0
  %2236 = vmatprep.subr.bf16.mxu0 0
  %2237 = vmatpush1.bf16.msra.mxu0 0
  %2238 = vmatprep.subr.bf16.mxu0 0
  %2239 = vmatpush1.bf16.msra.mxu0 %v2016
  %2240 = vmatprep.subr.bf16.mxu0 0
  %2241 = vmatpush1.bf16.msra.mxu0 %v2015
  %2242 = vmatprep.subr.bf16.mxu0 0
  %2243 = vmatpush2.bf16.msra.mxu0 0
  %2244 = vmatprep.subr.bf16.mxu0 0
  %2245 = vmatpush2.bf16.msra.mxu0 0
  %2246 = vmatprep.subr.bf16.mxu0 0
  %2247 = vmatpush2.bf16.msra.mxu0 0
  %2248 = vmatprep.subr.bf16.mxu0 0
  %2249 = vmatpush2.bf16.msra.mxu0 0
  %2250 = vmatprep.subr.bf16.mxu0 0
  %2251 = vmatpush2.bf16.msra.mxu0 0
  %2252 = vmatprep.subr.bf16.mxu0 0
  %2253 = vmatpush2.bf16.msra.mxu0 0
  %2254 = vmatprep.subr.bf16.mxu0 0
  %2255 = vmatpush2.bf16.msra.mxu0 0
  %2256 = vmatprep.subr.bf16.mxu0 0
  %2257 = vmatpush2.bf16.msra.mxu0 0
  %2258 = vmatprep.mubr.bf16.mxu0 0
  %2259 = vmatmul.mubr.bf16.gmra.mxu0 %v2224
  %v2260 = vpop.f32.mrf.mxu0
  %v2261 = vadd.f32 0.0, %v2260
  %v2262 = vpop.f32.mrf.mxu0
  %v2263 = vpop.f32.mrf.mxu0
  %v2264 = vpop.f32.mrf.mxu0
  %2265 = vdwg.mxu0
  %v2266 = vadd.f32 %v2219, %v2261
  %v2267 = vtanh.pop %v2266
  %v2268 = vmul.f32 %v2267, %v45
  %v2269 = vadd.f32 %v2268, %v46
  %v2270 = vmul.f32 %v2269, %v2211
  %2272 = vrot.lane.b32.xlu0 %v2269, 32
  %v2273 = vpop.permute.xlu0 %2272
  %v2275 = vmul.f32 %v2269, %v2273
  %2277 = vrot.lane.b32.xlu0 %v2275, 32
  %v2278 = vpop.permute.xlu0 %2277
  %v2280 = vadd.f32 %v2270, %v2278
  %v2281 = vtanh.pop %v2280
  %2283 = vrot.lane.b32.xlu0 %v2281, 32
  %v2284 = vpop.permute.xlu0 %2283
  %v2286 = vmul.f32 %v2269, %v2284
  %v2287 = vpack.c.bf16 %v2286, %v2286
  %v2288 = vld [vmem:[#allocation2 + $0x20] sm:$0xff]
  %2290 = vrot.lane.b32.xlu0 %v2287, 64
  %v2291 = vpop.permute.xlu0 %2290
  %v2293 = vsel %vm188, %v2291, 0
  %2295 = vmatprep.subr.bf16.mxu0 0
  %2296 = vmatpush1.bf16.msra.mxu0 0
  %2297 = vmatprep.subr.bf16.mxu0 0
  %2298 = vmatpush1.bf16.msra.mxu0 0
  %2299 = vmatprep.subr.bf16.mxu0 0
  %2300 = vmatpush1.bf16.msra.mxu0 0
  %2301 = vmatprep.subr.bf16.mxu0 0
  %2302 = vmatpush1.bf16.msra.mxu0 0
  %2303 = vmatprep.subr.bf16.mxu0 0
  %2304 = vmatpush1.bf16.msra.mxu0 0
  %2305 = vmatprep.subr.bf16.mxu0 0
  %2306 = vmatpush1.bf16.msra.mxu0 0
  %2307 = vmatprep.subr.bf16.mxu0 0
  %2308 = vmatpush1.bf16.msra.mxu0 %v2016
  %2309 = vmatprep.subr.bf16.mxu0 0
  %2310 = vmatpush1.bf16.msra.mxu0 %v2015
  %2311 = vmatprep.subr.bf16.mxu0 0
  %2312 = vmatpush2.bf16.msra.mxu0 0
  %2313 = vmatprep.subr.bf16.mxu0 0
  %2314 = vmatpush2.bf16.msra.mxu0 0
  %2315 = vmatprep.subr.bf16.mxu0 0
  %2316 = vmatpush2.bf16.msra.mxu0 0
  %2317 = vmatprep.subr.bf16.mxu0 0
  %2318 = vmatpush2.bf16.msra.mxu0 0
  %2319 = vmatprep.subr.bf16.mxu0 0
  %2320 = vmatpush2.bf16.msra.mxu0 0
  %2321 = vmatprep.subr.bf16.mxu0 0
  %2322 = vmatpush2.bf16.msra.mxu0 0
  %2323 = vmatprep.subr.bf16.mxu0 0
  %2324 = vmatpush2.bf16.msra.mxu0 0
  %2325 = vmatprep.subr.bf16.mxu0 0
  %2326 = vmatpush2.bf16.msra.mxu0 0
  %2327 = vmatprep.mubr.bf16.mxu0 0
  %2328 = vmatmul.mubr.bf16.gmra.mxu0 %v2293
  %v2329 = vpop.f32.mrf.mxu0
  %v2330 = vadd.f32 0.0, %v2329
  %v2331 = vpop.f32.mrf.mxu0
  %v2332 = vpop.f32.mrf.mxu0
  %v2333 = vpop.f32.mrf.mxu0
  %2334 = vdwg.mxu0
  %v2335 = vadd.f32 %v2288, %v2330
  %v2336 = vtanh.pop %v2335
  %v2337 = vmul.f32 %v2336, %v45
  %v2338 = vadd.f32 %v2337, %v46
  %v2339 = vmul.f32 %v2338, %v2280
  %2341 = vrot.lane.b32.xlu0 %v2338, 32
  %v2342 = vpop.permute.xlu0 %2341
  %v2344 = vmul.f32 %v2338, %v2342
  %2346 = vrot.lane.b32.xlu0 %v2344, 32
  %v2347 = vpop.permute.xlu0 %2346
  %v2349 = vadd.f32 %v2339, %v2347
  %v2350 = vtanh.pop %v2349
  %2352 = vrot.lane.b32.xlu0 %v2350, 32
  %v2353 = vpop.permute.xlu0 %2352
  %v2355 = vmul.f32 %v2338, %v2353
  %v2356 = vpack.c.bf16 %v2355, %v2355
  %v2357 = vld [vmem:[#allocation2 + $0x28] sm:$0xff]
  %2359 = vrot.lane.b32.xlu0 %v2356, 64
  %v2360 = vpop.permute.xlu0 %2359
  %v2362 = vsel %vm188, %v2360, 0
  %2364 = vmatprep.subr.bf16.mxu0 0
  %2365 = vmatpush1.bf16.msra.mxu0 0
  %2366 = vmatprep.subr.bf16.mxu0 0
  %2367 = vmatpush1.bf16.msra.mxu0 0
  %2368 = vmatprep.subr.bf16.mxu0 0
  %2369 = vmatpush1.bf16.msra.mxu0 0
  %2370 = vmatprep.subr.bf16.mxu0 0
  %2371 = vmatpush1.bf16.msra.mxu0 0
  %2372 = vmatprep.subr.bf16.mxu0 0
  %2373 = vmatpush1.bf16.msra.mxu0 0
  %2374 = vmatprep.subr.bf16.mxu0 0
  %2375 = vmatpush1.bf16.msra.mxu0 0
  %2376 = vmatprep.subr.bf16.mxu0 0
  %2377 = vmatpush1.bf16.msra.mxu0 %v2016
  %2378 = vmatprep.subr.bf16.mxu0 0
  %2379 = vmatpush1.bf16.msra.mxu0 %v2015
  %2380 = vmatprep.subr.bf16.mxu0 0
  %2381 = vmatpush2.bf16.msra.mxu0 0
  %2382 = vmatprep.subr.bf16.mxu0 0
  %2383 = vmatpush2.bf16.msra.mxu0 0
  %2384 = vmatprep.subr.bf16.mxu0 0
  %2385 = vmatpush2.bf16.msra.mxu0 0
  %2386 = vmatprep.subr.bf16.mxu0 0
  %2387 = vmatpush2.bf16.msra.mxu0 0
  %2388 = vmatprep.subr.bf16.mxu0 0
  %2389 = vmatpush2.bf16.msra.mxu0 0
  %2390 = vmatprep.subr.bf16.mxu0 0
  %2391 = vmatpush2.bf16.msra.mxu0 0
  %2392 = vmatprep.subr.bf16.mxu0 0
  %2393 = vmatpush2.bf16.msra.mxu0 0
  %2394 = vmatprep.subr.bf16.mxu0 0
  %2395 = vmatpush2.bf16.msra.mxu0 0
  %2396 = vmatprep.mubr.bf16.mxu0 0
  %2397 = vmatmul.mubr.bf16.gmra.mxu0 %v2362
  %v2398 = vpop.f32.mrf.mxu0
  %v2399 = vadd.f32 0.0, %v2398
  %v2400 = vpop.f32.mrf.mxu0
  %v2401 = vpop.f32.mrf.mxu0
  %v2402 = vpop.f32.mrf.mxu0
  %2403 = vdwg.mxu0
  %v2404 = vadd.f32 %v2357, %v2399
  %v2405 = vtanh.pop %v2404
  %v2406 = vmul.f32 %v2405, %v45
  %v2407 = vadd.f32 %v2406, %v46
  %v2408 = vmul.f32 %v2407, %v2349
  %2410 = vrot.lane.b32.xlu0 %v2407, 32
  %v2411 = vpop.permute.xlu0 %2410
  %v2413 = vmul.f32 %v2407, %v2411
  %2415 = vrot.lane.b32.xlu0 %v2413, 32
  %v2416 = vpop.permute.xlu0 %2415
  %v2418 = vadd.f32 %v2408, %v2416
  %v2419 = vtanh.pop %v2418
  %2421 = vrot.lane.b32.xlu0 %v2419, 32
  %v2422 = vpop.permute.xlu0 %2421
  %v2424 = vmul.f32 %v2407, %v2422
  %v2425 = vpack.c.bf16 %v2424, %v2424
  %v2426 = vld [vmem:[#allocation2 + $0x30] sm:$0xff]
  %2428 = vrot.lane.b32.xlu0 %v2425, 64
  %v2429 = vpop.permute.xlu0 %2428
  %v2431 = vsel %vm188, %v2429, 0
  %2433 = vmatprep.subr.bf16.mxu0 0
  %2434 = vmatpush1.bf16.msra.mxu0 0
  %2435 = vmatprep.subr.bf16.mxu0 0
  %2436 = vmatpush1.bf16.msra.mxu0 0
  %2437 = vmatprep.subr.bf16.mxu0 0
  %2438 = vmatpush1.bf16.msra.mxu0 0
  %2439 = vmatprep.subr.bf16.mxu0 0
  %2440 = vmatpush1.bf16.msra.mxu0 0
  %2441 = vmatprep.subr.bf16.mxu0 0
  %2442 = vmatpush1.bf16.msra.mxu0 0
  %2443 = vmatprep.subr.bf16.mxu0 0
  %2444 = vmatpush1.bf16.msra.mxu0 0
  %2445 = vmatprep.subr.bf16.mxu0 0
  %2446 = vmatpush1.bf16.msra.mxu0 %v2016
  %2447 = vmatprep.subr.bf16.mxu0 0
  %2448 = vmatpush1.bf16.msra.mxu0 %v2015
  %2449 = vmatprep.subr.bf16.mxu0 0
  %2450 = vmatpush2.bf16.msra.mxu0 0
  %2451 = vmatprep.subr.bf16.mxu0 0
  %2452 = vmatpush2.bf16.msra.mxu0 0
  %2453 = vmatprep.subr.bf16.mxu0 0
  %2454 = vmatpush2.bf16.msra.mxu0 0
  %2455 = vmatprep.subr.bf16.mxu0 0
  %2456 = vmatpush2.bf16.msra.mxu0 0
  %2457 = vmatprep.subr.bf16.mxu0 0
  %2458 = vmatpush2.bf16.msra.mxu0 0
  %2459 = vmatprep.subr.bf16.mxu0 0
  %2460 = vmatpush2.bf16.msra.mxu0 0
  %2461 = vmatprep.subr.bf16.mxu0 0
  %2462 = vmatpush2.bf16.msra.mxu0 0
  %2463 = vmatprep.subr.bf16.mxu0 0
  %2464 = vmatpush2.bf16.msra.mxu0 0
  %2465 = vmatprep.mubr.bf16.mxu0 0
  %2466 = vmatmul.mubr.bf16.gmra.mxu0 %v2431
  %v2467 = vpop.f32.mrf.mxu0
  %v2468 = vadd.f32 0.0, %v2467
  %v2469 = vpop.f32.mrf.mxu0
  %v2470 = vpop.f32.mrf.mxu0
  %v2471 = vpop.f32.mrf.mxu0
  %2472 = vdwg.mxu0
  %v2473 = vadd.f32 %v2426, %v2468
  %v2474 = vtanh.pop %v2473
  %v2475 = vmul.f32 %v2474, %v45
  %v2476 = vadd.f32 %v2475, %v46
  %v2477 = vmul.f32 %v2476, %v2418
  %2479 = vrot.lane.b32.xlu0 %v2476, 32
  %v2480 = vpop.permute.xlu0 %2479
  %v2482 = vmul.f32 %v2476, %v2480
  %2484 = vrot.lane.b32.xlu0 %v2482, 32
  %v2485 = vpop.permute.xlu0 %2484
  %v2487 = vadd.f32 %v2477, %v2485
  %v2488 = vtanh.pop %v2487
  %2490 = vrot.lane.b32.xlu0 %v2488, 32
  %v2491 = vpop.permute.xlu0 %2490
  %v2493 = vmul.f32 %v2476, %v2491
  %v2494 = vpack.c.bf16 %v2493, %v2493
  %v2495 = vld [vmem:[#allocation2 + $0x38] sm:$0xff]
  %2497 = vrot.lane.b32.xlu0 %v2494, 64
  %v2498 = vpop.permute.xlu0 %2497
  %v2500 = vsel %vm188, %v2498, 0
  %2502 = vmatprep.subr.bf16.mxu0 0
  %2503 = vmatpush1.bf16.msra.mxu0 0
  %2504 = vmatprep.subr.bf16.mxu0 0
  %2505 = vmatpush1.bf16.msra.mxu0 0
  %2506 = vmatprep.subr.bf16.mxu0 0
  %2507 = vmatpush1.bf16.msra.mxu0 0
  %2508 = vmatprep.subr.bf16.mxu0 0
  %2509 = vmatpush1.bf16.msra.mxu0 0
  %2510 = vmatprep.subr.bf16.mxu0 0
  %2511 = vmatpush1.bf16.msra.mxu0 0
  %2512 = vmatprep.subr.bf16.mxu0 0
  %2513 = vmatpush1.bf16.msra.mxu0 0
  %2514 = vmatprep.subr.bf16.mxu0 0
  %2515 = vmatpush1.bf16.msra.mxu0 %v2016
  %2516 = vmatprep.subr.bf16.mxu0 0
  %2517 = vmatpush1.bf16.msra.mxu0 %v2015
  %2518 = vmatprep.subr.bf16.mxu0 0
  %2519 = vmatpush2.bf16.msra.mxu0 0
  %2520 = vmatprep.subr.bf16.mxu0 0
  %2521 = vmatpush2.bf16.msra.mxu0 0
  %2522 = vmatprep.subr.bf16.mxu0 0
  %2523 = vmatpush2.bf16.msra.mxu0 0
  %2524 = vmatprep.subr.bf16.mxu0 0
  %2525 = vmatpush2.bf16.msra.mxu0 0
  %2526 = vmatprep.subr.bf16.mxu0 0
  %2527 = vmatpush2.bf16.msra.mxu0 0
  %2528 = vmatprep.subr.bf16.mxu0 0
  %2529 = vmatpush2.bf16.msra.mxu0 0
  %2530 = vmatprep.subr.bf16.mxu0 0
  %2531 = vmatpush2.bf16.msra.mxu0 0
  %2532 = vmatprep.subr.bf16.mxu0 0
  %2533 = vmatpush2.bf16.msra.mxu0 0
  %2534 = vmatprep.mubr.bf16.mxu0 0
  %2535 = vmatmul.mubr.bf16.gmra.mxu0 %v2500
  %v2536 = vpop.f32.mrf.mxu0
  %v2537 = vadd.f32 0.0, %v2536
  %v2538 = vpop.f32.mrf.mxu0
  %v2539 = vpop.f32.mrf.mxu0
  %v2540 = vpop.f32.mrf.mxu0
  %2541 = vdwg.mxu0
  %v2542 = vadd.f32 %v2495, %v2537
  %v2543 = vtanh.pop %v2542
  %v2544 = vmul.f32 %v2543, %v45
  %v2545 = vadd.f32 %v2544, %v46
  %v2546 = vmul.f32 %v2545, %v2487
  %2548 = vrot.lane.b32.xlu0 %v2545, 32
  %v2549 = vpop.permute.xlu0 %2548
  %v2551 = vmul.f32 %v2545, %v2549
  %2553 = vrot.lane.b32.xlu0 %v2551, 32
  %v2554 = vpop.permute.xlu0 %2553
  %v2556 = vadd.f32 %v2546, %v2554
  %v2557 = vtanh.pop %v2556
  %2559 = vrot.lane.b32.xlu0 %v2557, 32
  %v2560 = vpop.permute.xlu0 %2559
  %v2562 = vmul.f32 %v2545, %v2560
  %v2563 = vld [vmem:[%s10] sm:$0xff]
  %v2564 = vld [vmem:[%s10 + $0x8] sm:$0xff]
  %v2565 = vld [vmem:[%s10 + $0x10] sm:$0xff]
  %v2566 = vld [vmem:[%s10 + $0x18] sm:$0xff]
  %v2567 = vld [vmem:[%s11] sm:$0x1]
  %v2569 = vlaneseq
  %v2570 = vshrl.u32 %v2569, 7
  %v2571 = vsub.s32 0, %v2570
  %v2572 = vrot.slane %v2567, %v2571
  %2575 = vrot.lane.b32.xlu0 %v2562, 64
  %v2576 = vpop.permute.xlu0 %2575
  %v2577 = vsel %vm188, %v2576, 0
  %2579 = vmatprep.subr.mxu0 0.0
  %2580 = vmatpush1.msra.mxu0 0.0
  %2581 = vmatprep.subr.mxu0 0.0
  %2582 = vmatpush1.msra.mxu0 0.0
  %2583 = vmatprep.subr.mxu0 0.0
  %2584 = vmatpush1.msra.mxu0 0.0
  %2585 = vmatprep.subr.mxu0 0.0
  %2586 = vmatpush1.msra.mxu0 0.0
  %2587 = vmatprep.subr.mxu0 0.0
  %2588 = vmatpush1.msra.mxu0 0.0
  %2589 = vmatprep.subr.mxu0 0.0
  %2590 = vmatpush1.msra.mxu0 0.0
  %2591 = vmatprep.subr.mxu0 0.0
  %2592 = vmatpush1.msra.mxu0 0.0
  %2593 = vmatprep.subr.mxu0 0.0
  %2594 = vmatpush1.msra.mxu0 0.0
  %2595 = vmatprep.subr.mxu0 0.0
  %2596 = vmatpush1.msra.mxu0 0.0
  %2597 = vmatprep.subr.mxu0 0.0
  %2598 = vmatpush1.msra.mxu0 0.0
  %2599 = vmatprep.subr.mxu0 0.0
  %2600 = vmatpush1.msra.mxu0 0.0
  %2601 = vmatprep.subr.mxu0 0.0
  %2602 = vmatpush1.msra.mxu0 0.0
  %2603 = vmatprep.subr.mxu0 0.0
  %2604 = vmatpush1.msra.mxu0 %v2566
  %2605 = vmatprep.subr.mxu0 0.0
  %2606 = vmatpush1.msra.mxu0 %v2565
  %2607 = vmatprep.subr.mxu0 0.0
  %2608 = vmatpush1.msra.mxu0 %v2564
  %2609 = vmatprep.subr.mxu0 0.0
  %2610 = vmatpush1.msra.mxu0 %v2563
  %2611 = vmatprep.subr.mxu0 0.0
  %2612 = vmatpush2.msra.mxu0 0.0
  %2613 = vmatprep.subr.mxu0 0.0
  %2614 = vmatpush2.msra.mxu0 0.0
  %2615 = vmatprep.subr.mxu0 0.0
  %2616 = vmatpush2.msra.mxu0 0.0
  %2617 = vmatprep.subr.mxu0 0.0
  %2618 = vmatpush2.msra.mxu0 0.0
  %2619 = vmatprep.subr.mxu0 0.0
  %2620 = vmatpush2.msra.mxu0 0.0
  %2621 = vmatprep.subr.mxu0 0.0
  %2622 = vmatpush2.msra.mxu0 0.0
  %2623 = vmatprep.subr.mxu0 0.0
  %2624 = vmatpush2.msra.mxu0 0.0
  %2625 = vmatprep.subr.mxu0 0.0
  %2626 = vmatpush2.msra.mxu0 0.0
  %2627 = vmatprep.subr.mxu0 0.0
  %2628 = vmatpush2.msra.mxu0 0.0
  %2629 = vmatprep.subr.mxu0 0.0
  %2630 = vmatpush2.msra.mxu0 0.0
  %2631 = vmatprep.subr.mxu0 0.0
  %2632 = vmatpush2.msra.mxu0 0.0
  %2633 = vmatprep.subr.mxu0 0.0
  %2634 = vmatpush2.msra.mxu0 0.0
  %2635 = vmatprep.subr.mxu0 0.0
  %2636 = vmatpush2.msra.mxu0 0.0
  %2637 = vmatprep.subr.mxu0 0.0
  %2638 = vmatpush2.msra.mxu0 0.0
  %2639 = vmatprep.subr.mxu0 0.0
  %2640 = vmatpush2.msra.mxu0 0.0
  %2641 = vmatprep.subr.mxu0 0.0
  %2642 = vmatpush2.msra.mxu0 0.0
  %2643 = vmatprep.mubr.f32.mxu0 0.0
  %2644 = vmatmul.mubr.f32.gmra.mxu0 %v2577
  %v2645 = vpop.f32.mrf.mxu0
  %v2646 = vadd.f32 %v2572, %v2645
  %v2647 = vpop.f32.mrf.mxu0
  %2648 = vdwg.mxu0
  %vm2649 = vcmask 15360
  %v2650 = vsel %vm2649, %v2646, -inf
  %2651 = vmax.xlane.f32.xlu0 %v2650
  %v2652 = vpop.xlane.xlu0 %2651
  %v2653 = vsub.f32 %v2646, %v2652
  %v2654 = vmul.f32 %v2653, 1.442695
  %v2655 = vpow.pop %v2654
  %v2656 = vsel %vm2649, %v2655, 0.0
  %2657 = vadd.xlane.f32.xlu0 %v2656
  %v2658 = vpop.xlane.xlu0 %2657
  %v2659 = vlog2.pop %v2658
  %v2660 = vmul.f32 %v2659, 0.6931472
  %v2661 = vsub.f32 %v2653, %v2660
  %2662 = vst.msk [vmem:[%s12] sm:$0xff] %vm2649, %v2661
  // Predicated region
  $region50: #{lstm_forward.1} parent=0 // pred_check
    _
  $region51: #{lstm_forward.1} parent=0 // pred_check_branch
    %2664 = sbr.rel (0) target = $region53
  $region52: #{lstm_forward.1} parent=0 // pred_region
    _
  $region53: #{lstm_forward.1} parent=0 // pred_fallthru
    _
  // Predicated region
  $region54: #{lstm_forward.1} parent=0 // pred_check
    _
  $region55: #{lstm_forward.1} parent=0 // pred_check_branch
    %2666 = sbr.rel (0) target = $region57
  $region56: #{lstm_forward.1} parent=0 // pred_region
    _
  $region57: #{lstm_forward.1} parent=0 // pred_fallthru
    _

</llo_original>
